<compile_context>
chip_gen: v6e
topology: v6e:2x2x1
jax: 0.10.0
libtpu: 0.0.40
codegen_flags: <defaults>
</compile_context>

<pallas_src>
import functools

import jax
import jax.numpy as jnp
import numpy as np
from jax import lax
from jax.experimental import pallas as pl
from jax.experimental.pallas import tpu as pltpu

CAPACITY = 32
LATENT_DIMS = 10
BN_EPS = 1e-5
VMEM_LIMIT_BYTES = 48 * 1024 * 1024       # scoped VMEM limit (fits v7x's 64 MiB)
VMEM_BUDGET_BYTES = 36 * 1024 * 1024      # auto-tiler target (headroom vs limit)


def _round_up(v, m):
    return ((v + m - 1) // m) * m


def _cdiv(a, b):
    return (a + b - 1) // b


# ---------------------------------------------------------------------------
# Tile-size selection: largest aligned tile <= cap that divides the dim (so no
# pad copies at the real scale); full-dim block when the dim is small.
# ---------------------------------------------------------------------------
def _pick_tile(dim, cap, align):
    if dim <= cap:
        return dim, dim                      # full-dim block (exempt from 8/128 rule)
    t = (cap // align) * align
    while t >= align:
        if dim % t == 0:
            return t, dim
        t -= align
    return cap, _round_up(dim, cap)          # fall back: pad


def _auto_tiles(M, K, Co, out_bytes, cap_m, cap_k, cap_n, budget):
    cap_m, cap_k, cap_n = int(cap_m), int(cap_k), int(cap_n)
    while True:
        tm, Mp = _pick_tile(M, cap_m, 16)
        tk, Kp = _pick_tile(K, cap_k, 128)
        tn, Cop = _pick_tile(Co, cap_n, 128)
        sub_m = _round_up(tm, 16)
        lane_k = _round_up(tk, 128)
        lane_n = _round_up(tn, 128)
        est = (2 * sub_m * lane_k * 2              # x (bf16, double-buffered)
               + 2 * _round_up(tk, 16) * lane_n * 2  # w (bf16, double-buffered)
               + sub_m * lane_n * 4                # f32 accumulator
               + 2 * sub_m * lane_n * out_bytes    # out (double-buffered)
               + 6 * lane_n * 4)                   # bias / scale / shift vectors
        if est <= budget or (cap_m <= 256 and cap_k <= 512 and cap_n <= 512):
            return tm, Mp, tk, Kp, tn, Cop
        if cap_k >= cap_n and cap_k > 512:
            cap_k //= 2
        elif cap_n > 512:
            cap_n //= 2
        else:
            cap_m //= 2


# ---------------------------------------------------------------------------
# Fused matmul + bias + activation (+ optional per-channel affine) kernel.
# Grid = (M tiles, Co tiles, K tiles); K is the innermost ("arbitrary")
# reduction axis accumulated into a f32 VMEM scratch.
# ---------------------------------------------------------------------------
def _mm_kernel(*refs, activation, has_affine):
    if has_affine:
        x_ref, w_ref, b_ref, sc_ref, sh_ref, o_ref, acc_ref = refs
    else:
        x_ref, w_ref, b_ref, o_ref, acc_ref = refs
        sc_ref = sh_ref = None
    k = pl.program_id(2)

    @pl.when(k == 0)
    def _init():
        acc_ref[...] = jnp.zeros_like(acc_ref)

    acc_ref[...] += jnp.dot(x_ref[...], w_ref[...],
                            preferred_element_type=jnp.float32)

    @pl.when(k == pl.num_programs(2) - 1)
    def _finalize():
        acc = acc_ref[...] + b_ref[...]
        if activation == "relu":
            acc = jnp.maximum(acc, 0.0)
        elif activation == "sigmoid":
            # exp + approx reciprocal both route to the EUP slot (epilogue in f32).
            acc = pl.reciprocal(1.0 + jnp.exp(-acc), approx=True)
        if has_affine:
            acc = acc * sc_ref[...] + sh_ref[...]
        o_ref[...] = acc.astype(o_ref.dtype)


def mm_fused(x, w, b, scale=None, shift=None, activation="none",
             out_dtype=jnp.float32, cap_m=2048, cap_k=8192, cap_n=8192):
    """out = act(x @ w + b) [* scale + shift], tiled over (M, Co, K)."""
    M, K = x.shape
    Kw, Co = w.shape
    assert K == Kw
    has_affine = scale is not None

    out_bytes = jnp.dtype(out_dtype).itemsize
    tm, Mp, tk, Kp, tn, Cop = _auto_tiles(M, K, Co, out_bytes,
                                          cap_m, cap_k, cap_n, VMEM_BUDGET_BYTES)

    # bf16 operands into the MXU (halves HBM traffic); f32 accumulation.
    x = x.astype(jnp.bfloat16)
    w = w.astype(jnp.bfloat16)
    if (Mp, Kp) != (M, K):
        x = jnp.pad(x, ((0, Mp - M), (0, Kp - K)))
    if (Kp, Cop) != (K, Co):
        w = jnp.pad(w, ((0, Kp - K), (0, Cop - Co)))

    def vec(v):
        v = v.reshape(1, Co).astype(jnp.float32)
        return jnp.pad(v, ((0, 0), (0, Cop - Co))) if Cop != Co else v

    vec_spec = pl.BlockSpec((1, tn), lambda i, j, k: (0, j))
    in_specs = [
        pl.BlockSpec((tm, tk), lambda i, j, k: (i, k)),
        pl.BlockSpec((tk, tn), lambda i, j, k: (k, j)),
        vec_spec,
    ]
    args = [x, w, vec(b)]
    if has_affine:
        in_specs += [vec_spec, vec_spec]
        args += [vec(scale), vec(shift)]

    out = pl.pallas_call(
        functools.partial(_mm_kernel, activation=activation,
                          has_affine=has_affine),
        out_shape=jax.ShapeDtypeStruct((Mp, Cop), out_dtype),
        grid=(Mp // tm, Cop // tn, Kp // tk),
        in_specs=in_specs,
        out_specs=pl.BlockSpec((tm, tn), lambda i, j, k: (i, j)),
        scratch_shapes=[pltpu.VMEM((tm, tn), jnp.float32)],
        compiler_params=pltpu.CompilerParams(
            dimension_semantics=("parallel", "parallel", "arbitrary"),
            vmem_limit_bytes=VMEM_LIMIT_BYTES,
        ),
    )(*args)
    if (Mp, Cop) != (M, Co):
        out = out[:M, :Co]
    return out


# ---------------------------------------------------------------------------
# Split-K matmul (for the huge-K, tiny-M/Co fc_mu/fc_logvar layer).
# Grid = (split, K tiles); the leading axis is "parallel" so v7x's two
# TensorCores each stream half of the weight; partial sums added outside.
# ---------------------------------------------------------------------------
def _mm_splitk_kernel(x_ref, w_ref, o_ref):
    @pl.when(pl.program_id(1) == 0)
    def _init():
        o_ref[...] = jnp.zeros_like(o_ref)
    o_ref[...] += jnp.dot(x_ref[...], w_ref[...],
                          preferred_element_type=jnp.float32)


def _pick_splitk_tile(K, split, cap, align=128):
    if K <= split * cap:
        tk = _round_up(_cdiv(K, split), align)
        return tk, split * tk
    t = (cap // align) * align
    while t >= align:
        if K % (split * t) == 0:
            return t, K
        t -= align
    return cap, _round_up(K, split * cap)


def mm_split_k(x, w, split=2, cap_k=32768):
    """Partial-sum x @ w (f32), K split `split` ways on a parallel grid axis."""
    M, K = x.shape
    Kw, Co = w.shape
    assert K == Kw
    lane_n = _round_up(Co, 128)
    sub_m = _round_up(M, 16)
    cap = int(cap_k)
    while True:
        tk, Kp = _pick_splitk_tile(K, split, cap)
        est = (2 * sub_m * _round_up(tk, 128) * 2   # x (bf16, double-buffered)
               + 2 * tk * lane_n * 2                # w (bf16, double-buffered)
               + 2 * sub_m * lane_n * 4)            # f32 out/accumulator
        if est <= VMEM_BUDGET_BYTES or cap <= 512:
            break
        cap //= 2

    x = x.astype(jnp.bfloat16)
    w = w.astype(jnp.bfloat16)
    if Kp != K:
        x = jnp.pad(x, ((0, 0), (0, Kp - K)))
        w = jnp.pad(w, ((0, Kp - K), (0, 0)))
    nk = Kp // (split * tk)                         # K tiles per split

    partials = pl.pallas_call(
        _mm_splitk_kernel,
        out_shape=jax.ShapeDtypeStruct((split, M, Co), jnp.float32),
        grid=(split, nk),
        in_specs=[
            pl.BlockSpec((M, tk), lambda s, k: (0, s * nk + k)),
            pl.BlockSpec((tk, Co), lambda s, k: (s * nk + k, 0)),
        ],
        out_specs=pl.BlockSpec((1, M, Co), lambda s, k: (s, 0, 0)),
        compiler_params=pltpu.CompilerParams(
            dimension_semantics=("parallel", "arbitrary"),
            vmem_limit_bytes=VMEM_LIMIT_BYTES,
        ),
    )(x, w)
    return partials.sum(axis=0)


# ---------------------------------------------------------------------------
# im2col glue (layout plumbing in bf16; the FLOPs live in the Pallas kernels)
# ---------------------------------------------------------------------------
def _extract_patches(xp, k, stride):
    """xp: (N, Hp, Wp, C) padded NHWC -> (N, OH, OW, k*k*C), (kh, kw, c) order."""
    N, Hp, Wp, C = xp.shape
    OH = (Hp - k) // stride + 1
    OW = (Wp - k) // stride + 1
    cols = []
    for kh in range(k):
        for kw in range(k):
            sl = lax.slice(
                xp,
                (0, kh, kw, 0),
                (N, kh + stride * (OH - 1) + 1, kw + stride * (OW - 1) + 1, C),
                (1, stride, stride, 1),
            )
            cols.append(sl)
    patches = jnp.stack(cols, axis=3)            # (N, OH, OW, k*k, C)
    return patches.reshape(N, OH, OW, k * k * C)


def conv2d_s2(x_nhwc, w_mat, b, scale, shift, activation,
              out_dtype=jnp.bfloat16):
    """Conv2d(k=4, stride=2, pad=1) + activation + per-channel affine."""
    N, H, W, _ = x_nhwc.shape
    Co = w_mat.shape[1]
    xp = jnp.pad(x_nhwc.astype(jnp.bfloat16), ((0, 0), (1, 1), (1, 1), (0, 0)))
    patches = _extract_patches(xp, k=4, stride=2)
    OH, OW = patches.shape[1], patches.shape[2]
    y = mm_fused(patches.reshape(N * OH * OW, -1), w_mat, b, scale, shift,
                 activation, out_dtype, cap_m=2048, cap_k=2048, cap_n=2048)
    return y.reshape(N, OH, OW, Co)


def conv_transpose2d_s2(x_nhwc, w_big, b_big, sc_big, sh_big, activation,
                        out_dtype=jnp.bfloat16):
    """ConvTranspose2d(k=4, stride=2, pad=1) via 4-phase decomposition.

    full[2i+r, 2j+s, co] = sum_{a,b,ci} xpad[i+a, j+b, ci] * w[ci,co,r+2-2a,s+2-2b]
    One matmul over 2x2 patches of the 1-padded input produces all four output
    parity phases at once (Co_eff = 4*Co); the interleave is then a single
    depth-to-space transpose followed by the padding=1 crop.
    """
    N, H, W, _ = x_nhwc.shape
    Co = w_big.shape[1] // 4
    xp = jnp.pad(x_nhwc.astype(jnp.bfloat16), ((0, 0), (1, 1), (1, 1), (0, 0)))
    patches = _extract_patches(xp, k=2, stride=1)          # (N, H+1, W+1, 4*Ci)
    y = mm_fused(patches.reshape(N * (H + 1) * (W + 1), -1), w_big, b_big,
                 sc_big, sh_big, activation, out_dtype,
                 cap_m=2048, cap_k=2048, cap_n=2048)
    y = y.reshape(N, H + 1, W + 1, 2, 2, Co)               # (.., r, s, co)
    full = jnp.transpose(y, (0, 1, 3, 2, 4, 5)).reshape(
        N, 2 * H + 2, 2 * W + 2, Co)                       # depth-to-space
    return full[:, 1:2 * H + 1, 1:2 * W + 1, :]            # padding=1 crop


def _bn_scale_shift(bn):
    scale = bn["gamma"] * lax.rsqrt(bn["var"] + BN_EPS)
    shift = bn["beta"] - bn["mean"] * scale
    return scale, shift


# ---------------------------------------------------------------------------
# Parameters (deterministic synthetic init; shapes/layouts follow the module)
# ---------------------------------------------------------------------------
def init_params(key, capacity=CAPACITY, latent_dims=LATENT_DIMS, hh=4, ww=4):
    feat = 2 * capacity * hh * ww
    keys = jax.random.split(key, 18)

    def n(k, shape, s=0.05):
        return s * jax.random.normal(k, shape, jnp.float32)

    def bn(k, c):
        k1, k2, k3, k4 = jax.random.split(k, 4)
        return dict(
            gamma=1.0 + 0.1 * jax.random.normal(k1, (c,), jnp.float32),
            beta=0.1 * jax.random.normal(k2, (c,), jnp.float32),
            mean=0.1 * jax.random.normal(k3, (c,), jnp.float32),
            var=0.5 + jax.random.uniform(k4, (c,), jnp.float32),
        )

    p = {}
    p["conv1_w"] = n(keys[0], (capacity, 1, 4, 4))               # Conv2d(1, 32)
    p["conv1_b"] = n(keys[1], (capacity,))
    p["bn1"] = bn(keys[2], capacity)
    p["conv2_w"] = n(keys[3], (2 * capacity, capacity, 4, 4))    # Conv2d(32, 64)
    p["conv2_b"] = n(keys[4], (2 * capacity,))
    p["bn2"] = bn(keys[5], 2 * capacity)
    p["fc_mu_w"] = n(keys[6], (latent_dims, feat), 0.01)         # Linear(feat, 10)
    p["fc_mu_b"] = n(keys[7], (latent_dims,))
    p["fc_logvar_w"] = n(keys[8], (latent_dims, feat), 0.01)
    p["fc_logvar_b"] = n(keys[9], (latent_dims,))
    p["fc_z_w"] = n(keys[10], (feat, latent_dims), 0.05)         # Linear(10, feat)
    p["fc_z_b"] = n(keys[11], (feat,))
    p["dbn0"] = bn(keys[12], 2 * capacity)
    p["deconv1_w"] = n(keys[13], (2 * capacity, capacity, 4, 4))  # ConvT(64, 32)
    p["deconv1_b"] = n(keys[14], (capacity,))
    p["dbn1"] = bn(keys[15], capacity)
    p["deconv2_w"] = n(keys[16], (capacity, 5, 4, 4))             # ConvT(32, 5)
    p["deconv2_b"] = n(keys[17], (5,))
    return p


def prepare_params(p):
    """One-time conversion of PyTorch-layout params into matmul-ready form.

      * conv / convT weights -> (K, Co) matmul matrices (bf16)
      * channel-major nn.Flatten / view() orderings folded into the fc weights
        so activations stay NHWC (no big transpose pass per forward)
      * fc_mu + fc_logvar fused into one (feat, 2*latent) matmul
      * BatchNorm (inference) folded to per-channel scale/shift; dbn0 folded
        directly into fc_z (exact: no nonlinearity in between)
    """
    C2 = p["conv2_w"].shape[0]
    L = p["fc_mu_b"].shape[0]
    feat = p["fc_mu_w"].shape[1]
    S = feat // C2                                 # HH * WW

    def conv_w(w_oihw):                            # (Co, Ci, 4, 4) -> (16*Ci, Co)
        co = w_oihw.shape[0]
        return jnp.transpose(w_oihw, (2, 3, 1, 0)).reshape(-1, co)

    def convT_w(w_iohw):                           # (Ci, Co, 4, 4) -> (4*Ci, 4*Co)
        ci, co = w_iohw.shape[0], w_iohw.shape[1]
        sel = jnp.array([[2, 3], [0, 1]], dtype=jnp.int32)   # [a, r] -> kh = r+2-2a
        wb = w_iohw[:, :, sel[:, :, None, None], sel[None, None, :, :]]
        wb = jnp.transpose(wb, (2, 4, 0, 3, 5, 1))           # (a,b,ci,r,s,co)
        return wb.reshape(4 * ci, 4 * co)

    bn1_s, bn1_t = _bn_scale_shift(p["bn1"])
    bn2_s, bn2_t = _bn_scale_shift(p["bn2"])
    dbn0_s, dbn0_t = _bn_scale_shift(p["dbn0"])
    dbn1_s, dbn1_t = _bn_scale_shift(p["dbn1"])

    def fc_enc_w(w):                               # NCHW-flat cols -> NHWC-flat
        return w.reshape(L, C2, S).transpose(0, 2, 1).reshape(L, feat)

    w_muvl = jnp.concatenate([fc_enc_w(p["fc_mu_w"]),
                              fc_enc_w(p["fc_logvar_w"])], axis=0).T  # (feat, 2L)
    b_muvl = jnp.concatenate([p["fc_mu_b"], p["fc_logvar_b"]])

    # fc_z: reorder output features (columns) from NCHW to NHWC order, store as
    # (K=latent, Co=feat), and fold the decoder BatchNorm(64) in (exact).
    w_z = p["fc_z_w"].reshape(C2, S, L).transpose(1, 0, 2).reshape(feat, L).T
    b_z = p["fc_z_b"].reshape(C2, S).transpose(1, 0).reshape(feat)
    dbn0_s_cols = jnp.tile(dbn0_s, S)
    dbn0_t_cols = jnp.tile(dbn0_t, S)
    w_z = w_z * dbn0_s_cols[None, :]
    b_z = b_z * dbn0_s_cols + dbn0_t_cols

    bf = jnp.bfloat16
    return dict(
        conv1_w=conv_w(p["conv1_w"]).astype(bf), conv1_b=p["conv1_b"],
        bn1_s=bn1_s, bn1_t=bn1_t,
        conv2_w=conv_w(p["conv2_w"]).astype(bf), conv2_b=p["conv2_b"],
        bn2_s=bn2_s, bn2_t=bn2_t,
        fc_muvl_w=w_muvl.astype(bf), fc_muvl_b=b_muvl,
        fc_z_w=w_z.astype(bf), fc_z_b=b_z,
        deconv1_w=convT_w(p["deconv1_w"]).astype(bf),
        deconv1_b=jnp.tile(p["deconv1_b"], 4),
        dbn1_s4=jnp.tile(dbn1_s, 4), dbn1_t4=jnp.tile(dbn1_t, 4),
        deconv2_w=convT_w(p["deconv2_w"]).astype(bf),
        deconv2_b=jnp.tile(p["deconv2_b"], 4),
    )


# ---------------------------------------------------------------------------
# VAE forward: (x_hat, mu, logvar) = forward(x)  --  decode uses mu (eval mode)
# ---------------------------------------------------------------------------
def vae_forward(pp, x_nchw):
    N = x_nchw.shape[0]
    L = pp["fc_muvl_b"].shape[0] // 2
    C2 = pp["conv2_w"].shape[1]
    x = jnp.transpose(x_nchw, (0, 2, 3, 1)).astype(jnp.bfloat16)  # NCHW -> NHWC

    # encoder: Conv -> ReLU -> BN, Conv -> ReLU -> BN
    h1 = conv2d_s2(x, pp["conv1_w"], pp["conv1_b"], pp["bn1_s"], pp["bn1_t"], "relu")
    h2 = conv2d_s2(h1, pp["conv2_w"], pp["conv2_b"], pp["bn2_s"], pp["bn2_t"], "relu")
    _, HH, WW, _ = h2.shape

    # NHWC flatten (channel-major PyTorch flatten already folded into fc weights)
    feat = h2.reshape(N, HH * WW * C2)

    # fc_mu and fc_logvar as one fused split-K matmul (2-way parallel K split)
    ml = mm_split_k(feat, pp["fc_muvl_w"], split=2) + pp["fc_muvl_b"][None, :]
    mu, logvar = ml[:, :L], ml[:, L:]

    # decode(mu): fc_z with the decoder BatchNorm(64) pre-folded into w/b
    zf = mm_fused(mu, pp["fc_z_w"], pp["fc_z_b"], activation="none",
                  out_dtype=jnp.bfloat16, cap_m=2048, cap_k=8192, cap_n=32768)
    z = zf.reshape(N, HH, WW, C2)                                # already NHWC

    # ConvT(64->32) -> ReLU -> BN(32)
    d1 = conv_transpose2d_s2(z, pp["deconv1_w"], pp["deconv1_b"],
                             pp["dbn1_s4"], pp["dbn1_t4"], "relu", jnp.bfloat16)
    # ConvT(32->5) -> Sigmoid (bf16 output; upcast only at the very end)
    d2 = conv_transpose2d_s2(d1, pp["deconv2_w"], pp["deconv2_b"],
                             None, None, "sigmoid", jnp.bfloat16)

    x_hat = jnp.transpose(d2, (0, 3, 1, 2)).astype(jnp.float32)  # NHWC -> NCHW
    return x_hat, mu, logvar


# ---------------------------------------------------------------------------
# Pure-JAX f32 reference of the original nn.Module (inference mode)
# ---------------------------------------------------------------------------
def vae_forward_ref(p, x_nchw):
    dn = ("NCHW", "OIHW", "NCHW")

    def conv(x, w, b):
        y = lax.conv_general_dilated(x, w, (2, 2), [(1, 1), (1, 1)],
                                     dimension_numbers=dn)
        return y + b[None, :, None, None]

    def convT(x, w_iohw, b):
        wf = jnp.transpose(jnp.flip(w_iohw, (2, 3)), (1, 0, 2, 3))
        y = lax.conv_general_dilated(x, wf, (1, 1), [(2, 2), (2, 2)],
                                     lhs_dilation=(2, 2), dimension_numbers=dn)
        return y + b[None, :, None, None]

    def bn(x, b):
        s, t = _bn_scale_shift(b)
        return x * s[None, :, None, None] + t[None, :, None, None]

    x = x_nchw.astype(jnp.float32)
    h1 = bn(jax.nn.relu(conv(x, p["conv1_w"], p["conv1_b"])), p["bn1"])
    h2 = bn(jax.nn.relu(conv(h1, p["conv2_w"], p["conv2_b"])), p["bn2"])
    N, C2, HH, WW = h2.shape
    feat = h2.reshape(N, -1)                      # channel-major (PyTorch) flatten
    mu = feat @ p["fc_mu_w"].T + p["fc_mu_b"]
    logvar = feat @ p["fc_logvar_w"].T + p["fc_logvar_b"]
    z = (mu @ p["fc_z_w"].T + p["fc_z_b"]).reshape(N, C2, HH, WW)
    z = bn(z, p["dbn0"])
    d1 = bn(jax.nn.relu(convT(z, p["deconv1_w"], p["deconv1_b"])), p["dbn1"])
    d2 = jax.nn.sigmoid(convT(d1, p["deconv2_w"], p["deconv2_b"]))
    return d2, mu, logvar


if __name__ == "__main__":
    key = jax.random.PRNGKey(0)
    k_param, k_x = jax.random.split(key)

    # Small shapes: batch=2, 1 input channel, 16x16 spatial (encoder -> 4x4).
    N, H, W = 2, 16, 16
    x = jax.random.normal(k_x, (N, 1, H, W), jnp.float32)
    raw = init_params(k_param, capacity=CAPACITY, latent_dims=LATENT_DIMS,
                      hh=H // 4, ww=W // 4)
    params = prepare_params(raw)

    fwd = jax.jit(vae_forward)
    x_hat, mu, logvar = fwd(params, x)
    jax.block_until_ready((x_hat, mu, logvar))

    assert x_hat.shape == (N, 5, H, W), x_hat.shape
    assert mu.shape == (N, LATENT_DIMS), mu.shape
    assert logvar.shape == (N, LATENT_DIMS), logvar.shape
    assert bool(jnp.all(jnp.isfinite(x_hat)))
    # sigmoid output (approx reciprocal + bf16 -> tiny slack around [0, 1])
    assert bool(jnp.all((x_hat > -1e-2) & (x_hat < 1.0 + 1e-2)))

    # Numerical check against the pure-JAX f32 reference (bf16 matmuls -> loose tol).
    xr, mr, lr = jax.jit(vae_forward_ref)(raw, x)
    assert np.allclose(np.asarray(mu), np.asarray(mr), rtol=3e-2, atol=3e-2)
    assert np.allclose(np.asarray(logvar), np.asarray(lr), rtol=3e-2, atol=3e-2)
    assert np.allclose(np.asarray(x_hat), np.asarray(xr), rtol=3e-2, atol=3e-2)
    print("KERNEL_OK")
</pallas_src>

<mosaic_0001>
module attributes {stable_mosaic.version = 11 : i64} {
  func.func @_mm_kernel(%arg0: i32, %arg1: i32, %arg2: i32, %arg3: memref<128x16xbf16, #tpu.memory_space<vmem>>, %arg4: memref<16x32xbf16, #tpu.memory_space<vmem>>, %arg5: memref<1x32xf32, #tpu.memory_space<vmem>>, %arg6: memref<1x32xf32, #tpu.memory_space<vmem>>, %arg7: memref<1x32xf32, #tpu.memory_space<vmem>>, %arg8: memref<128x32xbf16, #tpu.memory_space<vmem>>, %arg9: memref<128x32xf32, #tpu.memory_space<vmem>>) attributes {dimension_semantics = [#tpu.dimension_semantics<parallel>, #tpu.dimension_semantics<parallel>, #tpu.dimension_semantics<arbitrary>], iteration_bounds = array<i64: 1, 1, 1>, scalar_prefetch = 0 : i64, scratch_operands = 1 : i64, tpu.core_type = #tpu.core_type<tc>, window_params = [{transform_indices = @transform_0, window_bounds = array<i64: 128, 16>}, {transform_indices = @transform_1, window_bounds = array<i64: 16, 32>}, {transform_indices = @transform_2, window_bounds = array<i64: 1, 32>}, {transform_indices = @transform_3, window_bounds = array<i64: 1, 32>}, {transform_indices = @transform_4, window_bounds = array<i64: 1, 32>}, {transform_indices = @transform_5, window_bounds = array<i64: 128, 32>}]} {
    %c0_i32 = arith.constant 0 : i32
    %0 = arith.cmpi eq, %arg2, %c0_i32 : i32
    %1 = arith.extui %0 : i1 to i32
    %c0_i32_0 = arith.constant 0 : i32
    %2 = arith.cmpi ne, %1, %c0_i32_0 : i32
    scf.if %2 {
      %cst_10 = arith.constant 0.000000e+00 : f32
      %12 = vector.broadcast %cst_10 : f32 to vector<128x32xf32>
      %c0_11 = arith.constant 0 : index
      %c0_12 = arith.constant 0 : index
      %13 = vector.load %arg9[%c0_11, %c0_12] : memref<128x32xf32, #tpu.memory_space<vmem>>, vector<128x32xf32>
      tpu.vector_store %arg9[%c0_11, %c0_12], %12 {strides = array<i32>} : memref<128x32xf32, #tpu.memory_space<vmem>>, vector<128x32xf32>,
    } else {
    }
    %c0 = arith.constant 0 : index
    %c0_1 = arith.constant 0 : index
    %3 = vector.load %arg9[%c0, %c0_1] : memref<128x32xf32, #tpu.memory_space<vmem>>, vector<128x32xf32>
    %c0_2 = arith.constant 0 : index
    %c0_3 = arith.constant 0 : index
    %4 = vector.load %arg3[%c0_2, %c0_3] : memref<128x16xbf16, #tpu.memory_space<vmem>>, vector<128x16xbf16>
    %c0_4 = arith.constant 0 : index
    %c0_5 = arith.constant 0 : index
    %5 = vector.load %arg4[%c0_4, %c0_5] : memref<16x32xbf16, #tpu.memory_space<vmem>>, vector<16x32xbf16>
    %cst = arith.constant dense<0.000000e+00> : vector<128x32xf32>
    %6 = tpu.matmul %4, %5, %cst {dimension_numbers = #tpu.dot_dimension_numbers<[1], [0], [0], [1], [0, 0, 1, 1], [], []>} : vector<128x16xbf16>, vector<16x32xbf16>, vector<128x32xf32> -> vector<128x32xf32>
    %7 = arith.addf %3, %6 : vector<128x32xf32>
    %c0_6 = arith.constant 0 : index
    %c0_7 = arith.constant 0 : index
    %8 = vector.load %arg9[%c0_6, %c0_7] : memref<128x32xf32, #tpu.memory_space<vmem>>, vector<128x32xf32>
    tpu.vector_store %arg9[%c0_6, %c0_7], %7 {strides = array<i32>} : memref<128x32xf32, #tpu.memory_space<vmem>>, vector<128x32xf32>,
    %c0_i32_8 = arith.constant 0 : i32
    %9 = arith.cmpi eq, %arg2, %c0_i32_8 : i32
    %10 = arith.extui %9 : i1 to i32
    %c0_i32_9 = arith.constant 0 : i32
    %11 = arith.cmpi ne, %10, %c0_i32_9 : i32
    scf.if %11 {
      %c0_10 = arith.constant 0 : index
      %c0_11 = arith.constant 0 : index
      %12 = vector.load %arg9[%c0_10, %c0_11] : memref<128x32xf32, #tpu.memory_space<vmem>>, vector<128x32xf32>
      %c0_12 = arith.constant 0 : index
      %c0_13 = arith.constant 0 : index
      %13 = vector.load %arg5[%c0_12, %c0_13] : memref<1x32xf32, #tpu.memory_space<vmem>>, vector<1x32xf32>
      %14 = vector.broadcast %13 : vector<1x32xf32> to vector<128x32xf32>
      %15 = arith.addf %12, %14 : vector<128x32xf32>
      %cst_14 = arith.constant 0.000000e+00 : f32
      %16 = vector.broadcast %cst_14 : f32 to vector<128x32xf32>
      %17 = arith.maximumf %15, %16 : vector<128x32xf32>
      %c0_15 = arith.constant 0 : index
      %c0_16 = arith.constant 0 : index
      %18 = vector.load %arg6[%c0_15, %c0_16] : memref<1x32xf32, #tpu.memory_space<vmem>>, vector<1x32xf32>
      %19 = vector.broadcast %18 : vector<1x32xf32> to vector<128x32xf32>
      %20 = arith.mulf %17, %19 : vector<128x32xf32>
      %c0_17 = arith.constant 0 : index
      %c0_18 = arith.constant 0 : index
      %21 = vector.load %arg7[%c0_17, %c0_18] : memref<1x32xf32, #tpu.memory_space<vmem>>, vector<1x32xf32>
      %22 = vector.broadcast %21 : vector<1x32xf32> to vector<128x32xf32>
      %23 = arith.addf %20, %22 : vector<128x32xf32>
      %24 = arith.truncf %23 : vector<128x32xf32> to vector<128x32xbf16>
      %c0_19 = arith.constant 0 : index
      %c0_20 = arith.constant 0 : index
      %25 = vector.load %arg8[%c0_19, %c0_20] : memref<128x32xbf16, #tpu.memory_space<vmem>>, vector<128x32xbf16>
      tpu.vector_store %arg8[%c0_19, %c0_20], %24 {strides = array<i32>} : memref<128x32xbf16, #tpu.memory_space<vmem>>, vector<128x32xbf16>,
    } else {
    }
    return
  }
  func.func @transform_0(%arg0: i32, %arg1: i32, %arg2: i32) -> (i32, i32) {
    %c0_i32 = arith.constant 0 : i32
    return %arg0, %arg2 : i32, i32
  }
  func.func @transform_1(%arg0: i32, %arg1: i32, %arg2: i32) -> (i32, i32) {
    %c0_i32 = arith.constant 0 : i32
    return %arg2, %arg1 : i32, i32
  }
  func.func @transform_2(%arg0: i32, %arg1: i32, %arg2: i32) -> (i32, i32) {
    %c0_i32 = arith.constant 0 : i32
    %c0_i32_0 = arith.constant 0 : i32
    return %c0_i32, %arg1 : i32, i32
  }
  func.func @transform_3(%arg0: i32, %arg1: i32, %arg2: i32) -> (i32, i32) {
    %c0_i32 = arith.constant 0 : i32
    %c0_i32_0 = arith.constant 0 : i32
    return %c0_i32, %arg1 : i32, i32
  }
  func.func @transform_4(%arg0: i32, %arg1: i32, %arg2: i32) -> (i32, i32) {
    %c0_i32 = arith.constant 0 : i32
    %c0_i32_0 = arith.constant 0 : i32
    return %c0_i32, %arg1 : i32, i32
  }
  func.func @transform_5(%arg0: i32, %arg1: i32, %arg2: i32) -> (i32, i32) {
    %c0_i32 = arith.constant 0 : i32
    return %arg0, %arg1 : i32, i32
  }
}

module attributes {stable_mosaic.version = 11 : i64} {
  func.func @_mm_kernel(%arg0: i32, %arg1: i32, %arg2: i32, %arg3: memref<32x512xbf16, #tpu.memory_space<vmem>>, %arg4: memref<512x64xbf16, #tpu.memory_space<vmem>>, %arg5: memref<1x64xf32, #tpu.memory_space<vmem>>, %arg6: memref<1x64xf32, #tpu.memory_space<vmem>>, %arg7: memref<1x64xf32, #tpu.memory_space<vmem>>, %arg8: memref<32x64xbf16, #tpu.memory_space<vmem>>, %arg9: memref<32x64xf32, #tpu.memory_space<vmem>>) attributes {dimension_semantics = [#tpu.dimension_semantics<parallel>, #tpu.dimension_semantics<parallel>, #tpu.dimension_semantics<arbitrary>], iteration_bounds = array<i64: 1, 1, 1>, scalar_prefetch = 0 : i64, scratch_operands = 1 : i64, tpu.core_type = #tpu.core_type<tc>, window_params = [{transform_indices = @transform_0, window_bounds = array<i64: 32, 512>}, {transform_indices = @transform_1, window_bounds = array<i64: 512, 64>}, {transform_indices = @transform_2, window_bounds = array<i64: 1, 64>}, {transform_indices = @transform_3, window_bounds = array<i64: 1, 64>}, {transform_indices = @transform_4, window_bounds = array<i64: 1, 64>}, {transform_indices = @transform_5, window_bounds = array<i64: 32, 64>}]} {
    %c0_i32 = arith.constant 0 : i32
    %0 = arith.cmpi eq, %arg2, %c0_i32 : i32
    %1 = arith.extui %0 : i1 to i32
    %c0_i32_0 = arith.constant 0 : i32
    %2 = arith.cmpi ne, %1, %c0_i32_0 : i32
    scf.if %2 {
      %cst_10 = arith.constant 0.000000e+00 : f32
      %12 = vector.broadcast %cst_10 : f32 to vector<32x64xf32>
      %c0_11 = arith.constant 0 : index
      %c0_12 = arith.constant 0 : index
      %13 = vector.load %arg9[%c0_11, %c0_12] : memref<32x64xf32, #tpu.memory_space<vmem>>, vector<32x64xf32>
      tpu.vector_store %arg9[%c0_11, %c0_12], %12 {strides = array<i32>} : memref<32x64xf32, #tpu.memory_space<vmem>>, vector<32x64xf32>,
    } else {
    }
    %c0 = arith.constant 0 : index
    %c0_1 = arith.constant 0 : index
    %3 = vector.load %arg9[%c0, %c0_1] : memref<32x64xf32, #tpu.memory_space<vmem>>, vector<32x64xf32>
    %c0_2 = arith.constant 0 : index
    %c0_3 = arith.constant 0 : index
    %4 = vector.load %arg3[%c0_2, %c0_3] : memref<32x512xbf16, #tpu.memory_space<vmem>>, vector<32x512xbf16>
    %c0_4 = arith.constant 0 : index
    %c0_5 = arith.constant 0 : index
    %5 = vector.load %arg4[%c0_4, %c0_5] : memref<512x64xbf16, #tpu.memory_space<vmem>>, vector<512x64xbf16>
    %cst = arith.constant dense<0.000000e+00> : vector<32x64xf32>
    %6 = tpu.matmul %4, %5, %cst {dimension_numbers = #tpu.dot_dimension_numbers<[1], [0], [0], [1], [0, 0, 1, 1], [], []>} : vector<32x512xbf16>, vector<512x64xbf16>, vector<32x64xf32> -> vector<32x64xf32>
    %7 = arith.addf %3, %6 : vector<32x64xf32>
    %c0_6 = arith.constant 0 : index
    %c0_7 = arith.constant 0 : index
    %8 = vector.load %arg9[%c0_6, %c0_7] : memref<32x64xf32, #tpu.memory_space<vmem>>, vector<32x64xf32>
    tpu.vector_store %arg9[%c0_6, %c0_7], %7 {strides = array<i32>} : memref<32x64xf32, #tpu.memory_space<vmem>>, vector<32x64xf32>,
    %c0_i32_8 = arith.constant 0 : i32
    %9 = arith.cmpi eq, %arg2, %c0_i32_8 : i32
    %10 = arith.extui %9 : i1 to i32
    %c0_i32_9 = arith.constant 0 : i32
    %11 = arith.cmpi ne, %10, %c0_i32_9 : i32
    scf.if %11 {
      %c0_10 = arith.constant 0 : index
      %c0_11 = arith.constant 0 : index
      %12 = vector.load %arg9[%c0_10, %c0_11] : memref<32x64xf32, #tpu.memory_space<vmem>>, vector<32x64xf32>
      %c0_12 = arith.constant 0 : index
      %c0_13 = arith.constant 0 : index
      %13 = vector.load %arg5[%c0_12, %c0_13] : memref<1x64xf32, #tpu.memory_space<vmem>>, vector<1x64xf32>
      %14 = vector.broadcast %13 : vector<1x64xf32> to vector<32x64xf32>
      %15 = arith.addf %12, %14 : vector<32x64xf32>
      %cst_14 = arith.constant 0.000000e+00 : f32
      %16 = vector.broadcast %cst_14 : f32 to vector<32x64xf32>
      %17 = arith.maximumf %15, %16 : vector<32x64xf32>
      %c0_15 = arith.constant 0 : index
      %c0_16 = arith.constant 0 : index
      %18 = vector.load %arg6[%c0_15, %c0_16] : memref<1x64xf32, #tpu.memory_space<vmem>>, vector<1x64xf32>
      %19 = vector.broadcast %18 : vector<1x64xf32> to vector<32x64xf32>
      %20 = arith.mulf %17, %19 : vector<32x64xf32>
      %c0_17 = arith.constant 0 : index
      %c0_18 = arith.constant 0 : index
      %21 = vector.load %arg7[%c0_17, %c0_18] : memref<1x64xf32, #tpu.memory_space<vmem>>, vector<1x64xf32>
      %22 = vector.broadcast %21 : vector<1x64xf32> to vector<32x64xf32>
      %23 = arith.addf %20, %22 : vector<32x64xf32>
      %24 = arith.truncf %23 : vector<32x64xf32> to vector<32x64xbf16>
      %c0_19 = arith.constant 0 : index
      %c0_20 = arith.constant 0 : index
      %25 = vector.load %arg8[%c0_19, %c0_20] : memref<32x64xbf16, #tpu.memory_space<vmem>>, vector<32x64xbf16>
      tpu.vector_store %arg8[%c0_19, %c0_20], %24 {strides = array<i32>} : memref<32x64xbf16, #tpu.memory_space<vmem>>, vector<32x64xbf16>,
    } else {
    }
    return
  }
  func.func @transform_0(%arg0: i32, %arg1: i32, %arg2: i32) -> (i32, i32) {
    %c0_i32 = arith.constant 0 : i32
    return %arg0, %arg2 : i32, i32
  }
  func.func @transform_1(%arg0: i32, %arg1: i32, %arg2: i32) -> (i32, i32) {
    %c0_i32 = arith.constant 0 : i32
    return %arg2, %arg1 : i32, i32
  }
  func.func @transform_2(%arg0: i32, %arg1: i32, %arg2: i32) -> (i32, i32) {
    %c0_i32 = arith.constant 0 : i32
    %c0_i32_0 = arith.constant 0 : i32
    return %c0_i32, %arg1 : i32, i32
  }
  func.func @transform_3(%arg0: i32, %arg1: i32, %arg2: i32) -> (i32, i32) {
    %c0_i32 = arith.constant 0 : i32
    %c0_i32_0 = arith.constant 0 : i32
    return %c0_i32, %arg1 : i32, i32
  }
  func.func @transform_4(%arg0: i32, %arg1: i32, %arg2: i32) -> (i32, i32) {
    %c0_i32 = arith.constant 0 : i32
    %c0_i32_0 = arith.constant 0 : i32
    return %c0_i32, %arg1 : i32, i32
  }
  func.func @transform_5(%arg0: i32, %arg1: i32, %arg2: i32) -> (i32, i32) {
    %c0_i32 = arith.constant 0 : i32
    return %arg0, %arg1 : i32, i32
  }
}

module attributes {stable_mosaic.version = 11 : i64} {
  func.func @_mm_splitk_kernel(%arg0: i32, %arg1: i32, %arg2: memref<2x512xbf16, #tpu.memory_space<vmem>>, %arg3: memref<512x20xbf16, #tpu.memory_space<vmem>>, %arg4: memref<1x2x20xf32, #tpu.memory_space<vmem>>) attributes {dimension_semantics = [#tpu.dimension_semantics<parallel>, #tpu.dimension_semantics<arbitrary>], iteration_bounds = array<i64: 2, 1>, scalar_prefetch = 0 : i64, scratch_operands = 0 : i64, tpu.core_type = #tpu.core_type<tc>, window_params = [{transform_indices = @transform_0, window_bounds = array<i64: 2, 512>}, {transform_indices = @transform_1, window_bounds = array<i64: 512, 20>}, {transform_indices = @transform_2, window_bounds = array<i64: 1, 2, 20>}]} {
    %c0_i32 = arith.constant 0 : i32
    %0 = arith.cmpi eq, %arg1, %c0_i32 : i32
    %1 = arith.extui %0 : i1 to i32
    %c0_i32_0 = arith.constant 0 : i32
    %2 = arith.cmpi ne, %1, %c0_i32_0 : i32
    scf.if %2 {
      %cst_10 = arith.constant 0.000000e+00 : f32
      %10 = vector.broadcast %cst_10 : f32 to vector<1x2x20xf32>
      %c0_11 = arith.constant 0 : index
      %c0_12 = arith.constant 0 : index
      %c0_13 = arith.constant 0 : index
      %11 = vector.load %arg4[%c0_11, %c0_12, %c0_13] : memref<1x2x20xf32, #tpu.memory_space<vmem>>, vector<1x2x20xf32>
      tpu.vector_store %arg4[%c0_11, %c0_12, %c0_13], %10 {strides = array<i32>} : memref<1x2x20xf32, #tpu.memory_space<vmem>>, vector<1x2x20xf32>,
    } else {
    }
    %c0 = arith.constant 0 : index
    %c0_1 = arith.constant 0 : index
    %c0_2 = arith.constant 0 : index
    %3 = vector.load %arg4[%c0, %c0_1, %c0_2] : memref<1x2x20xf32, #tpu.memory_space<vmem>>, vector<1x2x20xf32>
    %c0_3 = arith.constant 0 : index
    %c0_4 = arith.constant 0 : index
    %4 = vector.load %arg2[%c0_3, %c0_4] : memref<2x512xbf16, #tpu.memory_space<vmem>>, vector<2x512xbf16>
    %c0_5 = arith.constant 0 : index
    %c0_6 = arith.constant 0 : index
    %5 = vector.load %arg3[%c0_5, %c0_6] : memref<512x20xbf16, #tpu.memory_space<vmem>>, vector<512x20xbf16>
    %cst = arith.constant dense<0.000000e+00> : vector<2x20xf32>
    %6 = tpu.matmul %4, %5, %cst {dimension_numbers = #tpu.dot_dimension_numbers<[1], [0], [0], [1], [0, 0, 1, 1], [], []>} : vector<2x512xbf16>, vector<512x20xbf16>, vector<2x20xf32> -> vector<2x20xf32>
    %7 = vector.shape_cast %6 : vector<2x20xf32> to vector<1x2x20xf32>
    %8 = arith.addf %3, %7 : vector<1x2x20xf32>
    %c0_7 = arith.constant 0 : index
    %c0_8 = arith.constant 0 : index
    %c0_9 = arith.constant 0 : index
    %9 = vector.load %arg4[%c0_7, %c0_8, %c0_9] : memref<1x2x20xf32, #tpu.memory_space<vmem>>, vector<1x2x20xf32>
    tpu.vector_store %arg4[%c0_7, %c0_8, %c0_9], %8 {strides = array<i32>} : memref<1x2x20xf32, #tpu.memory_space<vmem>>, vector<1x2x20xf32>,
    return
  }
  func.func @transform_0(%arg0: i32, %arg1: i32) -> (i32, i32) {
    %c1_i32 = arith.constant 1 : i32
    %0 = arith.muli %arg0, %c1_i32 : i32
    %1 = arith.addi %0, %arg1 : i32
    %c0_i32 = arith.constant 0 : i32
    %c0_i32_0 = arith.constant 0 : i32
    return %c0_i32, %1 : i32, i32
  }
  func.func @transform_1(%arg0: i32, %arg1: i32) -> (i32, i32) {
    %c1_i32 = arith.constant 1 : i32
    %0 = arith.muli %arg0, %c1_i32 : i32
    %1 = arith.addi %0, %arg1 : i32
    %c0_i32 = arith.constant 0 : i32
    %c0_i32_0 = arith.constant 0 : i32
    return %1, %c0_i32 : i32, i32
  }
  func.func @transform_2(%arg0: i32, %arg1: i32) -> (i32, i32, i32) {
    %c0_i32 = arith.constant 0 : i32
    %c0_i32_0 = arith.constant 0 : i32
    %c0_i32_1 = arith.constant 0 : i32
    return %arg0, %c0_i32, %c0_i32_0 : i32, i32, i32
  }
}

module attributes {stable_mosaic.version = 11 : i64} {
  func.func @_mm_kernel(%arg0: i32, %arg1: i32, %arg2: i32, %arg3: memref<2x10xbf16, #tpu.memory_space<vmem>>, %arg4: memref<10x1024xbf16, #tpu.memory_space<vmem>>, %arg5: memref<1x1024xf32, #tpu.memory_space<vmem>>, %arg6: memref<2x1024xbf16, #tpu.memory_space<vmem>>, %arg7: memref<2x1024xf32, #tpu.memory_space<vmem>>) attributes {dimension_semantics = [#tpu.dimension_semantics<parallel>, #tpu.dimension_semantics<parallel>, #tpu.dimension_semantics<arbitrary>], iteration_bounds = array<i64: 1, 1, 1>, scalar_prefetch = 0 : i64, scratch_operands = 1 : i64, tpu.core_type = #tpu.core_type<tc>, window_params = [{transform_indices = @transform_0, window_bounds = array<i64: 2, 10>}, {transform_indices = @transform_1, window_bounds = array<i64: 10, 1024>}, {transform_indices = @transform_2, window_bounds = array<i64: 1, 1024>}, {transform_indices = @transform_3, window_bounds = array<i64: 2, 1024>}]} {
    %c0_i32 = arith.constant 0 : i32
    %0 = arith.cmpi eq, %arg2, %c0_i32 : i32
    %1 = arith.extui %0 : i1 to i32
    %c0_i32_0 = arith.constant 0 : i32
    %2 = arith.cmpi ne, %1, %c0_i32_0 : i32
    scf.if %2 {
      %cst_10 = arith.constant 0.000000e+00 : f32
      %12 = vector.broadcast %cst_10 : f32 to vector<2x1024xf32>
      %c0_11 = arith.constant 0 : index
      %c0_12 = arith.constant 0 : index
      %13 = vector.load %arg7[%c0_11, %c0_12] : memref<2x1024xf32, #tpu.memory_space<vmem>>, vector<2x1024xf32>
      tpu.vector_store %arg7[%c0_11, %c0_12], %12 {strides = array<i32>} : memref<2x1024xf32, #tpu.memory_space<vmem>>, vector<2x1024xf32>,
    } else {
    }
    %c0 = arith.constant 0 : index
    %c0_1 = arith.constant 0 : index
    %3 = vector.load %arg7[%c0, %c0_1] : memref<2x1024xf32, #tpu.memory_space<vmem>>, vector<2x1024xf32>
    %c0_2 = arith.constant 0 : index
    %c0_3 = arith.constant 0 : index
    %4 = vector.load %arg3[%c0_2, %c0_3] : memref<2x10xbf16, #tpu.memory_space<vmem>>, vector<2x10xbf16>
    %c0_4 = arith.constant 0 : index
    %c0_5 = arith.constant 0 : index
    %5 = vector.load %arg4[%c0_4, %c0_5] : memref<10x1024xbf16, #tpu.memory_space<vmem>>, vector<10x1024xbf16>
    %cst = arith.constant dense<0.000000e+00> : vector<2x1024xf32>
    %6 = tpu.matmul %4, %5, %cst {dimension_numbers = #tpu.dot_dimension_numbers<[1], [0], [0], [1], [0, 0, 1, 1], [], []>} : vector<2x10xbf16>, vector<10x1024xbf16>, vector<2x1024xf32> -> vector<2x1024xf32>
    %7 = arith.addf %3, %6 : vector<2x1024xf32>
    %c0_6 = arith.constant 0 : index
    %c0_7 = arith.constant 0 : index
    %8 = vector.load %arg7[%c0_6, %c0_7] : memref<2x1024xf32, #tpu.memory_space<vmem>>, vector<2x1024xf32>
    tpu.vector_store %arg7[%c0_6, %c0_7], %7 {strides = array<i32>} : memref<2x1024xf32, #tpu.memory_space<vmem>>, vector<2x1024xf32>,
    %c0_i32_8 = arith.constant 0 : i32
    %9 = arith.cmpi eq, %arg2, %c0_i32_8 : i32
    %10 = arith.extui %9 : i1 to i32
    %c0_i32_9 = arith.constant 0 : i32
    %11 = arith.cmpi ne, %10, %c0_i32_9 : i32
    scf.if %11 {
      %c0_10 = arith.constant 0 : index
      %c0_11 = arith.constant 0 : index
      %12 = vector.load %arg7[%c0_10, %c0_11] : memref<2x1024xf32, #tpu.memory_space<vmem>>, vector<2x1024xf32>
      %c0_12 = arith.constant 0 : index
      %c0_13 = arith.constant 0 : index
      %13 = vector.load %arg5[%c0_12, %c0_13] : memref<1x1024xf32, #tpu.memory_space<vmem>>, vector<1x1024xf32>
      %14 = vector.broadcast %13 : vector<1x1024xf32> to vector<2x1024xf32>
      %15 = arith.addf %12, %14 : vector<2x1024xf32>
      %16 = arith.truncf %15 : vector<2x1024xf32> to vector<2x1024xbf16>
      %c0_14 = arith.constant 0 : index
      %c0_15 = arith.constant 0 : index
      %17 = vector.load %arg6[%c0_14, %c0_15] : memref<2x1024xbf16, #tpu.memory_space<vmem>>, vector<2x1024xbf16>
      tpu.vector_store %arg6[%c0_14, %c0_15], %16 {strides = array<i32>} : memref<2x1024xbf16, #tpu.memory_space<vmem>>, vector<2x1024xbf16>,
    } else {
    }
    return
  }
  func.func @transform_0(%arg0: i32, %arg1: i32, %arg2: i32) -> (i32, i32) {
    %c0_i32 = arith.constant 0 : i32
    return %arg0, %arg2 : i32, i32
  }
  func.func @transform_1(%arg0: i32, %arg1: i32, %arg2: i32) -> (i32, i32) {
    %c0_i32 = arith.constant 0 : i32
    return %arg2, %arg1 : i32, i32
  }
  func.func @transform_2(%arg0: i32, %arg1: i32, %arg2: i32) -> (i32, i32) {
    %c0_i32 = arith.constant 0 : i32
    %c0_i32_0 = arith.constant 0 : i32
    return %c0_i32, %arg1 : i32, i32
  }
  func.func @transform_3(%arg0: i32, %arg1: i32, %arg2: i32) -> (i32, i32) {
    %c0_i32 = arith.constant 0 : i32
    return %arg0, %arg1 : i32, i32
  }
}

module attributes {stable_mosaic.version = 11 : i64} {
  func.func @_mm_kernel(%arg0: i32, %arg1: i32, %arg2: i32, %arg3: memref<50x256xbf16, #tpu.memory_space<vmem>>, %arg4: memref<256x128xbf16, #tpu.memory_space<vmem>>, %arg5: memref<1x128xf32, #tpu.memory_space<vmem>>, %arg6: memref<1x128xf32, #tpu.memory_space<vmem>>, %arg7: memref<1x128xf32, #tpu.memory_space<vmem>>, %arg8: memref<50x128xbf16, #tpu.memory_space<vmem>>, %arg9: memref<50x128xf32, #tpu.memory_space<vmem>>) attributes {dimension_semantics = [#tpu.dimension_semantics<parallel>, #tpu.dimension_semantics<parallel>, #tpu.dimension_semantics<arbitrary>], iteration_bounds = array<i64: 1, 1, 1>, scalar_prefetch = 0 : i64, scratch_operands = 1 : i64, tpu.core_type = #tpu.core_type<tc>, window_params = [{transform_indices = @transform_0, window_bounds = array<i64: 50, 256>}, {transform_indices = @transform_1, window_bounds = array<i64: 256, 128>}, {transform_indices = @transform_2, window_bounds = array<i64: 1, 128>}, {transform_indices = @transform_3, window_bounds = array<i64: 1, 128>}, {transform_indices = @transform_4, window_bounds = array<i64: 1, 128>}, {transform_indices = @transform_5, window_bounds = array<i64: 50, 128>}]} {
    %c0_i32 = arith.constant 0 : i32
    %0 = arith.cmpi eq, %arg2, %c0_i32 : i32
    %1 = arith.extui %0 : i1 to i32
    %c0_i32_0 = arith.constant 0 : i32
    %2 = arith.cmpi ne, %1, %c0_i32_0 : i32
    scf.if %2 {
      %cst_10 = arith.constant 0.000000e+00 : f32
      %12 = vector.broadcast %cst_10 : f32 to vector<50x128xf32>
      %c0_11 = arith.constant 0 : index
      %c0_12 = arith.constant 0 : index
      %13 = vector.load %arg9[%c0_11, %c0_12] : memref<50x128xf32, #tpu.memory_space<vmem>>, vector<50x128xf32>
      tpu.vector_store %arg9[%c0_11, %c0_12], %12 {strides = array<i32>} : memref<50x128xf32, #tpu.memory_space<vmem>>, vector<50x128xf32>,
    } else {
    }
    %c0 = arith.constant 0 : index
    %c0_1 = arith.constant 0 : index
    %3 = vector.load %arg9[%c0, %c0_1] : memref<50x128xf32, #tpu.memory_space<vmem>>, vector<50x128xf32>
    %c0_2 = arith.constant 0 : index
    %c0_3 = arith.constant 0 : index
    %4 = vector.load %arg3[%c0_2, %c0_3] : memref<50x256xbf16, #tpu.memory_space<vmem>>, vector<50x256xbf16>
    %c0_4 = arith.constant 0 : index
    %c0_5 = arith.constant 0 : index
    %5 = vector.load %arg4[%c0_4, %c0_5] : memref<256x128xbf16, #tpu.memory_space<vmem>>, vector<256x128xbf16>
    %cst = arith.constant dense<0.000000e+00> : vector<50x128xf32>
    %6 = tpu.matmul %4, %5, %cst {dimension_numbers = #tpu.dot_dimension_numbers<[1], [0], [0], [1], [0, 0, 1, 1], [], []>} : vector<50x256xbf16>, vector<256x128xbf16>, vector<50x128xf32> -> vector<50x128xf32>
    %7 = arith.addf %3, %6 : vector<50x128xf32>
    %c0_6 = arith.constant 0 : index
    %c0_7 = arith.constant 0 : index
    %8 = vector.load %arg9[%c0_6, %c0_7] : memref<50x128xf32, #tpu.memory_space<vmem>>, vector<50x128xf32>
    tpu.vector_store %arg9[%c0_6, %c0_7], %7 {strides = array<i32>} : memref<50x128xf32, #tpu.memory_space<vmem>>, vector<50x128xf32>,
    %c0_i32_8 = arith.constant 0 : i32
    %9 = arith.cmpi eq, %arg2, %c0_i32_8 : i32
    %10 = arith.extui %9 : i1 to i32
    %c0_i32_9 = arith.constant 0 : i32
    %11 = arith.cmpi ne, %10, %c0_i32_9 : i32
    scf.if %11 {
      %c0_10 = arith.constant 0 : index
      %c0_11 = arith.constant 0 : index
      %12 = vector.load %arg9[%c0_10, %c0_11] : memref<50x128xf32, #tpu.memory_space<vmem>>, vector<50x128xf32>
      %c0_12 = arith.constant 0 : index
      %c0_13 = arith.constant 0 : index
      %13 = vector.load %arg5[%c0_12, %c0_13] : memref<1x128xf32, #tpu.memory_space<vmem>>, vector<1x128xf32>
      %14 = vector.broadcast %13 : vector<1x128xf32> to vector<50x128xf32>
      %15 = arith.addf %12, %14 : vector<50x128xf32>
      %cst_14 = arith.constant 0.000000e+00 : f32
      %16 = vector.broadcast %cst_14 : f32 to vector<50x128xf32>
      %17 = arith.maximumf %15, %16 : vector<50x128xf32>
      %c0_15 = arith.constant 0 : index
      %c0_16 = arith.constant 0 : index
      %18 = vector.load %arg6[%c0_15, %c0_16] : memref<1x128xf32, #tpu.memory_space<vmem>>, vector<1x128xf32>
      %19 = vector.broadcast %18 : vector<1x128xf32> to vector<50x128xf32>
      %20 = arith.mulf %17, %19 : vector<50x128xf32>
      %c0_17 = arith.constant 0 : index
      %c0_18 = arith.constant 0 : index
      %21 = vector.load %arg7[%c0_17, %c0_18] : memref<1x128xf32, #tpu.memory_space<vmem>>, vector<1x128xf32>
      %22 = vector.broadcast %21 : vector<1x128xf32> to vector<50x128xf32>
      %23 = arith.addf %20, %22 : vector<50x128xf32>
      %24 = arith.truncf %23 : vector<50x128xf32> to vector<50x128xbf16>
      %c0_19 = arith.constant 0 : index
      %c0_20 = arith.constant 0 : index
      %25 = vector.load %arg8[%c0_19, %c0_20] : memref<50x128xbf16, #tpu.memory_space<vmem>>, vector<50x128xbf16>
      tpu.vector_store %arg8[%c0_19, %c0_20], %24 {strides = array<i32>} : memref<50x128xbf16, #tpu.memory_space<vmem>>, vector<50x128xbf16>,
    } else {
    }
    return
  }
  func.func @transform_0(%arg0: i32, %arg1: i32, %arg2: i32) -> (i32, i32) {
    %c0_i32 = arith.constant 0 : i32
    return %arg0, %arg2 : i32, i32
  }
  func.func @transform_1(%arg0: i32, %arg1: i32, %arg2: i32) -> (i32, i32) {
    %c0_i32 = arith.constant 0 : i32
    return %arg2, %arg1 : i32, i32
  }
  func.func @transform_2(%arg0: i32, %arg1: i32, %arg2: i32) -> (i32, i32) {
    %c0_i32 = arith.constant 0 : i32
    %c0_i32_0 = arith.constant 0 : i32
    return %c0_i32, %arg1 : i32, i32
  }
  func.func @transform_3(%arg0: i32, %arg1: i32, %arg2: i32) -> (i32, i32) {
    %c0_i32 = arith.constant 0 : i32
    %c0_i32_0 = arith.constant 0 : i32
    return %c0_i32, %arg1 : i32, i32
  }
  func.func @transform_4(%arg0: i32, %arg1: i32, %arg2: i32) -> (i32, i32) {
    %c0_i32 = arith.constant 0 : i32
    %c0_i32_0 = arith.constant 0 : i32
    return %c0_i32, %arg1 : i32, i32
  }
  func.func @transform_5(%arg0: i32, %arg1: i32, %arg2: i32) -> (i32, i32) {
    %c0_i32 = arith.constant 0 : i32
    return %arg0, %arg1 : i32, i32
  }
}

module attributes {stable_mosaic.version = 11 : i64} {
  func.func @_mm_kernel(%arg0: i32, %arg1: i32, %arg2: i32, %arg3: memref<162x128xbf16, #tpu.memory_space<vmem>>, %arg4: memref<128x20xbf16, #tpu.memory_space<vmem>>, %arg5: memref<1x20xf32, #tpu.memory_space<vmem>>, %arg6: memref<162x20xbf16, #tpu.memory_space<vmem>>, %arg7: memref<162x20xf32, #tpu.memory_space<vmem>>) attributes {dimension_semantics = [#tpu.dimension_semantics<parallel>, #tpu.dimension_semantics<parallel>, #tpu.dimension_semantics<arbitrary>], iteration_bounds = array<i64: 1, 1, 1>, scalar_prefetch = 0 : i64, scratch_operands = 1 : i64, tpu.core_type = #tpu.core_type<tc>, window_params = [{transform_indices = @transform_0, window_bounds = array<i64: 162, 128>}, {transform_indices = @transform_1, window_bounds = array<i64: 128, 20>}, {transform_indices = @transform_2, window_bounds = array<i64: 1, 20>}, {transform_indices = @transform_3, window_bounds = array<i64: 162, 20>}]} {
    %c0_i32 = arith.constant 0 : i32
    %0 = arith.cmpi eq, %arg2, %c0_i32 : i32
    %1 = arith.extui %0 : i1 to i32
    %c0_i32_0 = arith.constant 0 : i32
    %2 = arith.cmpi ne, %1, %c0_i32_0 : i32
    scf.if %2 {
      %cst_10 = arith.constant 0.000000e+00 : f32
      %12 = vector.broadcast %cst_10 : f32 to vector<162x20xf32>
      %c0_11 = arith.constant 0 : index
      %c0_12 = arith.constant 0 : index
      %13 = vector.load %arg7[%c0_11, %c0_12] : memref<162x20xf32, #tpu.memory_space<vmem>>, vector<162x20xf32>
      tpu.vector_store %arg7[%c0_11, %c0_12], %12 {strides = array<i32>} : memref<162x20xf32, #tpu.memory_space<vmem>>, vector<162x20xf32>,
    } else {
    }
    %c0 = arith.constant 0 : index
    %c0_1 = arith.constant 0 : index
    %3 = vector.load %arg7[%c0, %c0_1] : memref<162x20xf32, #tpu.memory_space<vmem>>, vector<162x20xf32>
    %c0_2 = arith.constant 0 : index
    %c0_3 = arith.constant 0 : index
    %4 = vector.load %arg3[%c0_2, %c0_3] : memref<162x128xbf16, #tpu.memory_space<vmem>>, vector<162x128xbf16>
    %c0_4 = arith.constant 0 : index
    %c0_5 = arith.constant 0 : index
    %5 = vector.load %arg4[%c0_4, %c0_5] : memref<128x20xbf16, #tpu.memory_space<vmem>>, vector<128x20xbf16>
    %cst = arith.constant dense<0.000000e+00> : vector<162x20xf32>
    %6 = tpu.matmul %4, %5, %cst {dimension_numbers = #tpu.dot_dimension_numbers<[1], [0], [0], [1], [0, 0, 1, 1], [], []>} : vector<162x128xbf16>, vector<128x20xbf16>, vector<162x20xf32> -> vector<162x20xf32>
    %7 = arith.addf %3, %6 : vector<162x20xf32>
    %c0_6 = arith.constant 0 : index
    %c0_7 = arith.constant 0 : index
    %8 = vector.load %arg7[%c0_6, %c0_7] : memref<162x20xf32, #tpu.memory_space<vmem>>, vector<162x20xf32>
    tpu.vector_store %arg7[%c0_6, %c0_7], %7 {strides = array<i32>} : memref<162x20xf32, #tpu.memory_space<vmem>>, vector<162x20xf32>,
    %c0_i32_8 = arith.constant 0 : i32
    %9 = arith.cmpi eq, %arg2, %c0_i32_8 : i32
    %10 = arith.extui %9 : i1 to i32
    %c0_i32_9 = arith.constant 0 : i32
    %11 = arith.cmpi ne, %10, %c0_i32_9 : i32
    scf.if %11 {
      %c0_10 = arith.constant 0 : index
      %c0_11 = arith.constant 0 : index
      %12 = vector.load %arg7[%c0_10, %c0_11] : memref<162x20xf32, #tpu.memory_space<vmem>>, vector<162x20xf32>
      %c0_12 = arith.constant 0 : index
      %c0_13 = arith.constant 0 : index
      %13 = vector.load %arg5[%c0_12, %c0_13] : memref<1x20xf32, #tpu.memory_space<vmem>>, vector<1x20xf32>
      %14 = vector.broadcast %13 : vector<1x20xf32> to vector<162x20xf32>
      %15 = arith.addf %12, %14 : vector<162x20xf32>
      %cst_14 = arith.constant 0.000000e+00 : f32
      %16 = vector.broadcast %cst_14 : f32 to vector<162x20xf32>
      %17 = arith.subf %16, %15 : vector<162x20xf32>
      %18 = math.exp %17 : vector<162x20xf32>
      %cst_15 = arith.constant 1.000000e+00 : f32
      %19 = vector.broadcast %cst_15 : f32 to vector<162x20xf32>
      %20 = arith.addf %19, %18 : vector<162x20xf32>
      %21 = tpu.reciprocal %20 {approx = true} : vector<162x20xf32> -> vector<162x20xf32>
      %22 = arith.truncf %21 : vector<162x20xf32> to vector<162x20xbf16>
      %c0_16 = arith.constant 0 : index
      %c0_17 = arith.constant 0 : index
      %23 = vector.load %arg6[%c0_16, %c0_17] : memref<162x20xbf16, #tpu.memory_space<vmem>>, vector<162x20xbf16>
      tpu.vector_store %arg6[%c0_16, %c0_17], %22 {strides = array<i32>} : memref<162x20xbf16, #tpu.memory_space<vmem>>, vector<162x20xbf16>,
    } else {
    }
    return
  }
  func.func @transform_0(%arg0: i32, %arg1: i32, %arg2: i32) -> (i32, i32) {
    %c0_i32 = arith.constant 0 : i32
    return %arg0, %arg2 : i32, i32
  }
  func.func @transform_1(%arg0: i32, %arg1: i32, %arg2: i32) -> (i32, i32) {
    %c0_i32 = arith.constant 0 : i32
    return %arg2, %arg1 : i32, i32
  }
  func.func @transform_2(%arg0: i32, %arg1: i32, %arg2: i32) -> (i32, i32) {
    %c0_i32 = arith.constant 0 : i32
    %c0_i32_0 = arith.constant 0 : i32
    return %c0_i32, %arg1 : i32, i32
  }
  func.func @transform_3(%arg0: i32, %arg1: i32, %arg2: i32) -> (i32, i32) {
    %c0_i32 = arith.constant 0 : i32
    return %arg0, %arg1 : i32, i32
  }
}

</mosaic_0001>

<llo_original>
// kernel: vae_forward.6
$region0: #{vae_forward.6}
  #allocation0 [shape = 'u32[]', space=smem, size = 0x4, offset = 0x4, fixed_abs, tag = 'smem constant byte address 0x4 - core index']
  #allocation1 [shape = 'u32[144,128]{1,0:T(1,128)}', space=vmem, size = 0x12000, scoped, tag = 'internal scratch']
  #allocation2 [shape = 'f32[128,32]{1,0:T(8,128)}', space=vmem, size = 0x10000, scoped, tag = 'scratch operand']
  %s0 = inlined_call_operand.vmem [shape: bf16[128,16], index: 0, kind: input, shape index: {}]
  %s1 = inlined_call_operand.vmem [shape: bf16[16,32], index: 1, kind: input, shape index: {}]
  %s2 = inlined_call_operand.vmem [shape: f32[1,32], index: 2, kind: input, shape index: {}]
  %s3 = inlined_call_operand.vmem [shape: f32[1,32], index: 3, kind: input, shape index: {}]
  %s4 = inlined_call_operand.vmem [shape: f32[1,32], index: 4, kind: input, shape index: {}]
  %s5 = inlined_call_operand.vmem [shape: bf16[128,32], index: 5, kind: output, shape index: {}]
  %s6 = sld [smem:[#allocation0]]
  $region38: #{vae_forward.6} parent=0
    _
  %s8 = ssub.s32 1, %s6
  %s9 = scalar_select 0, %s8, %s6
  // Predicated region
  $region2: #{vae_forward.6} parent=0 // pred_check
    _
  $region3: #{vae_forward.6} parent=0 // pred_check_branch
    %11 = sbr.rel (0) target = $region5
  $region4: #{vae_forward.6} parent=0 // pred_region
    _
  $region5: #{vae_forward.6} parent=0 // pred_fallthru
    _
  // Predicated region
  $region6: #{vae_forward.6} parent=0 // pred_check
    _
  $region7: #{vae_forward.6} parent=0 // pred_check_branch
    %13 = sbr.rel (0) target = $region9
  $region8: #{vae_forward.6} parent=0 // pred_region
    _
  $region9: #{vae_forward.6} parent=0 // pred_fallthru
    _
  // Predicated region
  $region10: #{vae_forward.6} parent=0 // pred_check
    _
  $region11: #{vae_forward.6} parent=0 // pred_check_branch
    %15 = sbr.rel (0) target = $region13
  $region12: #{vae_forward.6} parent=0 // pred_region
    _
  $region13: #{vae_forward.6} parent=0 // pred_fallthru
    _
  // Predicated region
  $region14: #{vae_forward.6} parent=0 // pred_check
    _
  $region15: #{vae_forward.6} parent=0 // pred_check_branch
    %17 = sbr.rel (0) target = $region17
  $region16: #{vae_forward.6} parent=0 // pred_region
    _
  $region17: #{vae_forward.6} parent=0 // pred_fallthru
    _
  // Predicated region
  $region18: #{vae_forward.6} parent=0 // pred_check
    _
  $region19: #{vae_forward.6} parent=0 // pred_check_branch
    %19 = sbr.rel (0) target = $region21
  $region20: #{vae_forward.6} parent=0 // pred_region
    _
  $region21: #{vae_forward.6} parent=0 // pred_fallthru
    _
  %p21 = scmp.eq.s32.totalorder 0, 0
  // Predicated region
  $region22: #{vae_forward.6} parent=0 // pred_check
    %p22 = pneg %p21
  $region23: #{vae_forward.6} parent=0 // pred_check_branch
    %24 = sbr.rel (%p22) target = $region25
  $region24: #{vae_forward.6} parent=0 // pred_region
    %vm25 = vcmask 261120
    %26 = vst.msk [vmem:[#allocation2] sm:$0xff] %vm25, 0.0
    %27 = vst.msk [vmem:[#allocation2 + $0x8] sm:$0xff] %vm25, 0.0
    %28 = vst.msk [vmem:[#allocation2 + $0x10] sm:$0xff] %vm25, 0.0
    %29 = vst.msk [vmem:[#allocation2 + $0x18] sm:$0xff] %vm25, 0.0
    %30 = vst.msk [vmem:[#allocation2 + $0x20] sm:$0xff] %vm25, 0.0
    %31 = vst.msk [vmem:[#allocation2 + $0x28] sm:$0xff] %vm25, 0.0
    %32 = vst.msk [vmem:[#allocation2 + $0x30] sm:$0xff] %vm25, 0.0
    %33 = vst.msk [vmem:[#allocation2 + $0x38] sm:$0xff] %vm25, 0.0
    %34 = vst.msk [vmem:[#allocation2 + $0x40] sm:$0xff] %vm25, 0.0
    %35 = vst.msk [vmem:[#allocation2 + $0x48] sm:$0xff] %vm25, 0.0
    %36 = vst.msk [vmem:[#allocation2 + $0x50] sm:$0xff] %vm25, 0.0
    %37 = vst.msk [vmem:[#allocation2 + $0x58] sm:$0xff] %vm25, 0.0
    %38 = vst.msk [vmem:[#allocation2 + $0x60] sm:$0xff] %vm25, 0.0
    %39 = vst.msk [vmem:[#allocation2 + $0x68] sm:$0xff] %vm25, 0.0
    %40 = vst.msk [vmem:[#allocation2 + $0x70] sm:$0xff] %vm25, 0.0
    %41 = vst.msk [vmem:[#allocation2 + $0x78] sm:$0xff] %vm25, 0.0
  $region25: #{vae_forward.6} parent=0 // pred_fallthru
    _
  %v42 = vld [vmem:[#allocation2] sm:$0xff]
  %v43 = vld [vmem:[#allocation2 + $0x8] sm:$0xff]
  %v44 = vld [vmem:[#allocation2 + $0x10] sm:$0xff]
  %v45 = vld [vmem:[#allocation2 + $0x18] sm:$0xff]
  %v46 = vld [vmem:[#allocation2 + $0x20] sm:$0xff]
  %v47 = vld [vmem:[#allocation2 + $0x28] sm:$0xff]
  %v48 = vld [vmem:[#allocation2 + $0x30] sm:$0xff]
  %v49 = vld [vmem:[#allocation2 + $0x38] sm:$0xff]
  %v50 = vld [vmem:[#allocation2 + $0x40] sm:$0xff]
  %v51 = vld [vmem:[#allocation2 + $0x48] sm:$0xff]
  %v52 = vld [vmem:[#allocation2 + $0x50] sm:$0xff]
  %v53 = vld [vmem:[#allocation2 + $0x58] sm:$0xff]
  %v54 = vld [vmem:[#allocation2 + $0x60] sm:$0xff]
  %v55 = vld [vmem:[#allocation2 + $0x68] sm:$0xff]
  %v56 = vld [vmem:[#allocation2 + $0x70] sm:$0xff]
  %v57 = vld [vmem:[#allocation2 + $0x78] sm:$0xff]
  %v58 = vld [vmem:[%s0] sm:$0xf]
  %v59 = vld [vmem:[%s0 + $0x4] sm:$0xf]
  %v60 = vld [vmem:[%s0 + $0x8] sm:$0xf]
  %v61 = vld [vmem:[%s0 + $0xc] sm:$0xf]
  %v62 = vld [vmem:[%s0 + $0x10] sm:$0xf]
  %v63 = vld [vmem:[%s0 + $0x14] sm:$0xf]
  %v64 = vld [vmem:[%s0 + $0x18] sm:$0xf]
  %v65 = vld [vmem:[%s0 + $0x1c] sm:$0xf]
  %v66 = vld [vmem:[%s0 + $0x20] sm:$0xf]
  %v67 = vld [vmem:[%s0 + $0x24] sm:$0xf]
  %v68 = vld [vmem:[%s0 + $0x28] sm:$0xf]
  %v69 = vld [vmem:[%s0 + $0x2c] sm:$0xf]
  %v70 = vld [vmem:[%s0 + $0x30] sm:$0xf]
  %v71 = vld [vmem:[%s0 + $0x34] sm:$0xf]
  %v72 = vld [vmem:[%s0 + $0x38] sm:$0xf]
  %v73 = vld [vmem:[%s0 + $0x3c] sm:$0xf]
  %v74 = vld [vmem:[%s1] sm:$0xf]
  %v75 = vld [vmem:[%s1 + $0x4] sm:$0xf]
  %v92 = vunpack.c.l.b16 %v58
  %v93 = vunpack.c.l.b16 %v59
  %v94 = vunpack.c.l.b16 %v60
  %v95 = vunpack.c.l.b16 %v61
  %v96 = vunpack.c.l.b16 %v62
  %v97 = vunpack.c.l.b16 %v63
  %v98 = vunpack.c.l.b16 %v64
  %v99 = vunpack.c.l.b16 %v65
  %v100 = vunpack.c.l.b16 %v66
  %v101 = vunpack.c.l.b16 %v67
  %v102 = vunpack.c.l.b16 %v68
  %v103 = vunpack.c.l.b16 %v69
  %v104 = vunpack.c.l.b16 %v70
  %v105 = vunpack.c.l.b16 %v71
  %v106 = vunpack.c.l.b16 %v72
  %v107 = vunpack.c.l.b16 %v73
  %v108 = vpack.c.b16 %v93, %v92
  %v109 = vpack.c.b16 %v95, %v94
  %v110 = vpack.c.b16 %v97, %v96
  %v111 = vpack.c.b16 %v99, %v98
  %v112 = vpack.c.b16 %v101, %v100
  %v113 = vpack.c.b16 %v103, %v102
  %v114 = vpack.c.b16 %v105, %v104
  %v115 = vpack.c.b16 %v107, %v106
  %v118 = vunpack.c.l.b16 %v74
  %v119 = vunpack.c.l.b16 %v75
  %v120 = vpack.c.b16 %v119, %v118
  %vm122 = vcmask 130048
  %v124 = vsel %vm122, %v108, 0
  %v127 = vsel %vm122, %v109, 0
  %v130 = vsel %vm122, %v110, 0
  %v133 = vsel %vm122, %v111, 0
  %v136 = vsel %vm122, %v112, 0
  %v139 = vsel %vm122, %v113, 0
  %v142 = vsel %vm122, %v114, 0
  %v145 = vsel %vm122, %v115, 0
  %147 = vmatprep.subr.bf16.mxu0 0
  %148 = vmatpush1.bf16.msra.mxu0 0
  %149 = vmatprep.subr.bf16.mxu0 0
  %150 = vmatpush1.bf16.msra.mxu0 0
  %151 = vmatprep.subr.bf16.mxu0 0
  %152 = vmatpush1.bf16.msra.mxu0 0
  %153 = vmatprep.subr.bf16.mxu0 0
  %154 = vmatpush1.bf16.msra.mxu0 0
  %155 = vmatprep.subr.bf16.mxu0 0
  %156 = vmatpush1.bf16.msra.mxu0 0
  %157 = vmatprep.subr.bf16.mxu0 0
  %158 = vmatpush1.bf16.msra.mxu0 0
  %159 = vmatprep.subr.bf16.mxu0 0
  %160 = vmatpush1.bf16.msra.mxu0 0
  %161 = vmatprep.subr.bf16.mxu0 0
  %162 = vmatpush1.bf16.msra.mxu0 %v120
  %163 = vmatprep.subr.bf16.mxu0 0
  %164 = vmatpush2.bf16.msra.mxu0 0
  %165 = vmatprep.subr.bf16.mxu0 0
  %166 = vmatpush2.bf16.msra.mxu0 0
  %167 = vmatprep.subr.bf16.mxu0 0
  %168 = vmatpush2.bf16.msra.mxu0 0
  %169 = vmatprep.subr.bf16.mxu0 0
  %170 = vmatpush2.bf16.msra.mxu0 0
  %171 = vmatprep.subr.bf16.mxu0 0
  %172 = vmatpush2.bf16.msra.mxu0 0
  %173 = vmatprep.subr.bf16.mxu0 0
  %174 = vmatpush2.bf16.msra.mxu0 0
  %175 = vmatprep.subr.bf16.mxu0 0
  %176 = vmatpush2.bf16.msra.mxu0 0
  %177 = vmatprep.subr.bf16.mxu0 0
  %178 = vmatpush2.bf16.msra.mxu0 0
  %179 = vmatprep.mubr.bf16.mxu0 0
  %180 = vmatmul.mubr.bf16.gmra.mxu0 %v124
  %v181 = vpop.f32.mrf.mxu0
  %v182 = vadd.f32 0.0, %v181
  %v183 = vpop.f32.mrf.mxu0
  %v184 = vpop.f32.mrf.mxu0
  %v185 = vadd.f32 0.0, %v184
  %v186 = vpop.f32.mrf.mxu0
  %187 = vmatprep.mubr.bf16.mxu0 0
  %188 = vmatmul.mubr.bf16.gmra.mxu0 %v127
  %v189 = vpop.f32.mrf.mxu0
  %v190 = vadd.f32 0.0, %v189
  %v191 = vpop.f32.mrf.mxu0
  %v192 = vpop.f32.mrf.mxu0
  %v193 = vadd.f32 0.0, %v192
  %v194 = vpop.f32.mrf.mxu0
  %195 = vmatprep.mubr.bf16.mxu0 0
  %196 = vmatmul.mubr.bf16.gmra.mxu0 %v130
  %v197 = vpop.f32.mrf.mxu0
  %v198 = vadd.f32 0.0, %v197
  %v199 = vpop.f32.mrf.mxu0
  %v200 = vpop.f32.mrf.mxu0
  %v201 = vadd.f32 0.0, %v200
  %v202 = vpop.f32.mrf.mxu0
  %203 = vmatprep.mubr.bf16.mxu0 0
  %204 = vmatmul.mubr.bf16.gmra.mxu0 %v133
  %v205 = vpop.f32.mrf.mxu0
  %v206 = vadd.f32 0.0, %v205
  %v207 = vpop.f32.mrf.mxu0
  %v208 = vpop.f32.mrf.mxu0
  %v209 = vadd.f32 0.0, %v208
  %v210 = vpop.f32.mrf.mxu0
  %211 = vmatprep.mubr.bf16.mxu0 0
  %212 = vmatmul.mubr.bf16.gmra.mxu0 %v136
  %v213 = vpop.f32.mrf.mxu0
  %v214 = vadd.f32 0.0, %v213
  %v215 = vpop.f32.mrf.mxu0
  %v216 = vpop.f32.mrf.mxu0
  %v217 = vadd.f32 0.0, %v216
  %v218 = vpop.f32.mrf.mxu0
  %219 = vmatprep.mubr.bf16.mxu0 0
  %220 = vmatmul.mubr.bf16.gmra.mxu0 %v139
  %v221 = vpop.f32.mrf.mxu0
  %v222 = vadd.f32 0.0, %v221
  %v223 = vpop.f32.mrf.mxu0
  %v224 = vpop.f32.mrf.mxu0
  %v225 = vadd.f32 0.0, %v224
  %v226 = vpop.f32.mrf.mxu0
  %227 = vmatprep.mubr.bf16.mxu0 0
  %228 = vmatmul.mubr.bf16.gmra.mxu0 %v142
  %v229 = vpop.f32.mrf.mxu0
  %v230 = vadd.f32 0.0, %v229
  %v231 = vpop.f32.mrf.mxu0
  %v232 = vpop.f32.mrf.mxu0
  %v233 = vadd.f32 0.0, %v232
  %v234 = vpop.f32.mrf.mxu0
  %235 = vmatprep.mubr.bf16.mxu0 0
  %236 = vmatmul.mubr.bf16.gmra.mxu0 %v145
  %v237 = vpop.f32.mrf.mxu0
  %v238 = vadd.f32 0.0, %v237
  %v239 = vpop.f32.mrf.mxu0
  %v240 = vpop.f32.mrf.mxu0
  %v241 = vadd.f32 0.0, %v240
  %v242 = vpop.f32.mrf.mxu0
  %243 = vdwg.mxu0
  %v244 = vadd.f32 %v42, %v182
  %v245 = vadd.f32 %v43, %v185
  %v246 = vadd.f32 %v44, %v190
  %v247 = vadd.f32 %v45, %v193
  %v248 = vadd.f32 %v46, %v198
  %v249 = vadd.f32 %v47, %v201
  %v250 = vadd.f32 %v48, %v206
  %v251 = vadd.f32 %v49, %v209
  %v252 = vadd.f32 %v50, %v214
  %v253 = vadd.f32 %v51, %v217
  %v254 = vadd.f32 %v52, %v222
  %v255 = vadd.f32 %v53, %v225
  %v256 = vadd.f32 %v54, %v230
  %v257 = vadd.f32 %v55, %v233
  %v258 = vadd.f32 %v56, %v238
  %v259 = vadd.f32 %v57, %v241
  %vm260 = vcmask 261120
  %261 = vst.msk [vmem:[#allocation2] sm:$0xff] %vm260, %v244
  %262 = vst.msk [vmem:[#allocation2 + $0x8] sm:$0xff] %vm260, %v245
  %263 = vst.msk [vmem:[#allocation2 + $0x10] sm:$0xff] %vm260, %v246
  %264 = vst.msk [vmem:[#allocation2 + $0x18] sm:$0xff] %vm260, %v247
  %265 = vst.msk [vmem:[#allocation2 + $0x20] sm:$0xff] %vm260, %v248
  %266 = vst.msk [vmem:[#allocation2 + $0x28] sm:$0xff] %vm260, %v249
  %267 = vst.msk [vmem:[#allocation2 + $0x30] sm:$0xff] %vm260, %v250
  %268 = vst.msk [vmem:[#allocation2 + $0x38] sm:$0xff] %vm260, %v251
  %269 = vst.msk [vmem:[#allocation2 + $0x40] sm:$0xff] %vm260, %v252
  %270 = vst.msk [vmem:[#allocation2 + $0x48] sm:$0xff] %vm260, %v253
  %271 = vst.msk [vmem:[#allocation2 + $0x50] sm:$0xff] %vm260, %v254
  %272 = vst.msk [vmem:[#allocation2 + $0x58] sm:$0xff] %vm260, %v255
  %273 = vst.msk [vmem:[#allocation2 + $0x60] sm:$0xff] %vm260, %v256
  %274 = vst.msk [vmem:[#allocation2 + $0x68] sm:$0xff] %vm260, %v257
  %275 = vst.msk [vmem:[#allocation2 + $0x70] sm:$0xff] %vm260, %v258
  %276 = vst.msk [vmem:[#allocation2 + $0x78] sm:$0xff] %vm260, %v259
  // Predicated region
  $region26: #{vae_forward.6} parent=0 // pred_check
    %p277 = pneg %p21
  $region27: #{vae_forward.6} parent=0 // pred_check_branch
    %279 = sbr.rel (%p277) target = $region29
  $region28: #{vae_forward.6} parent=0 // pred_region
    %v280 = vld [vmem:[#allocation2] sm:$0xff]
    %v281 = vld [vmem:[#allocation2 + $0x8] sm:$0xff]
    %v282 = vld [vmem:[#allocation2 + $0x10] sm:$0xff]
    %v283 = vld [vmem:[#allocation2 + $0x18] sm:$0xff]
    %v284 = vld [vmem:[#allocation2 + $0x20] sm:$0xff]
    %v285 = vld [vmem:[#allocation2 + $0x28] sm:$0xff]
    %v286 = vld [vmem:[#allocation2 + $0x30] sm:$0xff]
    %v287 = vld [vmem:[#allocation2 + $0x38] sm:$0xff]
    %v288 = vld [vmem:[#allocation2 + $0x40] sm:$0xff]
    %v289 = vld [vmem:[#allocation2 + $0x48] sm:$0xff]
    %v290 = vld [vmem:[#allocation2 + $0x50] sm:$0xff]
    %v291 = vld [vmem:[#allocation2 + $0x58] sm:$0xff]
    %v292 = vld [vmem:[#allocation2 + $0x60] sm:$0xff]
    %v293 = vld [vmem:[#allocation2 + $0x68] sm:$0xff]
    %v294 = vld [vmem:[#allocation2 + $0x70] sm:$0xff]
    %v295 = vld [vmem:[#allocation2 + $0x78] sm:$0xff]
    %v296 = vld [vmem:[%s2] sm:$0x1]
    %v298 = vlaneseq
    %v299 = vshrl.u32 %v298, 7
    %v300 = vsub.s32 0, %v299
    %v301 = vrot.slane %v296, %v300
    %v303 = vadd.f32 %v280, %v301
    %v304 = vadd.f32 %v281, %v301
    %v305 = vadd.f32 %v282, %v301
    %v306 = vadd.f32 %v283, %v301
    %v307 = vadd.f32 %v284, %v301
    %v308 = vadd.f32 %v285, %v301
    %v309 = vadd.f32 %v286, %v301
    %v310 = vadd.f32 %v287, %v301
    %v311 = vadd.f32 %v288, %v301
    %v312 = vadd.f32 %v289, %v301
    %v313 = vadd.f32 %v290, %v301
    %v314 = vadd.f32 %v291, %v301
    %v315 = vadd.f32 %v292, %v301
    %v316 = vadd.f32 %v293, %v301
    %v317 = vadd.f32 %v294, %v301
    %v318 = vadd.f32 %v295, %v301
    %v319 = vmax.f32 %v303, 0.0
    %v320 = vmax.f32 %v304, 0.0
    %v321 = vmax.f32 %v305, 0.0
    %v322 = vmax.f32 %v306, 0.0
    %v323 = vmax.f32 %v307, 0.0
    %v324 = vmax.f32 %v308, 0.0
    %v325 = vmax.f32 %v309, 0.0
    %v326 = vmax.f32 %v310, 0.0
    %v327 = vmax.f32 %v311, 0.0
    %v328 = vmax.f32 %v312, 0.0
    %v329 = vmax.f32 %v313, 0.0
    %v330 = vmax.f32 %v314, 0.0
    %v331 = vmax.f32 %v315, 0.0
    %v332 = vmax.f32 %v316, 0.0
    %v333 = vmax.f32 %v317, 0.0
    %v334 = vmax.f32 %v318, 0.0
    %v335 = vld [vmem:[%s3] sm:$0x1]
    %v337 = vlaneseq
    %v338 = vshrl.u32 %v337, 7
    %v339 = vsub.s32 0, %v338
    %v340 = vrot.slane %v335, %v339
    %v342 = vmul.f32 %v319, %v340
    %v343 = vmul.f32 %v320, %v340
    %v344 = vmul.f32 %v321, %v340
    %v345 = vmul.f32 %v322, %v340
    %v346 = vmul.f32 %v323, %v340
    %v347 = vmul.f32 %v324, %v340
    %v348 = vmul.f32 %v325, %v340
    %v349 = vmul.f32 %v326, %v340
    %v350 = vmul.f32 %v327, %v340
    %v351 = vmul.f32 %v328, %v340
    %v352 = vmul.f32 %v329, %v340
    %v353 = vmul.f32 %v330, %v340
    %v354 = vmul.f32 %v331, %v340
    %v355 = vmul.f32 %v332, %v340
    %v356 = vmul.f32 %v333, %v340
    %v357 = vmul.f32 %v334, %v340
    %v358 = vld [vmem:[%s4] sm:$0x1]
    %v360 = vlaneseq
    %v361 = vshrl.u32 %v360, 7
    %v362 = vsub.s32 0, %v361
    %v363 = vrot.slane %v358, %v362
    %v365 = vadd.f32 %v342, %v363
    %v366 = vadd.f32 %v343, %v363
    %v367 = vadd.f32 %v344, %v363
    %v368 = vadd.f32 %v345, %v363
    %v369 = vadd.f32 %v346, %v363
    %v370 = vadd.f32 %v347, %v363
    %v371 = vadd.f32 %v348, %v363
    %v372 = vadd.f32 %v349, %v363
    %v373 = vadd.f32 %v350, %v363
    %v374 = vadd.f32 %v351, %v363
    %v375 = vadd.f32 %v352, %v363
    %v376 = vadd.f32 %v353, %v363
    %v377 = vadd.f32 %v354, %v363
    %v378 = vadd.f32 %v355, %v363
    %v379 = vadd.f32 %v356, %v363
    %v380 = vadd.f32 %v357, %v363
    %v381 = vpack.c.bf16 %v366, %v365
    %v382 = vpack.c.bf16 %v368, %v367
    %v383 = vpack.c.bf16 %v370, %v369
    %v384 = vpack.c.bf16 %v372, %v371
    %v385 = vpack.c.bf16 %v374, %v373
    %v386 = vpack.c.bf16 %v376, %v375
    %v387 = vpack.c.bf16 %v378, %v377
    %v388 = vpack.c.bf16 %v380, %v379
    %v397 = vunpack.c.l.b16 %v381
    %v398 = vunpack.c.h.b16 %v381
    %v399 = vunpack.c.l.b16 %v382
    %v400 = vunpack.c.h.b16 %v382
    %v401 = vunpack.c.l.b16 %v383
    %v402 = vunpack.c.h.b16 %v383
    %v403 = vunpack.c.l.b16 %v384
    %v404 = vunpack.c.h.b16 %v384
    %v405 = vunpack.c.l.b16 %v385
    %v406 = vunpack.c.h.b16 %v385
    %v407 = vunpack.c.l.b16 %v386
    %v408 = vunpack.c.h.b16 %v386
    %v409 = vunpack.c.l.b16 %v387
    %v410 = vunpack.c.h.b16 %v387
    %v411 = vunpack.c.l.b16 %v388
    %v412 = vunpack.c.h.b16 %v388
    %v413 = vpack.c.b16 %v397, %v397
    %v414 = vpack.c.b16 %v398, %v398
    %v415 = vpack.c.b16 %v399, %v399
    %v416 = vpack.c.b16 %v400, %v400
    %v417 = vpack.c.b16 %v401, %v401
    %v418 = vpack.c.b16 %v402, %v402
    %v419 = vpack.c.b16 %v403, %v403
    %v420 = vpack.c.b16 %v404, %v404
    %v421 = vpack.c.b16 %v405, %v405
    %v422 = vpack.c.b16 %v406, %v406
    %v423 = vpack.c.b16 %v407, %v407
    %v424 = vpack.c.b16 %v408, %v408
    %v425 = vpack.c.b16 %v409, %v409
    %v426 = vpack.c.b16 %v410, %v410
    %v427 = vpack.c.b16 %v411, %v411
    %v428 = vpack.c.b16 %v412, %v412
    %vm445 = vcmask 257024
    %446 = vst.msk [vmem:[%s5] sm:$0xf] %vm445, %v413
    %447 = vst.msk [vmem:[%s5 + $0x4] sm:$0xf] %vm445, %v414
    %448 = vst.msk [vmem:[%s5 + $0x8] sm:$0xf] %vm445, %v415
    %449 = vst.msk [vmem:[%s5 + $0xc] sm:$0xf] %vm445, %v416
    %450 = vst.msk [vmem:[%s5 + $0x10] sm:$0xf] %vm445, %v417
    %451 = vst.msk [vmem:[%s5 + $0x14] sm:$0xf] %vm445, %v418
    %452 = vst.msk [vmem:[%s5 + $0x18] sm:$0xf] %vm445, %v419
    %453 = vst.msk [vmem:[%s5 + $0x1c] sm:$0xf] %vm445, %v420
    %454 = vst.msk [vmem:[%s5 + $0x20] sm:$0xf] %vm445, %v421
    %455 = vst.msk [vmem:[%s5 + $0x24] sm:$0xf] %vm445, %v422
    %456 = vst.msk [vmem:[%s5 + $0x28] sm:$0xf] %vm445, %v423
    %457 = vst.msk [vmem:[%s5 + $0x2c] sm:$0xf] %vm445, %v424
    %458 = vst.msk [vmem:[%s5 + $0x30] sm:$0xf] %vm445, %v425
    %459 = vst.msk [vmem:[%s5 + $0x34] sm:$0xf] %vm445, %v426
    %460 = vst.msk [vmem:[%s5 + $0x38] sm:$0xf] %vm445, %v427
    %461 = vst.msk [vmem:[%s5 + $0x3c] sm:$0xf] %vm445, %v428
  $region29: #{vae_forward.6} parent=0 // pred_fallthru
    _
  // Predicated region
  $region30: #{vae_forward.6} parent=0 // pred_check
    _
  $region31: #{vae_forward.6} parent=0 // pred_check_branch
    %463 = sbr.rel (0) target = $region33
  $region32: #{vae_forward.6} parent=0 // pred_region
    _
  $region33: #{vae_forward.6} parent=0 // pred_fallthru
    _
  // Predicated region
  $region34: #{vae_forward.6} parent=0 // pred_check
    _
  $region35: #{vae_forward.6} parent=0 // pred_check_branch
    %465 = sbr.rel (0) target = $region37
  $region36: #{vae_forward.6} parent=0 // pred_region
    _
  $region37: #{vae_forward.6} parent=0 // pred_fallthru
    _

// kernel: vae_forward.7
$region0: #{vae_forward.7}
  #allocation0 [shape = 'u32[]', space=smem, size = 0x4, offset = 0x4, fixed_abs, tag = 'smem constant byte address 0x4 - core index']
  #allocation1 [shape = 'u32[144,128]{1,0:T(1,128)}', space=vmem, size = 0x12000, scoped, tag = 'internal scratch']
  #allocation2 [shape = 'f32[32,64]{1,0:T(8,128)}', space=vmem, size = 0x4000, scoped, tag = 'scratch operand']
  %s0 = inlined_call_operand.vmem [shape: bf16[32,512], index: 0, kind: input, shape index: {}]
  %s1 = inlined_call_operand.vmem [shape: bf16[512,64], index: 1, kind: input, shape index: {}]
  %s2 = inlined_call_operand.vmem [shape: f32[1,64], index: 2, kind: input, shape index: {}]
  %s3 = inlined_call_operand.vmem [shape: f32[1,64], index: 3, kind: input, shape index: {}]
  %s4 = inlined_call_operand.vmem [shape: f32[1,64], index: 4, kind: input, shape index: {}]
  %s5 = inlined_call_operand.vmem [shape: bf16[32,64], index: 5, kind: output, shape index: {}]
  %s6 = sld [smem:[#allocation0]]
  $region38: #{vae_forward.7} parent=0
    _
  %s8 = ssub.s32 1, %s6
  %s9 = scalar_select 0, %s8, %s6
  // Predicated region
  $region2: #{vae_forward.7} parent=0 // pred_check
    _
  $region3: #{vae_forward.7} parent=0 // pred_check_branch
    %11 = sbr.rel (0) target = $region5
  $region4: #{vae_forward.7} parent=0 // pred_region
    _
  $region5: #{vae_forward.7} parent=0 // pred_fallthru
    _
  // Predicated region
  $region6: #{vae_forward.7} parent=0 // pred_check
    _
  $region7: #{vae_forward.7} parent=0 // pred_check_branch
    %13 = sbr.rel (0) target = $region9
  $region8: #{vae_forward.7} parent=0 // pred_region
    _
  $region9: #{vae_forward.7} parent=0 // pred_fallthru
    _
  // Predicated region
  $region10: #{vae_forward.7} parent=0 // pred_check
    _
  $region11: #{vae_forward.7} parent=0 // pred_check_branch
    %15 = sbr.rel (0) target = $region13
  $region12: #{vae_forward.7} parent=0 // pred_region
    _
  $region13: #{vae_forward.7} parent=0 // pred_fallthru
    _
  // Predicated region
  $region14: #{vae_forward.7} parent=0 // pred_check
    _
  $region15: #{vae_forward.7} parent=0 // pred_check_branch
    %17 = sbr.rel (0) target = $region17
  $region16: #{vae_forward.7} parent=0 // pred_region
    _
  $region17: #{vae_forward.7} parent=0 // pred_fallthru
    _
  // Predicated region
  $region18: #{vae_forward.7} parent=0 // pred_check
    _
  $region19: #{vae_forward.7} parent=0 // pred_check_branch
    %19 = sbr.rel (0) target = $region21
  $region20: #{vae_forward.7} parent=0 // pred_region
    _
  $region21: #{vae_forward.7} parent=0 // pred_fallthru
    _
  %p21 = scmp.eq.s32.totalorder 0, 0
  // Predicated region
  $region22: #{vae_forward.7} parent=0 // pred_check
    %p22 = pneg %p21
  $region23: #{vae_forward.7} parent=0 // pred_check_branch
    %24 = sbr.rel (%p22) target = $region25
  $region24: #{vae_forward.7} parent=0 // pred_region
    %vm25 = vcmask 523264
    %26 = vst.msk [vmem:[#allocation2] sm:$0xff] %vm25, 0.0
    %27 = vst.msk [vmem:[#allocation2 + $0x8] sm:$0xff] %vm25, 0.0
    %28 = vst.msk [vmem:[#allocation2 + $0x10] sm:$0xff] %vm25, 0.0
    %29 = vst.msk [vmem:[#allocation2 + $0x18] sm:$0xff] %vm25, 0.0
  $region25: #{vae_forward.7} parent=0 // pred_fallthru
    _
  %v30 = vld [vmem:[#allocation2] sm:$0xff]
  %v31 = vld [vmem:[#allocation2 + $0x8] sm:$0xff]
  %v32 = vld [vmem:[#allocation2 + $0x10] sm:$0xff]
  %v33 = vld [vmem:[#allocation2 + $0x18] sm:$0xff]
  %v34 = vld [vmem:[%s0] sm:$0xff]
  %v35 = vld [vmem:[%s0 + $0x8] sm:$0xff]
  %v36 = vld [vmem:[%s0 + $0x10] sm:$0xff]
  %v37 = vld [vmem:[%s0 + $0x18] sm:$0xff]
  %v38 = vld [vmem:[%s0 + $0x20] sm:$0xff]
  %v39 = vld [vmem:[%s0 + $0x28] sm:$0xff]
  %v40 = vld [vmem:[%s0 + $0x30] sm:$0xff]
  %v41 = vld [vmem:[%s0 + $0x38] sm:$0xff]
  %v42 = vld [vmem:[%s1] sm:$0xf]
  %v43 = vld [vmem:[%s1 + $0x4] sm:$0xf]
  %v44 = vld [vmem:[%s1 + $0x8] sm:$0xf]
  %v45 = vld [vmem:[%s1 + $0xc] sm:$0xf]
  %v46 = vld [vmem:[%s1 + $0x10] sm:$0xf]
  %v47 = vld [vmem:[%s1 + $0x14] sm:$0xf]
  %v48 = vld [vmem:[%s1 + $0x18] sm:$0xf]
  %v49 = vld [vmem:[%s1 + $0x1c] sm:$0xf]
  %v50 = vld [vmem:[%s1 + $0x20] sm:$0xf]
  %v51 = vld [vmem:[%s1 + $0x24] sm:$0xf]
  %v52 = vld [vmem:[%s1 + $0x28] sm:$0xf]
  %v53 = vld [vmem:[%s1 + $0x2c] sm:$0xf]
  %v54 = vld [vmem:[%s1 + $0x30] sm:$0xf]
  %v55 = vld [vmem:[%s1 + $0x34] sm:$0xf]
  %v56 = vld [vmem:[%s1 + $0x38] sm:$0xf]
  %v57 = vld [vmem:[%s1 + $0x3c] sm:$0xf]
  %v58 = vld [vmem:[%s1 + $0x40] sm:$0xf]
  %v59 = vld [vmem:[%s1 + $0x44] sm:$0xf]
  %v60 = vld [vmem:[%s1 + $0x48] sm:$0xf]
  %v61 = vld [vmem:[%s1 + $0x4c] sm:$0xf]
  %v62 = vld [vmem:[%s1 + $0x50] sm:$0xf]
  %v63 = vld [vmem:[%s1 + $0x54] sm:$0xf]
  %v64 = vld [vmem:[%s1 + $0x58] sm:$0xf]
  %v65 = vld [vmem:[%s1 + $0x5c] sm:$0xf]
  %v66 = vld [vmem:[%s1 + $0x60] sm:$0xf]
  %v67 = vld [vmem:[%s1 + $0x64] sm:$0xf]
  %v68 = vld [vmem:[%s1 + $0x68] sm:$0xf]
  %v69 = vld [vmem:[%s1 + $0x6c] sm:$0xf]
  %v70 = vld [vmem:[%s1 + $0x70] sm:$0xf]
  %v71 = vld [vmem:[%s1 + $0x74] sm:$0xf]
  %v72 = vld [vmem:[%s1 + $0x78] sm:$0xf]
  %v73 = vld [vmem:[%s1 + $0x7c] sm:$0xf]
  %v74 = vld [vmem:[%s1 + $0x80] sm:$0xf]
  %v75 = vld [vmem:[%s1 + $0x84] sm:$0xf]
  %v76 = vld [vmem:[%s1 + $0x88] sm:$0xf]
  %v77 = vld [vmem:[%s1 + $0x8c] sm:$0xf]
  %v78 = vld [vmem:[%s1 + $0x90] sm:$0xf]
  %v79 = vld [vmem:[%s1 + $0x94] sm:$0xf]
  %v80 = vld [vmem:[%s1 + $0x98] sm:$0xf]
  %v81 = vld [vmem:[%s1 + $0x9c] sm:$0xf]
  %v82 = vld [vmem:[%s1 + $0xa0] sm:$0xf]
  %v83 = vld [vmem:[%s1 + $0xa4] sm:$0xf]
  %v84 = vld [vmem:[%s1 + $0xa8] sm:$0xf]
  %v85 = vld [vmem:[%s1 + $0xac] sm:$0xf]
  %v86 = vld [vmem:[%s1 + $0xb0] sm:$0xf]
  %v87 = vld [vmem:[%s1 + $0xb4] sm:$0xf]
  %v88 = vld [vmem:[%s1 + $0xb8] sm:$0xf]
  %v89 = vld [vmem:[%s1 + $0xbc] sm:$0xf]
  %v90 = vld [vmem:[%s1 + $0xc0] sm:$0xf]
  %v91 = vld [vmem:[%s1 + $0xc4] sm:$0xf]
  %v92 = vld [vmem:[%s1 + $0xc8] sm:$0xf]
  %v93 = vld [vmem:[%s1 + $0xcc] sm:$0xf]
  %v94 = vld [vmem:[%s1 + $0xd0] sm:$0xf]
  %v95 = vld [vmem:[%s1 + $0xd4] sm:$0xf]
  %v96 = vld [vmem:[%s1 + $0xd8] sm:$0xf]
  %v97 = vld [vmem:[%s1 + $0xdc] sm:$0xf]
  %v98 = vld [vmem:[%s1 + $0xe0] sm:$0xf]
  %v99 = vld [vmem:[%s1 + $0xe4] sm:$0xf]
  %v100 = vld [vmem:[%s1 + $0xe8] sm:$0xf]
  %v101 = vld [vmem:[%s1 + $0xec] sm:$0xf]
  %v102 = vld [vmem:[%s1 + $0xf0] sm:$0xf]
  %v103 = vld [vmem:[%s1 + $0xf4] sm:$0xf]
  %v104 = vld [vmem:[%s1 + $0xf8] sm:$0xf]
  %v105 = vld [vmem:[%s1 + $0xfc] sm:$0xf]
  %v114 = vunpack.c.l.b16 %v34
  %v115 = vunpack.c.h.b16 %v34
  %v116 = vunpack.c.l.b16 %v35
  %v117 = vunpack.c.h.b16 %v35
  %v118 = vunpack.c.l.b16 %v36
  %v119 = vunpack.c.h.b16 %v36
  %v120 = vunpack.c.l.b16 %v37
  %v121 = vunpack.c.h.b16 %v37
  %v122 = vunpack.c.l.b16 %v38
  %v123 = vunpack.c.h.b16 %v38
  %v124 = vunpack.c.l.b16 %v39
  %v125 = vunpack.c.h.b16 %v39
  %v126 = vunpack.c.l.b16 %v40
  %v127 = vunpack.c.h.b16 %v40
  %v128 = vunpack.c.l.b16 %v41
  %v129 = vunpack.c.h.b16 %v41
  %v130 = vpack.c.b16 %v118, %v114
  %v131 = vpack.c.b16 %v119, %v115
  %v132 = vpack.c.b16 %v120, %v116
  %v133 = vpack.c.b16 %v121, %v117
  %v134 = vpack.c.b16 %v126, %v122
  %v135 = vpack.c.b16 %v127, %v123
  %v136 = vpack.c.b16 %v128, %v124
  %v137 = vpack.c.b16 %v129, %v125
  %v210 = vunpack.c.l.b16 %v42
  %v211 = vunpack.c.l.b16 %v43
  %v212 = vunpack.c.l.b16 %v44
  %v213 = vunpack.c.l.b16 %v45
  %v214 = vunpack.c.l.b16 %v46
  %v215 = vunpack.c.l.b16 %v47
  %v216 = vunpack.c.l.b16 %v48
  %v217 = vunpack.c.l.b16 %v49
  %v218 = vunpack.c.l.b16 %v50
  %v219 = vunpack.c.l.b16 %v51
  %v220 = vunpack.c.l.b16 %v52
  %v221 = vunpack.c.l.b16 %v53
  %v222 = vunpack.c.l.b16 %v54
  %v223 = vunpack.c.l.b16 %v55
  %v224 = vunpack.c.l.b16 %v56
  %v225 = vunpack.c.l.b16 %v57
  %v226 = vunpack.c.l.b16 %v58
  %v227 = vunpack.c.l.b16 %v59
  %v228 = vunpack.c.l.b16 %v60
  %v229 = vunpack.c.l.b16 %v61
  %v230 = vunpack.c.l.b16 %v62
  %v231 = vunpack.c.l.b16 %v63
  %v232 = vunpack.c.l.b16 %v64
  %v233 = vunpack.c.l.b16 %v65
  %v234 = vunpack.c.l.b16 %v66
  %v235 = vunpack.c.l.b16 %v67
  %v236 = vunpack.c.l.b16 %v68
  %v237 = vunpack.c.l.b16 %v69
  %v238 = vunpack.c.l.b16 %v70
  %v239 = vunpack.c.l.b16 %v71
  %v240 = vunpack.c.l.b16 %v72
  %v241 = vunpack.c.l.b16 %v73
  %v242 = vunpack.c.l.b16 %v74
  %v243 = vunpack.c.l.b16 %v75
  %v244 = vunpack.c.l.b16 %v76
  %v245 = vunpack.c.l.b16 %v77
  %v246 = vunpack.c.l.b16 %v78
  %v247 = vunpack.c.l.b16 %v79
  %v248 = vunpack.c.l.b16 %v80
  %v249 = vunpack.c.l.b16 %v81
  %v250 = vunpack.c.l.b16 %v82
  %v251 = vunpack.c.l.b16 %v83
  %v252 = vunpack.c.l.b16 %v84
  %v253 = vunpack.c.l.b16 %v85
  %v254 = vunpack.c.l.b16 %v86
  %v255 = vunpack.c.l.b16 %v87
  %v256 = vunpack.c.l.b16 %v88
  %v257 = vunpack.c.l.b16 %v89
  %v258 = vunpack.c.l.b16 %v90
  %v259 = vunpack.c.l.b16 %v91
  %v260 = vunpack.c.l.b16 %v92
  %v261 = vunpack.c.l.b16 %v93
  %v262 = vunpack.c.l.b16 %v94
  %v263 = vunpack.c.l.b16 %v95
  %v264 = vunpack.c.l.b16 %v96
  %v265 = vunpack.c.l.b16 %v97
  %v266 = vunpack.c.l.b16 %v98
  %v267 = vunpack.c.l.b16 %v99
  %v268 = vunpack.c.l.b16 %v100
  %v269 = vunpack.c.l.b16 %v101
  %v270 = vunpack.c.l.b16 %v102
  %v271 = vunpack.c.l.b16 %v103
  %v272 = vunpack.c.l.b16 %v104
  %v273 = vunpack.c.l.b16 %v105
  %v274 = vpack.c.b16 %v211, %v210
  %v275 = vpack.c.b16 %v213, %v212
  %v276 = vpack.c.b16 %v215, %v214
  %v277 = vpack.c.b16 %v217, %v216
  %v278 = vpack.c.b16 %v219, %v218
  %v279 = vpack.c.b16 %v221, %v220
  %v280 = vpack.c.b16 %v223, %v222
  %v281 = vpack.c.b16 %v225, %v224
  %v282 = vpack.c.b16 %v227, %v226
  %v283 = vpack.c.b16 %v229, %v228
  %v284 = vpack.c.b16 %v231, %v230
  %v285 = vpack.c.b16 %v233, %v232
  %v286 = vpack.c.b16 %v235, %v234
  %v287 = vpack.c.b16 %v237, %v236
  %v288 = vpack.c.b16 %v239, %v238
  %v289 = vpack.c.b16 %v241, %v240
  %v290 = vpack.c.b16 %v243, %v242
  %v291 = vpack.c.b16 %v245, %v244
  %v292 = vpack.c.b16 %v247, %v246
  %v293 = vpack.c.b16 %v249, %v248
  %v294 = vpack.c.b16 %v251, %v250
  %v295 = vpack.c.b16 %v253, %v252
  %v296 = vpack.c.b16 %v255, %v254
  %v297 = vpack.c.b16 %v257, %v256
  %v298 = vpack.c.b16 %v259, %v258
  %v299 = vpack.c.b16 %v261, %v260
  %v300 = vpack.c.b16 %v263, %v262
  %v301 = vpack.c.b16 %v265, %v264
  %v302 = vpack.c.b16 %v267, %v266
  %v303 = vpack.c.b16 %v269, %v268
  %v304 = vpack.c.b16 %v271, %v270
  %v305 = vpack.c.b16 %v273, %v272
  %338 = vmatprep.subr.bf16.mxu0 0
  %339 = vmatpush1.bf16.msra.mxu0 %v281
  %340 = vmatprep.subr.bf16.mxu0 0
  %341 = vmatpush1.bf16.msra.mxu0 %v280
  %342 = vmatprep.subr.bf16.mxu0 0
  %343 = vmatpush1.bf16.msra.mxu0 %v279
  %344 = vmatprep.subr.bf16.mxu0 0
  %345 = vmatpush1.bf16.msra.mxu0 %v278
  %346 = vmatprep.subr.bf16.mxu0 0
  %347 = vmatpush1.bf16.msra.mxu0 %v277
  %348 = vmatprep.subr.bf16.mxu0 0
  %349 = vmatpush1.bf16.msra.mxu0 %v276
  %350 = vmatprep.subr.bf16.mxu0 0
  %351 = vmatpush1.bf16.msra.mxu0 %v275
  %352 = vmatprep.subr.bf16.mxu0 0
  %353 = vmatpush1.bf16.msra.mxu0 %v274
  %354 = vmatprep.subr.bf16.mxu0 0
  %355 = vmatpush2.bf16.msra.mxu0 %v289
  %356 = vmatprep.subr.bf16.mxu0 0
  %357 = vmatpush2.bf16.msra.mxu0 %v288
  %358 = vmatprep.subr.bf16.mxu0 0
  %359 = vmatpush2.bf16.msra.mxu0 %v287
  %360 = vmatprep.subr.bf16.mxu0 0
  %361 = vmatpush2.bf16.msra.mxu0 %v286
  %362 = vmatprep.subr.bf16.mxu0 0
  %363 = vmatpush2.bf16.msra.mxu0 %v285
  %364 = vmatprep.subr.bf16.mxu0 0
  %365 = vmatpush2.bf16.msra.mxu0 %v284
  %366 = vmatprep.subr.bf16.mxu0 0
  %367 = vmatpush2.bf16.msra.mxu0 %v283
  %368 = vmatprep.subr.bf16.mxu0 0
  %369 = vmatpush2.bf16.msra.mxu0 %v282
  %370 = vmatprep.mubr.bf16.mxu0 %v131
  %371 = vmatmul.mubr.bf16.gmra.mxu0 %v130
  %v372 = vpop.f32.mrf.mxu0
  %v373 = vadd.f32 0.0, %v372
  %v374 = vpop.f32.mrf.mxu0
  %v375 = vpop.f32.mrf.mxu0
  %v376 = vadd.f32 0.0, %v375
  %v377 = vpop.f32.mrf.mxu0
  %378 = vmatprep.mubr.bf16.mxu0 %v135
  %379 = vmatmul.mubr.bf16.gmra.mxu0 %v134
  %v380 = vpop.f32.mrf.mxu0
  %v381 = vadd.f32 0.0, %v380
  %v382 = vpop.f32.mrf.mxu0
  %v383 = vpop.f32.mrf.mxu0
  %v384 = vadd.f32 0.0, %v383
  %v385 = vpop.f32.mrf.mxu0
  %386 = vdwg.mxu0
  %387 = vmatprep.subr.bf16.mxu0 0
  %388 = vmatpush1.bf16.msra.mxu0 %v297
  %389 = vmatprep.subr.bf16.mxu0 0
  %390 = vmatpush1.bf16.msra.mxu0 %v296
  %391 = vmatprep.subr.bf16.mxu0 0
  %392 = vmatpush1.bf16.msra.mxu0 %v295
  %393 = vmatprep.subr.bf16.mxu0 0
  %394 = vmatpush1.bf16.msra.mxu0 %v294
  %395 = vmatprep.subr.bf16.mxu0 0
  %396 = vmatpush1.bf16.msra.mxu0 %v293
  %397 = vmatprep.subr.bf16.mxu0 0
  %398 = vmatpush1.bf16.msra.mxu0 %v292
  %399 = vmatprep.subr.bf16.mxu0 0
  %400 = vmatpush1.bf16.msra.mxu0 %v291
  %401 = vmatprep.subr.bf16.mxu0 0
  %402 = vmatpush1.bf16.msra.mxu0 %v290
  %403 = vmatprep.subr.bf16.mxu0 0
  %404 = vmatpush2.bf16.msra.mxu0 %v305
  %405 = vmatprep.subr.bf16.mxu0 0
  %406 = vmatpush2.bf16.msra.mxu0 %v304
  %407 = vmatprep.subr.bf16.mxu0 0
  %408 = vmatpush2.bf16.msra.mxu0 %v303
  %409 = vmatprep.subr.bf16.mxu0 0
  %410 = vmatpush2.bf16.msra.mxu0 %v302
  %411 = vmatprep.subr.bf16.mxu0 0
  %412 = vmatpush2.bf16.msra.mxu0 %v301
  %413 = vmatprep.subr.bf16.mxu0 0
  %414 = vmatpush2.bf16.msra.mxu0 %v300
  %415 = vmatprep.subr.bf16.mxu0 0
  %416 = vmatpush2.bf16.msra.mxu0 %v299
  %417 = vmatprep.subr.bf16.mxu0 0
  %418 = vmatpush2.bf16.msra.mxu0 %v298
  %419 = vmatprep.mubr.bf16.mxu0 %v133
  %420 = vmatmul.mubr.bf16.gmra.mxu0 %v132
  %v421 = vpop.f32.mrf.mxu0
  %v422 = vadd.f32 %v373, %v421
  %v423 = vpop.f32.mrf.mxu0
  %v424 = vpop.f32.mrf.mxu0
  %v425 = vadd.f32 %v376, %v424
  %v426 = vpop.f32.mrf.mxu0
  %427 = vmatprep.mubr.bf16.mxu0 %v137
  %428 = vmatmul.mubr.bf16.gmra.mxu0 %v136
  %v429 = vpop.f32.mrf.mxu0
  %v430 = vadd.f32 %v381, %v429
  %v431 = vpop.f32.mrf.mxu0
  %v432 = vpop.f32.mrf.mxu0
  %v433 = vadd.f32 %v384, %v432
  %v434 = vpop.f32.mrf.mxu0
  %435 = vdwg.mxu0
  %v436 = vadd.f32 %v30, %v422
  %v437 = vadd.f32 %v31, %v425
  %v438 = vadd.f32 %v32, %v430
  %v439 = vadd.f32 %v33, %v433
  %vm440 = vcmask 523264
  %441 = vst.msk [vmem:[#allocation2] sm:$0xff] %vm440, %v436
  %442 = vst.msk [vmem:[#allocation2 + $0x8] sm:$0xff] %vm440, %v437
  %443 = vst.msk [vmem:[#allocation2 + $0x10] sm:$0xff] %vm440, %v438
  %444 = vst.msk [vmem:[#allocation2 + $0x18] sm:$0xff] %vm440, %v439
  // Predicated region
  $region26: #{vae_forward.7} parent=0 // pred_check
    %p445 = pneg %p21
  $region27: #{vae_forward.7} parent=0 // pred_check_branch
    %447 = sbr.rel (%p445) target = $region29
  $region28: #{vae_forward.7} parent=0 // pred_region
    %v448 = vld [vmem:[#allocation2] sm:$0xff]
    %v449 = vld [vmem:[#allocation2 + $0x8] sm:$0xff]
    %v450 = vld [vmem:[#allocation2 + $0x10] sm:$0xff]
    %v451 = vld [vmem:[#allocation2 + $0x18] sm:$0xff]
    %v452 = vld [vmem:[%s2] sm:$0x1]
    %v454 = vlaneseq
    %v455 = vshrl.u32 %v454, 7
    %v456 = vsub.s32 0, %v455
    %v457 = vrot.slane %v452, %v456
    %v459 = vadd.f32 %v448, %v457
    %v460 = vadd.f32 %v449, %v457
    %v461 = vadd.f32 %v450, %v457
    %v462 = vadd.f32 %v451, %v457
    %v463 = vmax.f32 %v459, 0.0
    %v464 = vmax.f32 %v460, 0.0
    %v465 = vmax.f32 %v461, 0.0
    %v466 = vmax.f32 %v462, 0.0
    %v467 = vld [vmem:[%s3] sm:$0x1]
    %v469 = vlaneseq
    %v470 = vshrl.u32 %v469, 7
    %v471 = vsub.s32 0, %v470
    %v472 = vrot.slane %v467, %v471
    %v474 = vmul.f32 %v463, %v472
    %v475 = vmul.f32 %v464, %v472
    %v476 = vmul.f32 %v465, %v472
    %v477 = vmul.f32 %v466, %v472
    %v478 = vld [vmem:[%s4] sm:$0x1]
    %v480 = vlaneseq
    %v481 = vshrl.u32 %v480, 7
    %v482 = vsub.s32 0, %v481
    %v483 = vrot.slane %v478, %v482
    %v485 = vadd.f32 %v474, %v483
    %v486 = vadd.f32 %v475, %v483
    %v487 = vadd.f32 %v476, %v483
    %v488 = vadd.f32 %v477, %v483
    %v489 = vpack.c.bf16 %v486, %v485
    %v490 = vpack.c.bf16 %v488, %v487
    %v493 = vunpack.c.l.b16 %v489
    %v494 = vunpack.c.h.b16 %v489
    %v495 = vunpack.c.l.b16 %v490
    %v496 = vunpack.c.h.b16 %v490
    %v497 = vpack.c.b16 %v493, %v493
    %v498 = vpack.c.b16 %v494, %v494
    %v499 = vpack.c.b16 %v495, %v495
    %v500 = vpack.c.b16 %v496, %v496
    %vm505 = vcmask 519168
    %506 = vst.msk [vmem:[%s5] sm:$0xf] %vm505, %v497
    %507 = vst.msk [vmem:[%s5 + $0x4] sm:$0xf] %vm505, %v498
    %508 = vst.msk [vmem:[%s5 + $0x8] sm:$0xf] %vm505, %v499
    %509 = vst.msk [vmem:[%s5 + $0xc] sm:$0xf] %vm505, %v500
  $region29: #{vae_forward.7} parent=0 // pred_fallthru
    _
  // Predicated region
  $region30: #{vae_forward.7} parent=0 // pred_check
    _
  $region31: #{vae_forward.7} parent=0 // pred_check_branch
    %511 = sbr.rel (0) target = $region33
  $region32: #{vae_forward.7} parent=0 // pred_region
    _
  $region33: #{vae_forward.7} parent=0 // pred_fallthru
    _
  // Predicated region
  $region34: #{vae_forward.7} parent=0 // pred_check
    _
  $region35: #{vae_forward.7} parent=0 // pred_check_branch
    %513 = sbr.rel (0) target = $region37
  $region36: #{vae_forward.7} parent=0 // pred_region
    _
  $region37: #{vae_forward.7} parent=0 // pred_fallthru
    _

// kernel: vae_forward.9
$region0: #{vae_forward.9}
  #allocation0 [shape = 'u32[]', space=smem, size = 0x4, offset = 0x4, fixed_abs, tag = 'smem constant byte address 0x4 - core index']
  #allocation1 [shape = 'u32[144,128]{1,0:T(1,128)}', space=vmem, size = 0x12000, scoped, tag = 'internal scratch']
  #allocation2 [shape = 'f32[2,1024]{1,0:T(2,128)}', space=vmem, size = 0x2000, scoped, tag = 'scratch operand']
  %s0 = inlined_call_operand.vmem [shape: bf16[2,10], index: 0, kind: input, shape index: {}]
  %s1 = inlined_call_operand.vmem [shape: bf16[10,1024], index: 1, kind: input, shape index: {}]
  %s2 = inlined_call_operand.vmem [shape: f32[1,1024], index: 2, kind: input, shape index: {}]
  %s3 = inlined_call_operand.vmem [shape: bf16[2,1024], index: 3, kind: output, shape index: {}]
  %s4 = sld [smem:[#allocation0]]
  $region30: #{vae_forward.9} parent=0
    _
  %s6 = ssub.s32 1, %s4
  %s7 = scalar_select 0, %s6, %s4
  // Predicated region
  $region2: #{vae_forward.9} parent=0 // pred_check
    _
  $region3: #{vae_forward.9} parent=0 // pred_check_branch
    %9 = sbr.rel (0) target = $region5
  $region4: #{vae_forward.9} parent=0 // pred_region
    _
  $region5: #{vae_forward.9} parent=0 // pred_fallthru
    _
  // Predicated region
  $region6: #{vae_forward.9} parent=0 // pred_check
    _
  $region7: #{vae_forward.9} parent=0 // pred_check_branch
    %11 = sbr.rel (0) target = $region9
  $region8: #{vae_forward.9} parent=0 // pred_region
    _
  $region9: #{vae_forward.9} parent=0 // pred_fallthru
    _
  // Predicated region
  $region10: #{vae_forward.9} parent=0 // pred_check
    _
  $region11: #{vae_forward.9} parent=0 // pred_check_branch
    %13 = sbr.rel (0) target = $region13
  $region12: #{vae_forward.9} parent=0 // pred_region
    _
  $region13: #{vae_forward.9} parent=0 // pred_fallthru
    _
  %p15 = scmp.eq.s32.totalorder 0, 0
  // Predicated region
  $region14: #{vae_forward.9} parent=0 // pred_check
    %p16 = pneg %p15
  $region15: #{vae_forward.9} parent=0 // pred_check_branch
    %18 = sbr.rel (%p16) target = $region17
  $region16: #{vae_forward.9} parent=0 // pred_region
    %19 = vst [vmem:[#allocation2] sm:$0xff] 0.0
    %20 = vst [vmem:[#allocation2 + $0x8] sm:$0xff] 0.0
  $region17: #{vae_forward.9} parent=0 // pred_fallthru
    _
  %v21 = vld [vmem:[#allocation2] sm:$0xff]
  %v22 = vld [vmem:[#allocation2 + $0x8] sm:$0xff]
  %v23 = vld [vmem:[%s0] sm:$0x1]
  %v24 = vld [vmem:[%s1] sm:$0xff]
  %v25 = vld [vmem:[%s1 + $0x8] sm:$0xff]
  %v26 = vld [vmem:[%s1 + $0x10] sm:$0xff]
  %v27 = vld [vmem:[%s1 + $0x18] sm:$0xff]
  %v28 = vld [vmem:[%s1 + $0x20] sm:$0x11]
  %v29 = vld [vmem:[%s1 + $0x28] sm:$0x11]
  %v30 = vld [vmem:[%s1 + $0x30] sm:$0x11]
  %v31 = vld [vmem:[%s1 + $0x38] sm:$0x11]
  %v40 = vunpack.c.l.b16 %v24
  %v41 = vunpack.c.h.b16 %v24
  %v42 = vunpack.c.l.b16 %v25
  %v43 = vunpack.c.h.b16 %v25
  %v44 = vunpack.c.l.b16 %v26
  %v45 = vunpack.c.h.b16 %v26
  %v46 = vunpack.c.l.b16 %v27
  %v47 = vunpack.c.h.b16 %v27
  %v48 = vunpack.c.l.b16 %v28
  %v49 = vunpack.c.h.b16 %v28
  %v50 = vunpack.c.l.b16 %v29
  %v51 = vunpack.c.h.b16 %v29
  %v52 = vunpack.c.l.b16 %v30
  %v53 = vunpack.c.h.b16 %v30
  %v54 = vunpack.c.l.b16 %v31
  %v55 = vunpack.c.h.b16 %v31
  %v56 = vpack.c.b16 %v48, %v40
  %v57 = vpack.c.b16 %v49, %v41
  %v58 = vpack.c.b16 %v50, %v42
  %v59 = vpack.c.b16 %v51, %v43
  %v60 = vpack.c.b16 %v52, %v44
  %v61 = vpack.c.b16 %v53, %v45
  %v62 = vpack.c.b16 %v54, %v46
  %v63 = vpack.c.b16 %v55, %v47
  %vm64 = vcmask 80896
  %v66 = vsel %vm64, %v23, 0
  %vm68 = vcmask 1044480
  %v70 = vsel %vm68, %v56, 0
  %v73 = vsel %vm68, %v57, 0
  %v76 = vsel %vm68, %v58, 0
  %v79 = vsel %vm68, %v59, 0
  %v82 = vsel %vm68, %v60, 0
  %v85 = vsel %vm68, %v61, 0
  %v88 = vsel %vm68, %v62, 0
  %v91 = vsel %vm68, %v63, 0
  %93 = vmatprep.subr.bf16.mxu0 0
  %94 = vmatpush1.bf16.msra.mxu0 0
  %95 = vmatprep.subr.bf16.mxu0 0
  %96 = vmatpush1.bf16.msra.mxu0 0
  %97 = vmatprep.subr.bf16.mxu0 0
  %98 = vmatpush1.bf16.msra.mxu0 0
  %99 = vmatprep.subr.bf16.mxu0 0
  %100 = vmatpush1.bf16.msra.mxu0 0
  %101 = vmatprep.subr.bf16.mxu0 0
  %102 = vmatpush1.bf16.msra.mxu0 0
  %103 = vmatprep.subr.bf16.mxu0 0
  %104 = vmatpush1.bf16.msra.mxu0 0
  %105 = vmatprep.subr.bf16.mxu0 0
  %106 = vmatpush1.bf16.msra.mxu0 0
  %107 = vmatprep.subr.bf16.mxu0 %v73
  %108 = vmatpush1.bf16.msra.mxu0 %v70
  %109 = vmatprep.subr.bf16.mxu0 0
  %110 = vmatpush2.bf16.msra.mxu0 0
  %111 = vmatprep.subr.bf16.mxu0 0
  %112 = vmatpush2.bf16.msra.mxu0 0
  %113 = vmatprep.subr.bf16.mxu0 0
  %114 = vmatpush2.bf16.msra.mxu0 0
  %115 = vmatprep.subr.bf16.mxu0 0
  %116 = vmatpush2.bf16.msra.mxu0 0
  %117 = vmatprep.subr.bf16.mxu0 0
  %118 = vmatpush2.bf16.msra.mxu0 0
  %119 = vmatprep.subr.bf16.mxu0 0
  %120 = vmatpush2.bf16.msra.mxu0 0
  %121 = vmatprep.subr.bf16.mxu0 0
  %122 = vmatpush2.bf16.msra.mxu0 0
  %123 = vmatprep.subr.bf16.mxu0 0
  %124 = vmatpush2.bf16.msra.mxu0 0
  %125 = vmatprep.mubr.bf16.mxu0 0
  %126 = vmatmul.mubr.bf16.gmra.mxu0 %v66
  %v127 = vpop.f32.mrf.mxu0
  %v128 = vadd.f32 0.0, %v127
  %v129 = vpop.f32.mrf.mxu0
  %v130 = vadd.f32 0.0, %v129
  %v131 = vpop.f32.mrf.mxu0
  %v132 = vpop.f32.mrf.mxu0
  %133 = vdwg.mxu0
  %134 = vmatprep.subr.bf16.mxu0 0
  %135 = vmatpush1.bf16.msra.mxu0 0
  %136 = vmatprep.subr.bf16.mxu0 0
  %137 = vmatpush1.bf16.msra.mxu0 0
  %138 = vmatprep.subr.bf16.mxu0 0
  %139 = vmatpush1.bf16.msra.mxu0 0
  %140 = vmatprep.subr.bf16.mxu0 0
  %141 = vmatpush1.bf16.msra.mxu0 0
  %142 = vmatprep.subr.bf16.mxu0 0
  %143 = vmatpush1.bf16.msra.mxu0 0
  %144 = vmatprep.subr.bf16.mxu0 0
  %145 = vmatpush1.bf16.msra.mxu0 0
  %146 = vmatprep.subr.bf16.mxu0 0
  %147 = vmatpush1.bf16.msra.mxu0 0
  %148 = vmatprep.subr.bf16.mxu0 %v79
  %149 = vmatpush1.bf16.msra.mxu0 %v76
  %150 = vmatprep.subr.bf16.mxu0 0
  %151 = vmatpush2.bf16.msra.mxu0 0
  %152 = vmatprep.subr.bf16.mxu0 0
  %153 = vmatpush2.bf16.msra.mxu0 0
  %154 = vmatprep.subr.bf16.mxu0 0
  %155 = vmatpush2.bf16.msra.mxu0 0
  %156 = vmatprep.subr.bf16.mxu0 0
  %157 = vmatpush2.bf16.msra.mxu0 0
  %158 = vmatprep.subr.bf16.mxu0 0
  %159 = vmatpush2.bf16.msra.mxu0 0
  %160 = vmatprep.subr.bf16.mxu0 0
  %161 = vmatpush2.bf16.msra.mxu0 0
  %162 = vmatprep.subr.bf16.mxu0 0
  %163 = vmatpush2.bf16.msra.mxu0 0
  %164 = vmatprep.subr.bf16.mxu0 0
  %165 = vmatpush2.bf16.msra.mxu0 0
  %166 = vmatprep.mubr.bf16.mxu0 0
  %167 = vmatmul.mubr.bf16.gmra.mxu0 %v66
  %v168 = vpop.f32.mrf.mxu0
  %v169 = vadd.f32 0.0, %v168
  %v170 = vpop.f32.mrf.mxu0
  %v171 = vadd.f32 0.0, %v170
  %v172 = vpop.f32.mrf.mxu0
  %v173 = vpop.f32.mrf.mxu0
  %174 = vdwg.mxu0
  %175 = vmatprep.subr.bf16.mxu0 0
  %176 = vmatpush1.bf16.msra.mxu0 0
  %177 = vmatprep.subr.bf16.mxu0 0
  %178 = vmatpush1.bf16.msra.mxu0 0
  %179 = vmatprep.subr.bf16.mxu0 0
  %180 = vmatpush1.bf16.msra.mxu0 0
  %181 = vmatprep.subr.bf16.mxu0 0
  %182 = vmatpush1.bf16.msra.mxu0 0
  %183 = vmatprep.subr.bf16.mxu0 0
  %184 = vmatpush1.bf16.msra.mxu0 0
  %185 = vmatprep.subr.bf16.mxu0 0
  %186 = vmatpush1.bf16.msra.mxu0 0
  %187 = vmatprep.subr.bf16.mxu0 0
  %188 = vmatpush1.bf16.msra.mxu0 0
  %189 = vmatprep.subr.bf16.mxu0 %v85
  %190 = vmatpush1.bf16.msra.mxu0 %v82
  %191 = vmatprep.subr.bf16.mxu0 0
  %192 = vmatpush2.bf16.msra.mxu0 0
  %193 = vmatprep.subr.bf16.mxu0 0
  %194 = vmatpush2.bf16.msra.mxu0 0
  %195 = vmatprep.subr.bf16.mxu0 0
  %196 = vmatpush2.bf16.msra.mxu0 0
  %197 = vmatprep.subr.bf16.mxu0 0
  %198 = vmatpush2.bf16.msra.mxu0 0
  %199 = vmatprep.subr.bf16.mxu0 0
  %200 = vmatpush2.bf16.msra.mxu0 0
  %201 = vmatprep.subr.bf16.mxu0 0
  %202 = vmatpush2.bf16.msra.mxu0 0
  %203 = vmatprep.subr.bf16.mxu0 0
  %204 = vmatpush2.bf16.msra.mxu0 0
  %205 = vmatprep.subr.bf16.mxu0 0
  %206 = vmatpush2.bf16.msra.mxu0 0
  %207 = vmatprep.mubr.bf16.mxu0 0
  %208 = vmatmul.mubr.bf16.gmra.mxu0 %v66
  %v209 = vpop.f32.mrf.mxu0
  %v210 = vadd.f32 0.0, %v209
  %v211 = vpop.f32.mrf.mxu0
  %v212 = vadd.f32 0.0, %v211
  %v213 = vpop.f32.mrf.mxu0
  %v214 = vpop.f32.mrf.mxu0
  %215 = vdwg.mxu0
  %216 = vmatprep.subr.bf16.mxu0 0
  %217 = vmatpush1.bf16.msra.mxu0 0
  %218 = vmatprep.subr.bf16.mxu0 0
  %219 = vmatpush1.bf16.msra.mxu0 0
  %220 = vmatprep.subr.bf16.mxu0 0
  %221 = vmatpush1.bf16.msra.mxu0 0
  %222 = vmatprep.subr.bf16.mxu0 0
  %223 = vmatpush1.bf16.msra.mxu0 0
  %224 = vmatprep.subr.bf16.mxu0 0
  %225 = vmatpush1.bf16.msra.mxu0 0
  %226 = vmatprep.subr.bf16.mxu0 0
  %227 = vmatpush1.bf16.msra.mxu0 0
  %228 = vmatprep.subr.bf16.mxu0 0
  %229 = vmatpush1.bf16.msra.mxu0 0
  %230 = vmatprep.subr.bf16.mxu0 %v91
  %231 = vmatpush1.bf16.msra.mxu0 %v88
  %232 = vmatprep.subr.bf16.mxu0 0
  %233 = vmatpush2.bf16.msra.mxu0 0
  %234 = vmatprep.subr.bf16.mxu0 0
  %235 = vmatpush2.bf16.msra.mxu0 0
  %236 = vmatprep.subr.bf16.mxu0 0
  %237 = vmatpush2.bf16.msra.mxu0 0
  %238 = vmatprep.subr.bf16.mxu0 0
  %239 = vmatpush2.bf16.msra.mxu0 0
  %240 = vmatprep.subr.bf16.mxu0 0
  %241 = vmatpush2.bf16.msra.mxu0 0
  %242 = vmatprep.subr.bf16.mxu0 0
  %243 = vmatpush2.bf16.msra.mxu0 0
  %244 = vmatprep.subr.bf16.mxu0 0
  %245 = vmatpush2.bf16.msra.mxu0 0
  %246 = vmatprep.subr.bf16.mxu0 0
  %247 = vmatpush2.bf16.msra.mxu0 0
  %248 = vmatprep.mubr.bf16.mxu0 0
  %249 = vmatmul.mubr.bf16.gmra.mxu0 %v66
  %v250 = vpop.f32.mrf.mxu0
  %v251 = vadd.f32 0.0, %v250
  %v252 = vpop.f32.mrf.mxu0
  %v253 = vadd.f32 0.0, %v252
  %v254 = vpop.f32.mrf.mxu0
  %v255 = vpop.f32.mrf.mxu0
  %256 = vdwg.mxu0
  %v265 = vcombine.low %v128, %v130
  %v266 = vcombine.low %v169, %v171
  %v268 = vunpack.c.l.s4 1983009808
  %v269 = vunpack.c.0.s8 %v268
  %v270 = vlaneseq
  %v271 = vshrl.u32 %v270, 7
  %v272 = vsub.s32 %v269, %v271
  %v273 = vrot.slane %v265, %v272
  %v275 = vunpack.c.l.s4 1983009808
  %v276 = vunpack.c.0.s8 %v275
  %v277 = vlaneseq
  %v278 = vshrl.u32 %v277, 7
  %v279 = vsub.s32 %v276, %v278
  %v280 = vrot.slane %v266, %v279
  %v281 = vcombine.low %v273, %v280
  %v282 = vcombine.low %v210, %v212
  %v283 = vcombine.low %v251, %v253
  %v285 = vunpack.c.l.s4 1983009808
  %v286 = vunpack.c.0.s8 %v285
  %v287 = vlaneseq
  %v288 = vshrl.u32 %v287, 7
  %v289 = vsub.s32 %v286, %v288
  %v290 = vrot.slane %v282, %v289
  %v292 = vunpack.c.l.s4 1983009808
  %v293 = vunpack.c.0.s8 %v292
  %v294 = vlaneseq
  %v295 = vshrl.u32 %v294, 7
  %v296 = vsub.s32 %v293, %v295
  %v297 = vrot.slane %v283, %v296
  %v298 = vcombine.low %v290, %v297
  %v301 = vadd.f32 %v21, %v281
  %v302 = vadd.f32 %v22, %v298
  %303 = vst [vmem:[#allocation2] sm:$0xff] %v301
  %304 = vst [vmem:[#allocation2 + $0x8] sm:$0xff] %v302
  // Predicated region
  $region18: #{vae_forward.9} parent=0 // pred_check
    %p305 = pneg %p15
  $region19: #{vae_forward.9} parent=0 // pred_check_branch
    %307 = sbr.rel (%p305) target = $region21
  $region20: #{vae_forward.9} parent=0 // pred_region
    %v308 = vld [vmem:[#allocation2] sm:$0xff]
    %v309 = vld [vmem:[#allocation2 + $0x8] sm:$0xff]
    %v310 = vld [vmem:[%s2] sm:$0xff]
    %v312 = vlaneseq
    %v313 = vshrl.u32 %v312, 7
    %v314 = vsub.s32 0, %v313
    %v315 = vrot.slane %v310, %v314
    %v316 = vlaneseq
    %v317 = vshrl.u32 %v316, 7
    %v318 = vsub.s32 1, %v317
    %v319 = vrot.slane %v310, %v318
    %v320 = vlaneseq
    %v321 = vshrl.u32 %v320, 7
    %v322 = vsub.s32 2, %v321
    %v323 = vrot.slane %v310, %v322
    %v324 = vlaneseq
    %v325 = vshrl.u32 %v324, 7
    %v326 = vsub.s32 3, %v325
    %v327 = vrot.slane %v310, %v326
    %v328 = vlaneseq
    %v329 = vshrl.u32 %v328, 7
    %v330 = vsub.s32 4, %v329
    %v331 = vrot.slane %v310, %v330
    %v332 = vlaneseq
    %v333 = vshrl.u32 %v332, 7
    %v334 = vsub.s32 5, %v333
    %v335 = vrot.slane %v310, %v334
    %v336 = vlaneseq
    %v337 = vshrl.u32 %v336, 7
    %v338 = vsub.s32 6, %v337
    %v339 = vrot.slane %v310, %v338
    %v340 = vlaneseq
    %v341 = vshrl.u32 %v340, 7
    %v342 = vsub.s32 7, %v341
    %v343 = vrot.slane %v310, %v342
    %v344 = vcombine.low %v315, %v319
    %v345 = vcombine.low %v323, %v327
    %v347 = vunpack.c.l.s4 1983009808
    %v348 = vunpack.c.0.s8 %v347
    %v349 = vlaneseq
    %v350 = vshrl.u32 %v349, 7
    %v351 = vsub.s32 %v348, %v350
    %v352 = vrot.slane %v344, %v351
    %v354 = vunpack.c.l.s4 1983009808
    %v355 = vunpack.c.0.s8 %v354
    %v356 = vlaneseq
    %v357 = vshrl.u32 %v356, 7
    %v358 = vsub.s32 %v355, %v357
    %v359 = vrot.slane %v345, %v358
    %v360 = vcombine.low %v352, %v359
    %v361 = vcombine.low %v331, %v335
    %v362 = vcombine.low %v339, %v343
    %v364 = vunpack.c.l.s4 1983009808
    %v365 = vunpack.c.0.s8 %v364
    %v366 = vlaneseq
    %v367 = vshrl.u32 %v366, 7
    %v368 = vsub.s32 %v365, %v367
    %v369 = vrot.slane %v361, %v368
    %v371 = vunpack.c.l.s4 1983009808
    %v372 = vunpack.c.0.s8 %v371
    %v373 = vlaneseq
    %v374 = vshrl.u32 %v373, 7
    %v375 = vsub.s32 %v372, %v374
    %v376 = vrot.slane %v362, %v375
    %v377 = vcombine.low %v369, %v376
    %v380 = vadd.f32 %v308, %v360
    %v381 = vadd.f32 %v309, %v377
    %v384 = vcombine.high %v380, %v380
    %v386 = vunpack.c.l.s4 1983009808
    %v387 = vunpack.c.0.s8 %v386
    %v388 = vlaneseq
    %v389 = vshrl.u32 %v388, 7
    %v390 = vsub.s32 %v387, %v389
    %v391 = vrot.slane %v380, %v390
    %v393 = vunpack.c.l.s4 1983009808
    %v394 = vunpack.c.0.s8 %v393
    %v395 = vlaneseq
    %v396 = vshrl.u32 %v395, 7
    %v397 = vsub.s32 %v394, %v396
    %v398 = vrot.slane %v384, %v397
    %v399 = vcombine.high %v391, %v391
    %v400 = vcombine.high %v398, %v398
    %v401 = vcombine.high %v381, %v381
    %v403 = vunpack.c.l.s4 1983009808
    %v404 = vunpack.c.0.s8 %v403
    %v405 = vlaneseq
    %v406 = vshrl.u32 %v405, 7
    %v407 = vsub.s32 %v404, %v406
    %v408 = vrot.slane %v381, %v407
    %v410 = vunpack.c.l.s4 1983009808
    %v411 = vunpack.c.0.s8 %v410
    %v412 = vlaneseq
    %v413 = vshrl.u32 %v412, 7
    %v414 = vsub.s32 %v411, %v413
    %v415 = vrot.slane %v401, %v414
    %v416 = vcombine.high %v408, %v408
    %v417 = vcombine.high %v415, %v415
    %v426 = vpack.c.bf16 %v391, %v391
    %v427 = vpack.c.bf16 %v399, %v399
    %v428 = vpack.c.bf16 %v398, %v398
    %v429 = vpack.c.bf16 %v400, %v400
    %v430 = vpack.c.bf16 %v408, %v408
    %v431 = vpack.c.bf16 %v416, %v416
    %v432 = vpack.c.bf16 %v415, %v415
    %v433 = vpack.c.bf16 %v417, %v417
    %v442 = vcombine.low %v426, %v427
    %v443 = vcombine.low %v428, %v429
    %v444 = vcombine.low %v430, %v431
    %v445 = vcombine.low %v432, %v433
    %v447 = vunpack.c.l.s4 1966171168
    %v448 = vunpack.c.0.s8 %v447
    %v449 = vlaneseq
    %v450 = vshrl.u32 %v449, 7
    %v451 = vsub.s32 %v448, %v450
    %v452 = vrot.slane %v442, %v451
    %v454 = vunpack.c.l.s4 1966171168
    %v455 = vunpack.c.0.s8 %v454
    %v456 = vlaneseq
    %v457 = vshrl.u32 %v456, 7
    %v458 = vsub.s32 %v455, %v457
    %v459 = vrot.slane %v443, %v458
    %v461 = vunpack.c.l.s4 1966171168
    %v462 = vunpack.c.0.s8 %v461
    %v463 = vlaneseq
    %v464 = vshrl.u32 %v463, 7
    %v465 = vsub.s32 %v462, %v464
    %v466 = vrot.slane %v444, %v465
    %v468 = vunpack.c.l.s4 1966171168
    %v469 = vunpack.c.0.s8 %v468
    %v470 = vlaneseq
    %v471 = vshrl.u32 %v470, 7
    %v472 = vsub.s32 %v469, %v471
    %v473 = vrot.slane %v445, %v472
    %v474 = vcombine.low %v452, %v459
    %v475 = vcombine.low %v466, %v473
    %v477 = vunpack.c.l.s4 1966171168
    %v478 = vunpack.c.0.s8 %v477
    %v479 = vlaneseq
    %v480 = vshrl.u32 %v479, 7
    %v481 = vsub.s32 %v478, %v480
    %v482 = vrot.slane %v474, %v481
    %v484 = vunpack.c.l.s4 1966171168
    %v485 = vunpack.c.0.s8 %v484
    %v486 = vlaneseq
    %v487 = vshrl.u32 %v486, 7
    %v488 = vsub.s32 %v485, %v487
    %v489 = vrot.slane %v475, %v488
    %v490 = vcombine.low %v482, %v489
    %492 = vst [vmem:[%s3] sm:$0xff] %v490
  $region21: #{vae_forward.9} parent=0 // pred_fallthru
    _
  // Predicated region
  $region22: #{vae_forward.9} parent=0 // pred_check
    _
  $region23: #{vae_forward.9} parent=0 // pred_check_branch
    %494 = sbr.rel (0) target = $region25
  $region24: #{vae_forward.9} parent=0 // pred_region
    _
  $region25: #{vae_forward.9} parent=0 // pred_fallthru
    _
  // Predicated region
  $region26: #{vae_forward.9} parent=0 // pred_check
    _
  $region27: #{vae_forward.9} parent=0 // pred_check_branch
    %496 = sbr.rel (0) target = $region29
  $region28: #{vae_forward.9} parent=0 // pred_region
    _
  $region29: #{vae_forward.9} parent=0 // pred_fallthru
    _

// kernel: vae_forward.8
$region0: #{vae_forward.8}
  #allocation0 [shape = 'u32[]', space=smem, size = 0x4, offset = 0x4, fixed_abs, tag = 'smem constant byte address 0x4 - core index']
  #allocation1 [shape = 'u32[144,128]{1,0:T(1,128)}', space=vmem, size = 0x12000, scoped, tag = 'internal scratch']
  %s0 = inlined_call_operand.vmem [shape: bf16[2,1024], index: 0, kind: input, shape index: {}]
  %s1 = inlined_call_operand.vmem [shape: bf16[1024,20], index: 1, kind: input, shape index: {}]
  %s2 = inlined_call_operand.vmem [shape: f32[2,2,20], index: 2, kind: output, shape index: {}]
  %s3 = sld [smem:[#allocation0]]
  $region45: #{vae_forward.8} parent=0
    _
  %s5 = ssub.s32 1, %s3
  %s6 = scalar_select 0, %s5, %s3
  loop: start=0, step=1, limit=4
  $region2: #{vae_forward.8} parent=0 // loop_pre_header
    _
  $region3: #{vae_forward.8} parent=0 // loop_header
    %s8 = sphi 0, %s12
    %p9 = scmp.ge.s32.totalorder %s8, 4
    %s15 = sphi 0, %s27
    %s16 = sphi 0, %s23
    %s17 = sphi 0, %s15
    %s18 = sphi 0, %s16
    %s19 = sphi 0, %s17
    %s20 = sphi 0, %s18
    %s32 = sphi 0, %s34
    %s35 = sphi 0, %s32
    %s36 = sphi 0, %s35
    %s52 = sphi 0, %s36
    %s60 = sphi 0, %s62
    %s63 = sphi 0, %s60
    %s64 = sphi 0, %s63
    %s80 = sphi 0, %s64
    %s86 = sphi 0, %s88
    %s89 = sphi 0, %s86
    %s90 = sphi 0, %s89
    %s106 = sphi 0, %s90
  $region4: #{vae_forward.8} parent=0 // loop_header_branch
    %11 = sbr.rel (%p9) target = $region8
  $region5: #{vae_forward.8} parent=0 // loop_body
    %s13 = ssub.s32 %s8, 1
    %s14 = ssub.s32 %s8, 2
    %s21 = sadd.s32 1, %s16
    %p22 = scmp.ge.s32.totalorder %s21, 1
    %s23 = scalar_select %p22, 0, %s21
    %s24 = sadd.s32 1, %s15
    %s25 = scalar_select %p22, %s24, %s15
    %p26 = scmp.ge.s32.totalorder %s25, 2
    %s27 = scalar_select %p26, 0, %s25
    %s28 = sadd.s32 %s15, %s16
    %s29 = sadd.s32 %s27, %s23
    %s30 = ssub.s32 %s28, %s29
    %p31 = scmp.eq.s32.totalorder %s30, 0
    %s33 = sadd.s32 %s32, 1
    %s34 = scalar_select %p31, %s32, %s33
    %p37 = pneg %p31
    %p38 = scmp.eq.s32.totalorder %s8, 1
    %p39 = por %p37, %p38
    %p40 = scmp.ne.s32.totalorder %s32, %s35
    %p41 = scmp.eq.s32.totalorder %s8, 0
    %p42 = por %p40, %p41
    %p43 = scmp.ne.s32.totalorder %s32, %s35
    %p44 = scmp.eq.s32.totalorder %s13, 1
    %p45 = por %p43, %p44
    %p46 = scmp.ne.s32.totalorder %s35, %s36
    %p47 = scmp.eq.s32.totalorder %s13, 0
    %p48 = por %p46, %p47
    %p49 = scmp.ne.s32.totalorder %s35, %s36
    %p50 = scmp.eq.s32.totalorder %s14, 1
    %p51 = por %p49, %p50
    %p53 = scmp.ne.s32.totalorder %s36, %s52
    %p54 = scmp.eq.s32.totalorder %s14, 0
    %p55 = por %p53, %p54
    %s56 = sadd.s32 %s15, %s16
    %s57 = sadd.s32 %s27, %s23
    %s58 = ssub.s32 %s56, %s57
    %p59 = scmp.eq.s32.totalorder %s58, 0
    %s61 = sadd.s32 %s60, 1
    %s62 = scalar_select %p59, %s60, %s61
    %p65 = pneg %p59
    %p66 = scmp.eq.s32.totalorder %s8, 1
    %p67 = por %p65, %p66
    %p68 = scmp.ne.s32.totalorder %s60, %s63
    %p69 = scmp.eq.s32.totalorder %s8, 0
    %p70 = por %p68, %p69
    %p71 = scmp.ne.s32.totalorder %s60, %s63
    %p72 = scmp.eq.s32.totalorder %s13, 1
    %p73 = por %p71, %p72
    %p74 = scmp.ne.s32.totalorder %s63, %s64
    %p75 = scmp.eq.s32.totalorder %s13, 0
    %p76 = por %p74, %p75
    %p77 = scmp.ne.s32.totalorder %s63, %s64
    %p78 = scmp.eq.s32.totalorder %s14, 1
    %p79 = por %p77, %p78
    %p81 = scmp.ne.s32.totalorder %s64, %s80
    %p82 = scmp.eq.s32.totalorder %s14, 0
    %p83 = por %p81, %p82
    %s84 = ssub.s32 %s15, %s27
    %p85 = scmp.eq.s32.totalorder %s84, 0
    %s87 = sadd.s32 %s86, 1
    %s88 = scalar_select %p85, %s86, %s87
    %p91 = pneg %p85
    %p92 = scmp.eq.s32.totalorder %s8, 1
    %p93 = por %p91, %p92
    %p94 = scmp.ne.s32.totalorder %s86, %s89
    %p95 = scmp.eq.s32.totalorder %s8, 0
    %p96 = por %p94, %p95
    %p97 = scmp.ne.s32.totalorder %s86, %s89
    %p98 = scmp.eq.s32.totalorder %s13, 1
    %p99 = por %p97, %p98
    %p100 = scmp.ne.s32.totalorder %s89, %s90
    %p101 = scmp.eq.s32.totalorder %s13, 0
    %p102 = por %p100, %p101
    %p103 = scmp.ne.s32.totalorder %s89, %s90
    %p104 = scmp.eq.s32.totalorder %s14, 1
    %p105 = por %p103, %p104
    %p107 = scmp.ne.s32.totalorder %s90, %s106
    %p108 = scmp.eq.s32.totalorder %s14, 0
    %p109 = por %p107, %p108
    %p110 = scmp.le.s32.totalorder 1, %s8
    %p111 = scmp.lt.s32.totalorder %s8, 3
    %p112 = pnand %p110, %p111
    %p113 = pneg %p112
    // Predicated region
    $region9: #{vae_forward.8} parent=5 // pred_check
      _
    $region10: #{vae_forward.8} parent=5 // pred_check_branch
      %115 = sbr.rel (%p112) target = $region12
    $region11: #{vae_forward.8} parent=5 // pred_region
      %s116 = ssub.s32 %s8, 1
    $region12: #{vae_forward.8} parent=5 // pred_fallthru
      _
    %p117 = scmp.lt.s32.totalorder %s8, 2
    // Predicated region
    $region13: #{vae_forward.8} parent=5 // pred_check
      %p118 = pneg %p117
    $region14: #{vae_forward.8} parent=5 // pred_check_branch
      %120 = sbr.rel (%p118) target = $region16
    $region15: #{vae_forward.8} parent=5 // pred_region
      // Predicated region
      $region17: #{vae_forward.8} parent=15 // pred_check
        %p121 = pneg %p42
      $region18: #{vae_forward.8} parent=15 // pred_check_branch
        %123 = sbr.rel (%p121) target = $region20
      $region19: #{vae_forward.8} parent=15 // pred_region
        %s124 = sadd.s32 %s15, %s16
        %s125 = smul.u32 4, %s124
        %p126 = scmp.lt.s32.totalorder %s125, 7
        %s127 = scalar_select %p126, %s125, 7
        %s128 = scalar_lea.vmem %s0, %s127
        %s129 = sadd.s32 %s15, %s16
        %s130 = smul.u32 4, %s129
      $region20: #{vae_forward.8} parent=15 // pred_fallthru
        _
      // Predicated region
      $region21: #{vae_forward.8} parent=15 // pred_check
        %p131 = pneg %p70
      $region22: #{vae_forward.8} parent=15 // pred_check_branch
        %133 = sbr.rel (%p131) target = $region24
      $region23: #{vae_forward.8} parent=15 // pred_region
        %s134 = sadd.s32 %s15, %s16
        %s135 = smul.u32 64, %s134
        %p136 = scmp.lt.s32.totalorder %s135, 127
        %s137 = scalar_select %p136, %s135, 127
        %s138 = smul.addr %s137, 4
        %s139 = scalar_lea.vmem %s1, %s138
        %s140 = sadd.s32 %s15, %s16
        %s141 = smul.u32 64, %s140
      $region24: #{vae_forward.8} parent=15 // pred_fallthru
        _
    $region16: #{vae_forward.8} parent=5 // pred_fallthru
      _
    %p142 = scmp.le.s32.totalorder 1, %s8
    %p143 = scmp.lt.s32.totalorder %s8, 3
    %p144 = pnand %p142, %p143
    %p145 = pneg %p144
    // Predicated region
    $region25: #{vae_forward.8} parent=5 // pred_check
      _
    $region26: #{vae_forward.8} parent=5 // pred_check_branch
      %147 = sbr.rel (%p144) target = $region28
    $region27: #{vae_forward.8} parent=5 // pred_region
      %s148 = ssub.s32 %s8, 1
      %s149 = sadd.s32 %s17, %s18
      %s150 = smul.u32 4, %s149
      %p151 = scmp.lt.s32.totalorder %s150, 7
      %s152 = scalar_select %p151, %s150, 7
      %s153 = scalar_lea.vmem %s0, %s152
      %p154 = pneg %p48
      %p155 = pneg %p45
      %s156 = sadd.s32 %s17, %s18
      %s157 = smul.u32 64, %s156
      %p158 = scmp.lt.s32.totalorder %s157, 127
      %s159 = scalar_select %p158, %s157, 127
      %s160 = smul.addr %s159, 4
      %s161 = scalar_lea.vmem %s1, %s160
      %p162 = pneg %p76
      %p163 = pneg %p73
      %p164 = pneg %p102
      %p165 = pneg %p99
      %p166 = scmp.lt.s32.totalorder %s17, 1
      %s167 = scalar_select %p166, %s17, 1
      %s168 = smul.addr %s167, 2
      %s169 = scalar_lea.vmem %s2, %s168
      %s170 = sadd.s32 %s17, %s18
      %s171 = smul.u32 4, %s170
      %p172 = scmp.lt.s32.totalorder %s171, 7
      %s173 = scalar_select %p172, %s171, 7
      %s174 = scalar_lea.vmem %s0, %s173
      %s175 = sadd.s32 %s17, %s18
      %s176 = smul.u32 4, %s175
      %s177 = sadd.s32 %s17, %s18
      %s178 = smul.u32 64, %s177
      %p179 = scmp.lt.s32.totalorder %s178, 127
      %s180 = scalar_select %p179, %s178, 127
      %s181 = smul.addr %s180, 4
      %s182 = scalar_lea.vmem %s1, %s181
      %s183 = sadd.s32 %s17, %s18
      %s184 = smul.u32 64, %s183
      %p185 = scmp.lt.s32.totalorder %s17, 1
      %s186 = scalar_select %p185, %s17, 1
      %s187 = smul.addr %s186, 2
      %s188 = scalar_lea.vmem %s2, %s187
      %p190 = scmp.eq.s32.totalorder %s18, 0
      // Predicated region
      $region29: #{vae_forward.8} parent=27 // pred_check
        %p191 = pneg %p190
      $region30: #{vae_forward.8} parent=27 // pred_check_branch
        %193 = sbr.rel (%p191) target = $region32
      $region31: #{vae_forward.8} parent=27 // pred_region
        %vm194 = vcmask 156672
        %195 = vst.msk [vmem:[%s188] sm:$0x3] %vm194, 0.0
      $region32: #{vae_forward.8} parent=27 // pred_fallthru
        _
      %v196 = vld [vmem:[%s188] sm:$0x3]
      %v197 = vld [vmem:[%s174] sm:$0xf]
      %v198 = vld [vmem:[%s182] sm:$0xf]
      %v199 = vld [vmem:[%s182 + $0x4] sm:$0xf]
      %v200 = vld [vmem:[%s182 + $0x8] sm:$0xf]
      %v201 = vld [vmem:[%s182 + $0xc] sm:$0xf]
      %v202 = vld [vmem:[%s182 + $0x10] sm:$0xf]
      %v203 = vld [vmem:[%s182 + $0x14] sm:$0xf]
      %v204 = vld [vmem:[%s182 + $0x18] sm:$0xf]
      %v205 = vld [vmem:[%s182 + $0x1c] sm:$0xf]
      %v206 = vld [vmem:[%s182 + $0x20] sm:$0xf]
      %v207 = vld [vmem:[%s182 + $0x24] sm:$0xf]
      %v208 = vld [vmem:[%s182 + $0x28] sm:$0xf]
      %v209 = vld [vmem:[%s182 + $0x2c] sm:$0xf]
      %v210 = vld [vmem:[%s182 + $0x30] sm:$0xf]
      %v211 = vld [vmem:[%s182 + $0x34] sm:$0xf]
      %v212 = vld [vmem:[%s182 + $0x38] sm:$0xf]
      %v213 = vld [vmem:[%s182 + $0x3c] sm:$0xf]
      %v214 = vld [vmem:[%s182 + $0x40] sm:$0xf]
      %v215 = vld [vmem:[%s182 + $0x44] sm:$0xf]
      %v216 = vld [vmem:[%s182 + $0x48] sm:$0xf]
      %v217 = vld [vmem:[%s182 + $0x4c] sm:$0xf]
      %v218 = vld [vmem:[%s182 + $0x50] sm:$0xf]
      %v219 = vld [vmem:[%s182 + $0x54] sm:$0xf]
      %v220 = vld [vmem:[%s182 + $0x58] sm:$0xf]
      %v221 = vld [vmem:[%s182 + $0x5c] sm:$0xf]
      %v222 = vld [vmem:[%s182 + $0x60] sm:$0xf]
      %v223 = vld [vmem:[%s182 + $0x64] sm:$0xf]
      %v224 = vld [vmem:[%s182 + $0x68] sm:$0xf]
      %v225 = vld [vmem:[%s182 + $0x6c] sm:$0xf]
      %v226 = vld [vmem:[%s182 + $0x70] sm:$0xf]
      %v227 = vld [vmem:[%s182 + $0x74] sm:$0xf]
      %v228 = vld [vmem:[%s182 + $0x78] sm:$0xf]
      %v229 = vld [vmem:[%s182 + $0x7c] sm:$0xf]
      %v230 = vld [vmem:[%s182 + $0x80] sm:$0xf]
      %v231 = vld [vmem:[%s182 + $0x84] sm:$0xf]
      %v232 = vld [vmem:[%s182 + $0x88] sm:$0xf]
      %v233 = vld [vmem:[%s182 + $0x8c] sm:$0xf]
      %v234 = vld [vmem:[%s182 + $0x90] sm:$0xf]
      %v235 = vld [vmem:[%s182 + $0x94] sm:$0xf]
      %v236 = vld [vmem:[%s182 + $0x98] sm:$0xf]
      %v237 = vld [vmem:[%s182 + $0x9c] sm:$0xf]
      %v238 = vld [vmem:[%s182 + $0xa0] sm:$0xf]
      %v239 = vld [vmem:[%s182 + $0xa4] sm:$0xf]
      %v240 = vld [vmem:[%s182 + $0xa8] sm:$0xf]
      %v241 = vld [vmem:[%s182 + $0xac] sm:$0xf]
      %v242 = vld [vmem:[%s182 + $0xb0] sm:$0xf]
      %v243 = vld [vmem:[%s182 + $0xb4] sm:$0xf]
      %v244 = vld [vmem:[%s182 + $0xb8] sm:$0xf]
      %v245 = vld [vmem:[%s182 + $0xbc] sm:$0xf]
      %v246 = vld [vmem:[%s182 + $0xc0] sm:$0xf]
      %v247 = vld [vmem:[%s182 + $0xc4] sm:$0xf]
      %v248 = vld [vmem:[%s182 + $0xc8] sm:$0xf]
      %v249 = vld [vmem:[%s182 + $0xcc] sm:$0xf]
      %v250 = vld [vmem:[%s182 + $0xd0] sm:$0xf]
      %v251 = vld [vmem:[%s182 + $0xd4] sm:$0xf]
      %v252 = vld [vmem:[%s182 + $0xd8] sm:$0xf]
      %v253 = vld [vmem:[%s182 + $0xdc] sm:$0xf]
      %v254 = vld [vmem:[%s182 + $0xe0] sm:$0xf]
      %v255 = vld [vmem:[%s182 + $0xe4] sm:$0xf]
      %v256 = vld [vmem:[%s182 + $0xe8] sm:$0xf]
      %v257 = vld [vmem:[%s182 + $0xec] sm:$0xf]
      %v258 = vld [vmem:[%s182 + $0xf0] sm:$0xf]
      %v259 = vld [vmem:[%s182 + $0xf4] sm:$0xf]
      %v260 = vld [vmem:[%s182 + $0xf8] sm:$0xf]
      %v261 = vld [vmem:[%s182 + $0xfc] sm:$0xf]
      %v264 = vunpack.c.l.s4 1966171168
      %v265 = vunpack.c.0.s8 %v264
      %v266 = vlaneseq
      %v267 = vshrl.u32 %v266, 7
      %v268 = vsub.s32 %v265, %v267
      %v269 = vrot.slane %v197, %v268
      %v270 = vcombine.high %v269, %v269
      %v272 = vunpack.c.l.s4 1966171168
      %v273 = vunpack.c.0.s8 %v272
      %v274 = vlaneseq
      %v275 = vshrl.u32 %v274, 7
      %v276 = vsub.s32 %v273, %v275
      %v277 = vrot.slane %v269, %v276
      %v279 = vunpack.c.l.s4 1966171168
      %v280 = vunpack.c.0.s8 %v279
      %v281 = vlaneseq
      %v282 = vshrl.u32 %v281, 7
      %v283 = vsub.s32 %v280, %v282
      %v284 = vrot.slane %v270, %v283
      %v285 = vcombine.high %v277, %v277
      %v286 = vcombine.high %v284, %v284
      %v355 = vunpack.c.l.b16 %v198
      %v356 = vunpack.c.l.b16 %v199
      %v357 = vunpack.c.l.b16 %v200
      %v358 = vunpack.c.l.b16 %v201
      %v359 = vunpack.c.l.b16 %v202
      %v360 = vunpack.c.l.b16 %v203
      %v361 = vunpack.c.l.b16 %v204
      %v362 = vunpack.c.l.b16 %v205
      %v363 = vunpack.c.l.b16 %v206
      %v364 = vunpack.c.l.b16 %v207
      %v365 = vunpack.c.l.b16 %v208
      %v366 = vunpack.c.l.b16 %v209
      %v367 = vunpack.c.l.b16 %v210
      %v368 = vunpack.c.l.b16 %v211
      %v369 = vunpack.c.l.b16 %v212
      %v370 = vunpack.c.l.b16 %v213
      %v371 = vunpack.c.l.b16 %v214
      %v372 = vunpack.c.l.b16 %v215
      %v373 = vunpack.c.l.b16 %v216
      %v374 = vunpack.c.l.b16 %v217
      %v375 = vunpack.c.l.b16 %v218
      %v376 = vunpack.c.l.b16 %v219
      %v377 = vunpack.c.l.b16 %v220
      %v378 = vunpack.c.l.b16 %v221
      %v379 = vunpack.c.l.b16 %v222
      %v380 = vunpack.c.l.b16 %v223
      %v381 = vunpack.c.l.b16 %v224
      %v382 = vunpack.c.l.b16 %v225
      %v383 = vunpack.c.l.b16 %v226
      %v384 = vunpack.c.l.b16 %v227
      %v385 = vunpack.c.l.b16 %v228
      %v386 = vunpack.c.l.b16 %v229
      %v387 = vunpack.c.l.b16 %v230
      %v388 = vunpack.c.l.b16 %v231
      %v389 = vunpack.c.l.b16 %v232
      %v390 = vunpack.c.l.b16 %v233
      %v391 = vunpack.c.l.b16 %v234
      %v392 = vunpack.c.l.b16 %v235
      %v393 = vunpack.c.l.b16 %v236
      %v394 = vunpack.c.l.b16 %v237
      %v395 = vunpack.c.l.b16 %v238
      %v396 = vunpack.c.l.b16 %v239
      %v397 = vunpack.c.l.b16 %v240
      %v398 = vunpack.c.l.b16 %v241
      %v399 = vunpack.c.l.b16 %v242
      %v400 = vunpack.c.l.b16 %v243
      %v401 = vunpack.c.l.b16 %v244
      %v402 = vunpack.c.l.b16 %v245
      %v403 = vunpack.c.l.b16 %v246
      %v404 = vunpack.c.l.b16 %v247
      %v405 = vunpack.c.l.b16 %v248
      %v406 = vunpack.c.l.b16 %v249
      %v407 = vunpack.c.l.b16 %v250
      %v408 = vunpack.c.l.b16 %v251
      %v409 = vunpack.c.l.b16 %v252
      %v410 = vunpack.c.l.b16 %v253
      %v411 = vunpack.c.l.b16 %v254
      %v412 = vunpack.c.l.b16 %v255
      %v413 = vunpack.c.l.b16 %v256
      %v414 = vunpack.c.l.b16 %v257
      %v415 = vunpack.c.l.b16 %v258
      %v416 = vunpack.c.l.b16 %v259
      %v417 = vunpack.c.l.b16 %v260
      %v418 = vunpack.c.l.b16 %v261
      %v419 = vpack.c.b16 %v356, %v355
      %v420 = vpack.c.b16 %v358, %v357
      %v421 = vpack.c.b16 %v360, %v359
      %v422 = vpack.c.b16 %v362, %v361
      %v423 = vpack.c.b16 %v364, %v363
      %v424 = vpack.c.b16 %v366, %v365
      %v425 = vpack.c.b16 %v368, %v367
      %v426 = vpack.c.b16 %v370, %v369
      %v427 = vpack.c.b16 %v372, %v371
      %v428 = vpack.c.b16 %v374, %v373
      %v429 = vpack.c.b16 %v376, %v375
      %v430 = vpack.c.b16 %v378, %v377
      %v431 = vpack.c.b16 %v380, %v379
      %v432 = vpack.c.b16 %v382, %v381
      %v433 = vpack.c.b16 %v384, %v383
      %v434 = vpack.c.b16 %v386, %v385
      %v435 = vpack.c.b16 %v388, %v387
      %v436 = vpack.c.b16 %v390, %v389
      %v437 = vpack.c.b16 %v392, %v391
      %v438 = vpack.c.b16 %v394, %v393
      %v439 = vpack.c.b16 %v396, %v395
      %v440 = vpack.c.b16 %v398, %v397
      %v441 = vpack.c.b16 %v400, %v399
      %v442 = vpack.c.b16 %v402, %v401
      %v443 = vpack.c.b16 %v404, %v403
      %v444 = vpack.c.b16 %v406, %v405
      %v445 = vpack.c.b16 %v408, %v407
      %v446 = vpack.c.b16 %v410, %v409
      %v447 = vpack.c.b16 %v412, %v411
      %v448 = vpack.c.b16 %v414, %v413
      %v449 = vpack.c.b16 %v416, %v415
      %v450 = vpack.c.b16 %v418, %v417
      %483 = vmatprep.subr.bf16.mxu0 0
      %484 = vmatpush1.bf16.msra.mxu0 %v426
      %485 = vmatprep.subr.bf16.mxu0 0
      %486 = vmatpush1.bf16.msra.mxu0 %v425
      %487 = vmatprep.subr.bf16.mxu0 0
      %488 = vmatpush1.bf16.msra.mxu0 %v424
      %489 = vmatprep.subr.bf16.mxu0 0
      %490 = vmatpush1.bf16.msra.mxu0 %v423
      %491 = vmatprep.subr.bf16.mxu0 0
      %492 = vmatpush1.bf16.msra.mxu0 %v422
      %493 = vmatprep.subr.bf16.mxu0 0
      %494 = vmatpush1.bf16.msra.mxu0 %v421
      %495 = vmatprep.subr.bf16.mxu0 0
      %496 = vmatpush1.bf16.msra.mxu0 %v420
      %497 = vmatprep.subr.bf16.mxu0 0
      %498 = vmatpush1.bf16.msra.mxu0 %v419
      %499 = vmatprep.subr.bf16.mxu0 0
      %500 = vmatpush2.bf16.msra.mxu0 %v434
      %501 = vmatprep.subr.bf16.mxu0 0
      %502 = vmatpush2.bf16.msra.mxu0 %v433
      %503 = vmatprep.subr.bf16.mxu0 0
      %504 = vmatpush2.bf16.msra.mxu0 %v432
      %505 = vmatprep.subr.bf16.mxu0 0
      %506 = vmatpush2.bf16.msra.mxu0 %v431
      %507 = vmatprep.subr.bf16.mxu0 0
      %508 = vmatpush2.bf16.msra.mxu0 %v430
      %509 = vmatprep.subr.bf16.mxu0 0
      %510 = vmatpush2.bf16.msra.mxu0 %v429
      %511 = vmatprep.subr.bf16.mxu0 0
      %512 = vmatpush2.bf16.msra.mxu0 %v428
      %513 = vmatprep.subr.bf16.mxu0 0
      %514 = vmatpush2.bf16.msra.mxu0 %v427
      %515 = vmatprep.mubr.bf16.mxu0 %v284
      %516 = vmatmul.mubr.bf16.gmra.mxu0 %v277
      %v517 = vpop.f32.mrf.mxu0
      %v518 = vadd.f32 0.0, %v517
      %v519 = vpop.f32.mrf.mxu0
      %v520 = vpop.f32.mrf.mxu0
      %v521 = vpop.f32.mrf.mxu0
      %522 = vdwg.mxu0
      %523 = vmatprep.subr.bf16.mxu0 0
      %524 = vmatpush1.bf16.msra.mxu0 %v442
      %525 = vmatprep.subr.bf16.mxu0 0
      %526 = vmatpush1.bf16.msra.mxu0 %v441
      %527 = vmatprep.subr.bf16.mxu0 0
      %528 = vmatpush1.bf16.msra.mxu0 %v440
      %529 = vmatprep.subr.bf16.mxu0 0
      %530 = vmatpush1.bf16.msra.mxu0 %v439
      %531 = vmatprep.subr.bf16.mxu0 0
      %532 = vmatpush1.bf16.msra.mxu0 %v438
      %533 = vmatprep.subr.bf16.mxu0 0
      %534 = vmatpush1.bf16.msra.mxu0 %v437
      %535 = vmatprep.subr.bf16.mxu0 0
      %536 = vmatpush1.bf16.msra.mxu0 %v436
      %537 = vmatprep.subr.bf16.mxu0 0
      %538 = vmatpush1.bf16.msra.mxu0 %v435
      %539 = vmatprep.subr.bf16.mxu0 0
      %540 = vmatpush2.bf16.msra.mxu0 %v450
      %541 = vmatprep.subr.bf16.mxu0 0
      %542 = vmatpush2.bf16.msra.mxu0 %v449
      %543 = vmatprep.subr.bf16.mxu0 0
      %544 = vmatpush2.bf16.msra.mxu0 %v448
      %545 = vmatprep.subr.bf16.mxu0 0
      %546 = vmatpush2.bf16.msra.mxu0 %v447
      %547 = vmatprep.subr.bf16.mxu0 0
      %548 = vmatpush2.bf16.msra.mxu0 %v446
      %549 = vmatprep.subr.bf16.mxu0 0
      %550 = vmatpush2.bf16.msra.mxu0 %v445
      %551 = vmatprep.subr.bf16.mxu0 0
      %552 = vmatpush2.bf16.msra.mxu0 %v444
      %553 = vmatprep.subr.bf16.mxu0 0
      %554 = vmatpush2.bf16.msra.mxu0 %v443
      %555 = vmatprep.mubr.bf16.mxu0 %v286
      %556 = vmatmul.mubr.bf16.gmra.mxu0 %v285
      %v557 = vpop.f32.mrf.mxu0
      %v558 = vadd.f32 %v518, %v557
      %v559 = vpop.f32.mrf.mxu0
      %v560 = vpop.f32.mrf.mxu0
      %v561 = vpop.f32.mrf.mxu0
      %562 = vdwg.mxu0
      %v563 = vadd.f32 %v196, %v558
      %vm564 = vcmask 156672
      %565 = vst.msk [vmem:[%s188] sm:$0x3] %vm564, %v563
      %p566 = scmp.lt.s32.totalorder %s17, 1
      %s567 = scalar_select %p566, %s17, 1
      %s568 = smul.addr %s567, 2
      %s569 = scalar_lea.vmem %s2, %s568
      // Predicated region
      $region33: #{vae_forward.8} parent=27 // pred_check
        %p570 = pneg %p99
      $region34: #{vae_forward.8} parent=27 // pred_check_branch
        %572 = sbr.rel (%p570) target = $region36
      $region35: #{vae_forward.8} parent=27 // pred_region
        _
      $region36: #{vae_forward.8} parent=27 // pred_fallthru
        _
    $region28: #{vae_forward.8} parent=5 // pred_fallthru
      _
    %p573 = scmp.le.s32.totalorder 2, %s8
    // Predicated region
    $region37: #{vae_forward.8} parent=5 // pred_check
      %p574 = pneg %p573
    $region38: #{vae_forward.8} parent=5 // pred_check_branch
      %576 = sbr.rel (%p574) target = $region40
    $region39: #{vae_forward.8} parent=5 // pred_region
      %s577 = ssub.s32 %s8, 2
      // Predicated region
      $region41: #{vae_forward.8} parent=39 // pred_check
        %p578 = pneg %p105
      $region42: #{vae_forward.8} parent=39 // pred_check_branch
        %580 = sbr.rel (%p578) target = $region44
      $region43: #{vae_forward.8} parent=39 // pred_region
        %p581 = scmp.lt.s32.totalorder %s19, 1
        %s582 = scalar_select %p581, %s19, 1
        %s583 = smul.addr %s582, 2
        %s584 = scalar_lea.vmem %s2, %s583
      $region44: #{vae_forward.8} parent=39 // pred_fallthru
        _
    $region40: #{vae_forward.8} parent=5 // pred_fallthru
      _
  $region6: #{vae_forward.8} parent=0 // loop_footer
    %s12 = sadd.s32 1, %s8
  $region7: #{vae_forward.8} parent=0 // loop_footer_branch
    %7 = sbr.rel target = $region3
  $region8: #{vae_forward.8} parent=0 // loop_exit
    _

// kernel: vae_forward.10
$region0: #{vae_forward.10}
  #allocation0 [shape = 'u32[]', space=smem, size = 0x4, offset = 0x4, fixed_abs, tag = 'smem constant byte address 0x4 - core index']
  #allocation1 [shape = 'u32[144,128]{1,0:T(1,128)}', space=vmem, size = 0x12000, scoped, tag = 'internal scratch']
  #allocation2 [shape = 'f32[50,128]{1,0:T(8,128)}', space=vmem, size = 0x7000, scoped, tag = 'scratch operand']
  %s0 = inlined_call_operand.vmem [shape: bf16[50,256], index: 0, kind: input, shape index: {}]
  %s1 = inlined_call_operand.vmem [shape: bf16[256,128], index: 1, kind: input, shape index: {}]
  %s2 = inlined_call_operand.vmem [shape: f32[1,128], index: 2, kind: input, shape index: {}]
  %s3 = inlined_call_operand.vmem [shape: f32[1,128], index: 3, kind: input, shape index: {}]
  %s4 = inlined_call_operand.vmem [shape: f32[1,128], index: 4, kind: input, shape index: {}]
  %s5 = inlined_call_operand.vmem [shape: bf16[50,128], index: 5, kind: output, shape index: {}]
  %s6 = sld [smem:[#allocation0]]
  $region38: #{vae_forward.10} parent=0
    _
  %s8 = ssub.s32 1, %s6
  %s9 = scalar_select 0, %s8, %s6
  // Predicated region
  $region2: #{vae_forward.10} parent=0 // pred_check
    _
  $region3: #{vae_forward.10} parent=0 // pred_check_branch
    %11 = sbr.rel (0) target = $region5
  $region4: #{vae_forward.10} parent=0 // pred_region
    _
  $region5: #{vae_forward.10} parent=0 // pred_fallthru
    _
  // Predicated region
  $region6: #{vae_forward.10} parent=0 // pred_check
    _
  $region7: #{vae_forward.10} parent=0 // pred_check_branch
    %13 = sbr.rel (0) target = $region9
  $region8: #{vae_forward.10} parent=0 // pred_region
    _
  $region9: #{vae_forward.10} parent=0 // pred_fallthru
    _
  // Predicated region
  $region10: #{vae_forward.10} parent=0 // pred_check
    _
  $region11: #{vae_forward.10} parent=0 // pred_check_branch
    %15 = sbr.rel (0) target = $region13
  $region12: #{vae_forward.10} parent=0 // pred_region
    _
  $region13: #{vae_forward.10} parent=0 // pred_fallthru
    _
  // Predicated region
  $region14: #{vae_forward.10} parent=0 // pred_check
    _
  $region15: #{vae_forward.10} parent=0 // pred_check_branch
    %17 = sbr.rel (0) target = $region17
  $region16: #{vae_forward.10} parent=0 // pred_region
    _
  $region17: #{vae_forward.10} parent=0 // pred_fallthru
    _
  // Predicated region
  $region18: #{vae_forward.10} parent=0 // pred_check
    _
  $region19: #{vae_forward.10} parent=0 // pred_check_branch
    %19 = sbr.rel (0) target = $region21
  $region20: #{vae_forward.10} parent=0 // pred_region
    _
  $region21: #{vae_forward.10} parent=0 // pred_fallthru
    _
  %p21 = scmp.eq.s32.totalorder 0, 0
  // Predicated region
  $region22: #{vae_forward.10} parent=0 // pred_check
    %p22 = pneg %p21
  $region23: #{vae_forward.10} parent=0 // pred_check_branch
    %24 = sbr.rel (%p22) target = $region25
  $region24: #{vae_forward.10} parent=0 // pred_region
    %25 = vst [vmem:[#allocation2] sm:$0xff] 0.0
    %26 = vst [vmem:[#allocation2 + $0x8] sm:$0xff] 0.0
    %27 = vst [vmem:[#allocation2 + $0x10] sm:$0xff] 0.0
    %28 = vst [vmem:[#allocation2 + $0x18] sm:$0xff] 0.0
    %29 = vst [vmem:[#allocation2 + $0x20] sm:$0xff] 0.0
    %30 = vst [vmem:[#allocation2 + $0x28] sm:$0xff] 0.0
    %31 = vst [vmem:[#allocation2 + $0x30] sm:$0x3] 0.0
  $region25: #{vae_forward.10} parent=0 // pred_fallthru
    _
  %v32 = vld [vmem:[#allocation2] sm:$0xff]
  %v33 = vld [vmem:[#allocation2 + $0x8] sm:$0xff]
  %v34 = vld [vmem:[#allocation2 + $0x10] sm:$0xff]
  %v35 = vld [vmem:[#allocation2 + $0x18] sm:$0xff]
  %v36 = vld [vmem:[#allocation2 + $0x20] sm:$0xff]
  %v37 = vld [vmem:[#allocation2 + $0x28] sm:$0xff]
  %v38 = vld [vmem:[#allocation2 + $0x30] sm:$0x3]
  %v39 = vld [vmem:[%s0] sm:$0xff]
  %v40 = vld [vmem:[%s0 + $0x8] sm:$0xff]
  %v41 = vld [vmem:[%s0 + $0x10] sm:$0xff]
  %v42 = vld [vmem:[%s0 + $0x18] sm:$0xff]
  %v43 = vld [vmem:[%s0 + $0x20] sm:$0xff]
  %v44 = vld [vmem:[%s0 + $0x28] sm:$0xff]
  %v45 = vld [vmem:[%s0 + $0x30] sm:$0x11]
  %v46 = vld [vmem:[%s1] sm:$0xf]
  %v47 = vld [vmem:[%s1 + $0x4] sm:$0xf]
  %v48 = vld [vmem:[%s1 + $0x8] sm:$0xf]
  %v49 = vld [vmem:[%s1 + $0xc] sm:$0xf]
  %v50 = vld [vmem:[%s1 + $0x10] sm:$0xf]
  %v51 = vld [vmem:[%s1 + $0x14] sm:$0xf]
  %v52 = vld [vmem:[%s1 + $0x18] sm:$0xf]
  %v53 = vld [vmem:[%s1 + $0x1c] sm:$0xf]
  %v54 = vld [vmem:[%s1 + $0x20] sm:$0xf]
  %v55 = vld [vmem:[%s1 + $0x24] sm:$0xf]
  %v56 = vld [vmem:[%s1 + $0x28] sm:$0xf]
  %v57 = vld [vmem:[%s1 + $0x2c] sm:$0xf]
  %v58 = vld [vmem:[%s1 + $0x30] sm:$0xf]
  %v59 = vld [vmem:[%s1 + $0x34] sm:$0xf]
  %v60 = vld [vmem:[%s1 + $0x38] sm:$0xf]
  %v61 = vld [vmem:[%s1 + $0x3c] sm:$0xf]
  %v62 = vld [vmem:[%s1 + $0x40] sm:$0xf]
  %v63 = vld [vmem:[%s1 + $0x44] sm:$0xf]
  %v64 = vld [vmem:[%s1 + $0x48] sm:$0xf]
  %v65 = vld [vmem:[%s1 + $0x4c] sm:$0xf]
  %v66 = vld [vmem:[%s1 + $0x50] sm:$0xf]
  %v67 = vld [vmem:[%s1 + $0x54] sm:$0xf]
  %v68 = vld [vmem:[%s1 + $0x58] sm:$0xf]
  %v69 = vld [vmem:[%s1 + $0x5c] sm:$0xf]
  %v70 = vld [vmem:[%s1 + $0x60] sm:$0xf]
  %v71 = vld [vmem:[%s1 + $0x64] sm:$0xf]
  %v72 = vld [vmem:[%s1 + $0x68] sm:$0xf]
  %v73 = vld [vmem:[%s1 + $0x6c] sm:$0xf]
  %v74 = vld [vmem:[%s1 + $0x70] sm:$0xf]
  %v75 = vld [vmem:[%s1 + $0x74] sm:$0xf]
  %v76 = vld [vmem:[%s1 + $0x78] sm:$0xf]
  %v77 = vld [vmem:[%s1 + $0x7c] sm:$0xf]
  %v85 = vunpack.c.l.b16 %v39
  %v86 = vunpack.c.h.b16 %v39
  %v87 = vunpack.c.l.b16 %v40
  %v88 = vunpack.c.h.b16 %v40
  %v89 = vunpack.c.l.b16 %v41
  %v90 = vunpack.c.h.b16 %v41
  %v91 = vunpack.c.l.b16 %v42
  %v92 = vunpack.c.h.b16 %v42
  %v93 = vunpack.c.l.b16 %v43
  %v94 = vunpack.c.h.b16 %v43
  %v95 = vunpack.c.l.b16 %v44
  %v96 = vunpack.c.h.b16 %v44
  %v97 = vunpack.c.l.b16 %v45
  %v98 = vunpack.c.h.b16 %v45
  %v99 = vpack.c.b16 %v87, %v85
  %v100 = vpack.c.b16 %v88, %v86
  %v101 = vpack.c.b16 %v91, %v89
  %v102 = vpack.c.b16 %v92, %v90
  %v103 = vpack.c.b16 %v95, %v93
  %v104 = vpack.c.b16 %v96, %v94
  %v105 = vpack.c.b16 %v97, %v97
  %v106 = vpack.c.b16 %v98, %v98
  %v147 = vunpack.c.l.b16 %v46
  %v148 = vunpack.c.l.b16 %v47
  %v149 = vunpack.c.l.b16 %v48
  %v150 = vunpack.c.l.b16 %v49
  %v151 = vunpack.c.l.b16 %v50
  %v152 = vunpack.c.l.b16 %v51
  %v153 = vunpack.c.l.b16 %v52
  %v154 = vunpack.c.l.b16 %v53
  %v155 = vunpack.c.l.b16 %v54
  %v156 = vunpack.c.l.b16 %v55
  %v157 = vunpack.c.l.b16 %v56
  %v158 = vunpack.c.l.b16 %v57
  %v159 = vunpack.c.l.b16 %v58
  %v160 = vunpack.c.l.b16 %v59
  %v161 = vunpack.c.l.b16 %v60
  %v162 = vunpack.c.l.b16 %v61
  %v163 = vunpack.c.l.b16 %v62
  %v164 = vunpack.c.l.b16 %v63
  %v165 = vunpack.c.l.b16 %v64
  %v166 = vunpack.c.l.b16 %v65
  %v167 = vunpack.c.l.b16 %v66
  %v168 = vunpack.c.l.b16 %v67
  %v169 = vunpack.c.l.b16 %v68
  %v170 = vunpack.c.l.b16 %v69
  %v171 = vunpack.c.l.b16 %v70
  %v172 = vunpack.c.l.b16 %v71
  %v173 = vunpack.c.l.b16 %v72
  %v174 = vunpack.c.l.b16 %v73
  %v175 = vunpack.c.l.b16 %v74
  %v176 = vunpack.c.l.b16 %v75
  %v177 = vunpack.c.l.b16 %v76
  %v178 = vunpack.c.l.b16 %v77
  %v179 = vpack.c.b16 %v148, %v147
  %v180 = vpack.c.b16 %v150, %v149
  %v181 = vpack.c.b16 %v152, %v151
  %v182 = vpack.c.b16 %v154, %v153
  %v183 = vpack.c.b16 %v156, %v155
  %v184 = vpack.c.b16 %v158, %v157
  %v185 = vpack.c.b16 %v160, %v159
  %v186 = vpack.c.b16 %v162, %v161
  %v187 = vpack.c.b16 %v164, %v163
  %v188 = vpack.c.b16 %v166, %v165
  %v189 = vpack.c.b16 %v168, %v167
  %v190 = vpack.c.b16 %v170, %v169
  %v191 = vpack.c.b16 %v172, %v171
  %v192 = vpack.c.b16 %v174, %v173
  %v193 = vpack.c.b16 %v176, %v175
  %v194 = vpack.c.b16 %v178, %v177
  %211 = vmatprep.subr.bf16.mxu0 0
  %212 = vmatpush1.bf16.msra.mxu0 %v186
  %213 = vmatprep.subr.bf16.mxu0 0
  %214 = vmatpush1.bf16.msra.mxu0 %v185
  %215 = vmatprep.subr.bf16.mxu0 0
  %216 = vmatpush1.bf16.msra.mxu0 %v184
  %217 = vmatprep.subr.bf16.mxu0 0
  %218 = vmatpush1.bf16.msra.mxu0 %v183
  %219 = vmatprep.subr.bf16.mxu0 0
  %220 = vmatpush1.bf16.msra.mxu0 %v182
  %221 = vmatprep.subr.bf16.mxu0 0
  %222 = vmatpush1.bf16.msra.mxu0 %v181
  %223 = vmatprep.subr.bf16.mxu0 0
  %224 = vmatpush1.bf16.msra.mxu0 %v180
  %225 = vmatprep.subr.bf16.mxu0 0
  %226 = vmatpush1.bf16.msra.mxu0 %v179
  %227 = vmatprep.subr.bf16.mxu0 0
  %228 = vmatpush2.bf16.msra.mxu0 %v194
  %229 = vmatprep.subr.bf16.mxu0 0
  %230 = vmatpush2.bf16.msra.mxu0 %v193
  %231 = vmatprep.subr.bf16.mxu0 0
  %232 = vmatpush2.bf16.msra.mxu0 %v192
  %233 = vmatprep.subr.bf16.mxu0 0
  %234 = vmatpush2.bf16.msra.mxu0 %v191
  %235 = vmatprep.subr.bf16.mxu0 0
  %236 = vmatpush2.bf16.msra.mxu0 %v190
  %237 = vmatprep.subr.bf16.mxu0 0
  %238 = vmatpush2.bf16.msra.mxu0 %v189
  %239 = vmatprep.subr.bf16.mxu0 0
  %240 = vmatpush2.bf16.msra.mxu0 %v188
  %241 = vmatprep.subr.bf16.mxu0 0
  %242 = vmatpush2.bf16.msra.mxu0 %v187
  %243 = vmatprep.mubr.bf16.mxu0 %v100
  %244 = vmatmul.mubr.bf16.gmra.mxu0 %v99
  %v245 = vpop.f32.mrf.mxu0
  %v246 = vadd.f32 0.0, %v245
  %v247 = vpop.f32.mrf.mxu0
  %v248 = vpop.f32.mrf.mxu0
  %v249 = vadd.f32 0.0, %v248
  %v250 = vpop.f32.mrf.mxu0
  %251 = vmatprep.mubr.bf16.mxu0 %v102
  %252 = vmatmul.mubr.bf16.gmra.mxu0 %v101
  %v253 = vpop.f32.mrf.mxu0
  %v254 = vadd.f32 0.0, %v253
  %v255 = vpop.f32.mrf.mxu0
  %v256 = vpop.f32.mrf.mxu0
  %v257 = vadd.f32 0.0, %v256
  %v258 = vpop.f32.mrf.mxu0
  %259 = vmatprep.mubr.bf16.mxu0 %v104
  %260 = vmatmul.mubr.bf16.gmra.mxu0 %v103
  %v261 = vpop.f32.mrf.mxu0
  %v262 = vadd.f32 0.0, %v261
  %v263 = vpop.f32.mrf.mxu0
  %v264 = vpop.f32.mrf.mxu0
  %v265 = vadd.f32 0.0, %v264
  %v266 = vpop.f32.mrf.mxu0
  %267 = vmatprep.mubr.bf16.mxu0 %v106
  %268 = vmatmul.mubr.bf16.gmra.mxu0 %v105
  %v269 = vpop.f32.mrf.mxu0
  %v270 = vadd.f32 0.0, %v269
  %v271 = vpop.f32.mrf.mxu0
  %v272 = vpop.f32.mrf.mxu0
  %v273 = vpop.f32.mrf.mxu0
  %274 = vdwg.mxu0
  %v275 = vadd.f32 %v32, %v246
  %v276 = vadd.f32 %v33, %v249
  %v277 = vadd.f32 %v34, %v254
  %v278 = vadd.f32 %v35, %v257
  %v279 = vadd.f32 %v36, %v262
  %v280 = vadd.f32 %v37, %v265
  %v281 = vadd.f32 %v38, %v270
  %282 = vst [vmem:[#allocation2] sm:$0xff] %v275
  %283 = vst [vmem:[#allocation2 + $0x8] sm:$0xff] %v276
  %284 = vst [vmem:[#allocation2 + $0x10] sm:$0xff] %v277
  %285 = vst [vmem:[#allocation2 + $0x18] sm:$0xff] %v278
  %286 = vst [vmem:[#allocation2 + $0x20] sm:$0xff] %v279
  %287 = vst [vmem:[#allocation2 + $0x28] sm:$0xff] %v280
  %288 = vst [vmem:[#allocation2 + $0x30] sm:$0x3] %v281
  // Predicated region
  $region26: #{vae_forward.10} parent=0 // pred_check
    %p289 = pneg %p21
  $region27: #{vae_forward.10} parent=0 // pred_check_branch
    %291 = sbr.rel (%p289) target = $region29
  $region28: #{vae_forward.10} parent=0 // pred_region
    %v292 = vld [vmem:[#allocation2] sm:$0xff]
    %v293 = vld [vmem:[#allocation2 + $0x8] sm:$0xff]
    %v294 = vld [vmem:[#allocation2 + $0x10] sm:$0xff]
    %v295 = vld [vmem:[#allocation2 + $0x18] sm:$0xff]
    %v296 = vld [vmem:[#allocation2 + $0x20] sm:$0xff]
    %v297 = vld [vmem:[#allocation2 + $0x28] sm:$0xff]
    %v298 = vld [vmem:[#allocation2 + $0x30] sm:$0x3]
    %v299 = vld [vmem:[%s2] sm:$0x1]
    %v301 = vlaneseq
    %v302 = vshrl.u32 %v301, 7
    %v303 = vsub.s32 0, %v302
    %v304 = vrot.slane %v299, %v303
    %v306 = vadd.f32 %v292, %v304
    %v307 = vadd.f32 %v293, %v304
    %v308 = vadd.f32 %v294, %v304
    %v309 = vadd.f32 %v295, %v304
    %v310 = vadd.f32 %v296, %v304
    %v311 = vadd.f32 %v297, %v304
    %v312 = vadd.f32 %v298, %v304
    %v313 = vmax.f32 %v306, 0.0
    %v314 = vmax.f32 %v307, 0.0
    %v315 = vmax.f32 %v308, 0.0
    %v316 = vmax.f32 %v309, 0.0
    %v317 = vmax.f32 %v310, 0.0
    %v318 = vmax.f32 %v311, 0.0
    %v319 = vmax.f32 %v312, 0.0
    %v320 = vld [vmem:[%s3] sm:$0x1]
    %v322 = vlaneseq
    %v323 = vshrl.u32 %v322, 7
    %v324 = vsub.s32 0, %v323
    %v325 = vrot.slane %v320, %v324
    %v327 = vmul.f32 %v313, %v325
    %v328 = vmul.f32 %v314, %v325
    %v329 = vmul.f32 %v315, %v325
    %v330 = vmul.f32 %v316, %v325
    %v331 = vmul.f32 %v317, %v325
    %v332 = vmul.f32 %v318, %v325
    %v333 = vmul.f32 %v319, %v325
    %v334 = vld [vmem:[%s4] sm:$0x1]
    %v336 = vlaneseq
    %v337 = vshrl.u32 %v336, 7
    %v338 = vsub.s32 0, %v337
    %v339 = vrot.slane %v334, %v338
    %v341 = vadd.f32 %v327, %v339
    %v342 = vadd.f32 %v328, %v339
    %v343 = vadd.f32 %v329, %v339
    %v344 = vadd.f32 %v330, %v339
    %v345 = vadd.f32 %v331, %v339
    %v346 = vadd.f32 %v332, %v339
    %v347 = vadd.f32 %v333, %v339
    %v348 = vpack.c.bf16 %v342, %v341
    %v349 = vpack.c.bf16 %v344, %v343
    %v350 = vpack.c.bf16 %v346, %v345
    %v351 = vpack.c.bf16 %v347, %v347
    %v356 = vunpack.c.l.b16 %v348
    %v357 = vunpack.c.h.b16 %v348
    %v358 = vunpack.c.l.b16 %v349
    %v359 = vunpack.c.h.b16 %v349
    %v360 = vunpack.c.l.b16 %v350
    %v361 = vunpack.c.h.b16 %v350
    %v362 = vunpack.c.l.b16 %v351
    %v363 = vpack.c.b16 %v356, %v356
    %v364 = vpack.c.b16 %v357, %v357
    %v365 = vpack.c.b16 %v358, %v358
    %v366 = vpack.c.b16 %v359, %v359
    %v367 = vpack.c.b16 %v360, %v360
    %v368 = vpack.c.b16 %v361, %v361
    %v369 = vpack.c.b16 %v362, %v362
    %377 = vst [vmem:[%s5] sm:$0xf] %v363
    %378 = vst [vmem:[%s5 + $0x4] sm:$0xf] %v364
    %379 = vst [vmem:[%s5 + $0x8] sm:$0xf] %v365
    %380 = vst [vmem:[%s5 + $0xc] sm:$0xf] %v366
    %381 = vst [vmem:[%s5 + $0x10] sm:$0xf] %v367
    %382 = vst [vmem:[%s5 + $0x14] sm:$0xf] %v368
    %383 = vst [vmem:[%s5 + $0x18] sm:$0x1] %v369
  $region29: #{vae_forward.10} parent=0 // pred_fallthru
    _
  // Predicated region
  $region30: #{vae_forward.10} parent=0 // pred_check
    _
  $region31: #{vae_forward.10} parent=0 // pred_check_branch
    %385 = sbr.rel (0) target = $region33
  $region32: #{vae_forward.10} parent=0 // pred_region
    _
  $region33: #{vae_forward.10} parent=0 // pred_fallthru
    _
  // Predicated region
  $region34: #{vae_forward.10} parent=0 // pred_check
    _
  $region35: #{vae_forward.10} parent=0 // pred_check_branch
    %387 = sbr.rel (0) target = $region37
  $region36: #{vae_forward.10} parent=0 // pred_region
    _
  $region37: #{vae_forward.10} parent=0 // pred_fallthru
    _

// kernel: vae_forward.11
$region0: #{vae_forward.11}
  #allocation0 [shape = 'u32[]', space=smem, size = 0x4, offset = 0x4, fixed_abs, tag = 'smem constant byte address 0x4 - core index']
  #allocation1 [shape = 'u32[144,128]{1,0:T(1,128)}', space=vmem, size = 0x12000, scoped, tag = 'internal scratch']
  #allocation2 [shape = 'f32[162,20]{1,0:T(8,128)}', space=vmem, size = 0x15000, scoped, tag = 'scratch operand']
  %s0 = inlined_call_operand.vmem [shape: bf16[162,128], index: 0, kind: input, shape index: {}]
  %s1 = inlined_call_operand.vmem [shape: bf16[128,20], index: 1, kind: input, shape index: {}]
  %s2 = inlined_call_operand.vmem [shape: f32[1,20], index: 2, kind: input, shape index: {}]
  %s3 = inlined_call_operand.vmem [shape: bf16[162,20], index: 3, kind: output, shape index: {}]
  %s4 = sld [smem:[#allocation0]]
  $region30: #{vae_forward.11} parent=0
    _
  %s6 = ssub.s32 1, %s4
  %s7 = scalar_select 0, %s6, %s4
  // Predicated region
  $region2: #{vae_forward.11} parent=0 // pred_check
    _
  $region3: #{vae_forward.11} parent=0 // pred_check_branch
    %9 = sbr.rel (0) target = $region5
  $region4: #{vae_forward.11} parent=0 // pred_region
    _
  $region5: #{vae_forward.11} parent=0 // pred_fallthru
    _
  // Predicated region
  $region6: #{vae_forward.11} parent=0 // pred_check
    _
  $region7: #{vae_forward.11} parent=0 // pred_check_branch
    %11 = sbr.rel (0) target = $region9
  $region8: #{vae_forward.11} parent=0 // pred_region
    _
  $region9: #{vae_forward.11} parent=0 // pred_fallthru
    _
  // Predicated region
  $region10: #{vae_forward.11} parent=0 // pred_check
    _
  $region11: #{vae_forward.11} parent=0 // pred_check_branch
    %13 = sbr.rel (0) target = $region13
  $region12: #{vae_forward.11} parent=0 // pred_region
    _
  $region13: #{vae_forward.11} parent=0 // pred_fallthru
    _
  %p15 = scmp.eq.s32.totalorder 0, 0
  // Predicated region
  $region14: #{vae_forward.11} parent=0 // pred_check
    %p16 = pneg %p15
  $region15: #{vae_forward.11} parent=0 // pred_check_branch
    %18 = sbr.rel (%p16) target = $region17
  $region16: #{vae_forward.11} parent=0 // pred_region
    %vm19 = vcmask 162816
    %20 = vst.msk [vmem:[#allocation2] sm:$0xff] %vm19, 0.0
    %21 = vst.msk [vmem:[#allocation2 + $0x8] sm:$0xff] %vm19, 0.0
    %22 = vst.msk [vmem:[#allocation2 + $0x10] sm:$0xff] %vm19, 0.0
    %23 = vst.msk [vmem:[#allocation2 + $0x18] sm:$0xff] %vm19, 0.0
    %24 = vst.msk [vmem:[#allocation2 + $0x20] sm:$0xff] %vm19, 0.0
    %25 = vst.msk [vmem:[#allocation2 + $0x28] sm:$0xff] %vm19, 0.0
    %26 = vst.msk [vmem:[#allocation2 + $0x30] sm:$0xff] %vm19, 0.0
    %27 = vst.msk [vmem:[#allocation2 + $0x38] sm:$0xff] %vm19, 0.0
    %28 = vst.msk [vmem:[#allocation2 + $0x40] sm:$0xff] %vm19, 0.0
    %29 = vst.msk [vmem:[#allocation2 + $0x48] sm:$0xff] %vm19, 0.0
    %30 = vst.msk [vmem:[#allocation2 + $0x50] sm:$0xff] %vm19, 0.0
    %31 = vst.msk [vmem:[#allocation2 + $0x58] sm:$0xff] %vm19, 0.0
    %32 = vst.msk [vmem:[#allocation2 + $0x60] sm:$0xff] %vm19, 0.0
    %33 = vst.msk [vmem:[#allocation2 + $0x68] sm:$0xff] %vm19, 0.0
    %34 = vst.msk [vmem:[#allocation2 + $0x70] sm:$0xff] %vm19, 0.0
    %35 = vst.msk [vmem:[#allocation2 + $0x78] sm:$0xff] %vm19, 0.0
    %36 = vst.msk [vmem:[#allocation2 + $0x80] sm:$0xff] %vm19, 0.0
    %37 = vst.msk [vmem:[#allocation2 + $0x88] sm:$0xff] %vm19, 0.0
    %38 = vst.msk [vmem:[#allocation2 + $0x90] sm:$0xff] %vm19, 0.0
    %39 = vst.msk [vmem:[#allocation2 + $0x98] sm:$0xff] %vm19, 0.0
    %vm40 = vcmask 156672
    %41 = vst.msk [vmem:[#allocation2 + $0xa0] sm:$0x3] %vm40, 0.0
  $region17: #{vae_forward.11} parent=0 // pred_fallthru
    _
  %v42 = vld [vmem:[#allocation2] sm:$0xff]
  %v43 = vld [vmem:[#allocation2 + $0x8] sm:$0xff]
  %v44 = vld [vmem:[#allocation2 + $0x10] sm:$0xff]
  %v45 = vld [vmem:[#allocation2 + $0x18] sm:$0xff]
  %v46 = vld [vmem:[#allocation2 + $0x20] sm:$0xff]
  %v47 = vld [vmem:[#allocation2 + $0x28] sm:$0xff]
  %v48 = vld [vmem:[#allocation2 + $0x30] sm:$0xff]
  %v49 = vld [vmem:[#allocation2 + $0x38] sm:$0xff]
  %v50 = vld [vmem:[#allocation2 + $0x40] sm:$0xff]
  %v51 = vld [vmem:[#allocation2 + $0x48] sm:$0xff]
  %v52 = vld [vmem:[#allocation2 + $0x50] sm:$0xff]
  %v53 = vld [vmem:[#allocation2 + $0x58] sm:$0xff]
  %v54 = vld [vmem:[#allocation2 + $0x60] sm:$0xff]
  %v55 = vld [vmem:[#allocation2 + $0x68] sm:$0xff]
  %v56 = vld [vmem:[#allocation2 + $0x70] sm:$0xff]
  %v57 = vld [vmem:[#allocation2 + $0x78] sm:$0xff]
  %v58 = vld [vmem:[#allocation2 + $0x80] sm:$0xff]
  %v59 = vld [vmem:[#allocation2 + $0x88] sm:$0xff]
  %v60 = vld [vmem:[#allocation2 + $0x90] sm:$0xff]
  %v61 = vld [vmem:[#allocation2 + $0x98] sm:$0xff]
  %v62 = vld [vmem:[#allocation2 + $0xa0] sm:$0x3]
  %v63 = vld [vmem:[%s0] sm:$0xf]
  %v64 = vld [vmem:[%s0 + $0x4] sm:$0xf]
  %v65 = vld [vmem:[%s0 + $0x8] sm:$0xf]
  %v66 = vld [vmem:[%s0 + $0xc] sm:$0xf]
  %v67 = vld [vmem:[%s0 + $0x10] sm:$0xf]
  %v68 = vld [vmem:[%s0 + $0x14] sm:$0xf]
  %v69 = vld [vmem:[%s0 + $0x18] sm:$0xf]
  %v70 = vld [vmem:[%s0 + $0x1c] sm:$0xf]
  %v71 = vld [vmem:[%s0 + $0x20] sm:$0xf]
  %v72 = vld [vmem:[%s0 + $0x24] sm:$0xf]
  %v73 = vld [vmem:[%s0 + $0x28] sm:$0xf]
  %v74 = vld [vmem:[%s0 + $0x2c] sm:$0xf]
  %v75 = vld [vmem:[%s0 + $0x30] sm:$0xf]
  %v76 = vld [vmem:[%s0 + $0x34] sm:$0xf]
  %v77 = vld [vmem:[%s0 + $0x38] sm:$0xf]
  %v78 = vld [vmem:[%s0 + $0x3c] sm:$0xf]
  %v79 = vld [vmem:[%s0 + $0x40] sm:$0xf]
  %v80 = vld [vmem:[%s0 + $0x44] sm:$0xf]
  %v81 = vld [vmem:[%s0 + $0x48] sm:$0xf]
  %v82 = vld [vmem:[%s0 + $0x4c] sm:$0xf]
  %v83 = vld [vmem:[%s0 + $0x50] sm:$0x1]
  %v84 = vld [vmem:[%s1] sm:$0xf]
  %v85 = vld [vmem:[%s1 + $0x4] sm:$0xf]
  %v86 = vld [vmem:[%s1 + $0x8] sm:$0xf]
  %v87 = vld [vmem:[%s1 + $0xc] sm:$0xf]
  %v88 = vld [vmem:[%s1 + $0x10] sm:$0xf]
  %v89 = vld [vmem:[%s1 + $0x14] sm:$0xf]
  %v90 = vld [vmem:[%s1 + $0x18] sm:$0xf]
  %v91 = vld [vmem:[%s1 + $0x1c] sm:$0xf]
  %v92 = vld [vmem:[%s1 + $0x20] sm:$0xf]
  %v93 = vld [vmem:[%s1 + $0x24] sm:$0xf]
  %v94 = vld [vmem:[%s1 + $0x28] sm:$0xf]
  %v95 = vld [vmem:[%s1 + $0x2c] sm:$0xf]
  %v96 = vld [vmem:[%s1 + $0x30] sm:$0xf]
  %v97 = vld [vmem:[%s1 + $0x34] sm:$0xf]
  %v98 = vld [vmem:[%s1 + $0x38] sm:$0xf]
  %v99 = vld [vmem:[%s1 + $0x3c] sm:$0xf]
  %v121 = vunpack.c.l.b16 %v63
  %v122 = vunpack.c.l.b16 %v64
  %v123 = vunpack.c.l.b16 %v65
  %v124 = vunpack.c.l.b16 %v66
  %v125 = vunpack.c.l.b16 %v67
  %v126 = vunpack.c.l.b16 %v68
  %v127 = vunpack.c.l.b16 %v69
  %v128 = vunpack.c.l.b16 %v70
  %v129 = vunpack.c.l.b16 %v71
  %v130 = vunpack.c.l.b16 %v72
  %v131 = vunpack.c.l.b16 %v73
  %v132 = vunpack.c.l.b16 %v74
  %v133 = vunpack.c.l.b16 %v75
  %v134 = vunpack.c.l.b16 %v76
  %v135 = vunpack.c.l.b16 %v77
  %v136 = vunpack.c.l.b16 %v78
  %v137 = vunpack.c.l.b16 %v79
  %v138 = vunpack.c.l.b16 %v80
  %v139 = vunpack.c.l.b16 %v81
  %v140 = vunpack.c.l.b16 %v82
  %v141 = vunpack.c.l.b16 %v83
  %v142 = vpack.c.b16 %v122, %v121
  %v143 = vpack.c.b16 %v124, %v123
  %v144 = vpack.c.b16 %v126, %v125
  %v145 = vpack.c.b16 %v128, %v127
  %v146 = vpack.c.b16 %v130, %v129
  %v147 = vpack.c.b16 %v132, %v131
  %v148 = vpack.c.b16 %v134, %v133
  %v149 = vpack.c.b16 %v136, %v135
  %v150 = vpack.c.b16 %v138, %v137
  %v151 = vpack.c.b16 %v140, %v139
  %v152 = vpack.c.b16 %v141, %v141
  %v180 = vunpack.c.l.b16 %v84
  %v181 = vunpack.c.l.b16 %v85
  %v182 = vunpack.c.l.b16 %v86
  %v183 = vunpack.c.l.b16 %v87
  %v184 = vunpack.c.l.b16 %v88
  %v185 = vunpack.c.l.b16 %v89
  %v186 = vunpack.c.l.b16 %v90
  %v187 = vunpack.c.l.b16 %v91
  %v188 = vunpack.c.l.b16 %v92
  %v189 = vunpack.c.l.b16 %v93
  %v190 = vunpack.c.l.b16 %v94
  %v191 = vunpack.c.l.b16 %v95
  %v192 = vunpack.c.l.b16 %v96
  %v193 = vunpack.c.l.b16 %v97
  %v194 = vunpack.c.l.b16 %v98
  %v195 = vunpack.c.l.b16 %v99
  %v196 = vpack.c.b16 %v181, %v180
  %v197 = vpack.c.b16 %v183, %v182
  %v198 = vpack.c.b16 %v185, %v184
  %v199 = vpack.c.b16 %v187, %v186
  %v200 = vpack.c.b16 %v189, %v188
  %v201 = vpack.c.b16 %v191, %v190
  %v202 = vpack.c.b16 %v193, %v192
  %v203 = vpack.c.b16 %v195, %v194
  %212 = vmatprep.subr.bf16.mxu0 0
  %213 = vmatpush1.bf16.msra.mxu0 %v203
  %214 = vmatprep.subr.bf16.mxu0 0
  %215 = vmatpush1.bf16.msra.mxu0 %v202
  %216 = vmatprep.subr.bf16.mxu0 0
  %217 = vmatpush1.bf16.msra.mxu0 %v201
  %218 = vmatprep.subr.bf16.mxu0 0
  %219 = vmatpush1.bf16.msra.mxu0 %v200
  %220 = vmatprep.subr.bf16.mxu0 0
  %221 = vmatpush1.bf16.msra.mxu0 %v199
  %222 = vmatprep.subr.bf16.mxu0 0
  %223 = vmatpush1.bf16.msra.mxu0 %v198
  %224 = vmatprep.subr.bf16.mxu0 0
  %225 = vmatpush1.bf16.msra.mxu0 %v197
  %226 = vmatprep.subr.bf16.mxu0 0
  %227 = vmatpush1.bf16.msra.mxu0 %v196
  %228 = vmatprep.subr.bf16.mxu0 0
  %229 = vmatpush2.bf16.msra.mxu0 0
  %230 = vmatprep.subr.bf16.mxu0 0
  %231 = vmatpush2.bf16.msra.mxu0 0
  %232 = vmatprep.subr.bf16.mxu0 0
  %233 = vmatpush2.bf16.msra.mxu0 0
  %234 = vmatprep.subr.bf16.mxu0 0
  %235 = vmatpush2.bf16.msra.mxu0 0
  %236 = vmatprep.subr.bf16.mxu0 0
  %237 = vmatpush2.bf16.msra.mxu0 0
  %238 = vmatprep.subr.bf16.mxu0 0
  %239 = vmatpush2.bf16.msra.mxu0 0
  %240 = vmatprep.subr.bf16.mxu0 0
  %241 = vmatpush2.bf16.msra.mxu0 0
  %242 = vmatprep.subr.bf16.mxu0 0
  %243 = vmatpush2.bf16.msra.mxu0 0
  %244 = vmatprep.mubr.bf16.mxu0 0
  %245 = vmatmul.mubr.bf16.gmra.mxu0 %v142
  %v246 = vpop.f32.mrf.mxu0
  %v247 = vadd.f32 0.0, %v246
  %v248 = vpop.f32.mrf.mxu0
  %v249 = vpop.f32.mrf.mxu0
  %v250 = vadd.f32 0.0, %v249
  %v251 = vpop.f32.mrf.mxu0
  %252 = vmatprep.mubr.bf16.mxu0 0
  %253 = vmatmul.mubr.bf16.gmra.mxu0 %v143
  %v254 = vpop.f32.mrf.mxu0
  %v255 = vadd.f32 0.0, %v254
  %v256 = vpop.f32.mrf.mxu0
  %v257 = vpop.f32.mrf.mxu0
  %v258 = vadd.f32 0.0, %v257
  %v259 = vpop.f32.mrf.mxu0
  %260 = vmatprep.mubr.bf16.mxu0 0
  %261 = vmatmul.mubr.bf16.gmra.mxu0 %v144
  %v262 = vpop.f32.mrf.mxu0
  %v263 = vadd.f32 0.0, %v262
  %v264 = vpop.f32.mrf.mxu0
  %v265 = vpop.f32.mrf.mxu0
  %v266 = vadd.f32 0.0, %v265
  %v267 = vpop.f32.mrf.mxu0
  %268 = vmatprep.mubr.bf16.mxu0 0
  %269 = vmatmul.mubr.bf16.gmra.mxu0 %v145
  %v270 = vpop.f32.mrf.mxu0
  %v271 = vadd.f32 0.0, %v270
  %v272 = vpop.f32.mrf.mxu0
  %v273 = vpop.f32.mrf.mxu0
  %v274 = vadd.f32 0.0, %v273
  %v275 = vpop.f32.mrf.mxu0
  %276 = vmatprep.mubr.bf16.mxu0 0
  %277 = vmatmul.mubr.bf16.gmra.mxu0 %v146
  %v278 = vpop.f32.mrf.mxu0
  %v279 = vadd.f32 0.0, %v278
  %v280 = vpop.f32.mrf.mxu0
  %v281 = vpop.f32.mrf.mxu0
  %v282 = vadd.f32 0.0, %v281
  %v283 = vpop.f32.mrf.mxu0
  %284 = vmatprep.mubr.bf16.mxu0 0
  %285 = vmatmul.mubr.bf16.gmra.mxu0 %v147
  %v286 = vpop.f32.mrf.mxu0
  %v287 = vadd.f32 0.0, %v286
  %v288 = vpop.f32.mrf.mxu0
  %v289 = vpop.f32.mrf.mxu0
  %v290 = vadd.f32 0.0, %v289
  %v291 = vpop.f32.mrf.mxu0
  %292 = vmatprep.mubr.bf16.mxu0 0
  %293 = vmatmul.mubr.bf16.gmra.mxu0 %v148
  %v294 = vpop.f32.mrf.mxu0
  %v295 = vadd.f32 0.0, %v294
  %v296 = vpop.f32.mrf.mxu0
  %v297 = vpop.f32.mrf.mxu0
  %v298 = vadd.f32 0.0, %v297
  %v299 = vpop.f32.mrf.mxu0
  %300 = vmatprep.mubr.bf16.mxu0 0
  %301 = vmatmul.mubr.bf16.gmra.mxu0 %v149
  %v302 = vpop.f32.mrf.mxu0
  %v303 = vadd.f32 0.0, %v302
  %v304 = vpop.f32.mrf.mxu0
  %v305 = vpop.f32.mrf.mxu0
  %v306 = vadd.f32 0.0, %v305
  %v307 = vpop.f32.mrf.mxu0
  %308 = vmatprep.mubr.bf16.mxu0 0
  %309 = vmatmul.mubr.bf16.gmra.mxu0 %v150
  %v310 = vpop.f32.mrf.mxu0
  %v311 = vadd.f32 0.0, %v310
  %v312 = vpop.f32.mrf.mxu0
  %v313 = vpop.f32.mrf.mxu0
  %v314 = vadd.f32 0.0, %v313
  %v315 = vpop.f32.mrf.mxu0
  %316 = vmatprep.mubr.bf16.mxu0 0
  %317 = vmatmul.mubr.bf16.gmra.mxu0 %v151
  %v318 = vpop.f32.mrf.mxu0
  %v319 = vadd.f32 0.0, %v318
  %v320 = vpop.f32.mrf.mxu0
  %v321 = vpop.f32.mrf.mxu0
  %v322 = vadd.f32 0.0, %v321
  %v323 = vpop.f32.mrf.mxu0
  %324 = vmatprep.mubr.bf16.mxu0 0
  %325 = vmatmul.mubr.bf16.gmra.mxu0 %v152
  %v326 = vpop.f32.mrf.mxu0
  %v327 = vadd.f32 0.0, %v326
  %v328 = vpop.f32.mrf.mxu0
  %v329 = vpop.f32.mrf.mxu0
  %v330 = vpop.f32.mrf.mxu0
  %331 = vdwg.mxu0
  %v332 = vadd.f32 %v42, %v247
  %v333 = vadd.f32 %v43, %v250
  %v334 = vadd.f32 %v44, %v255
  %v335 = vadd.f32 %v45, %v258
  %v336 = vadd.f32 %v46, %v263
  %v337 = vadd.f32 %v47, %v266
  %v338 = vadd.f32 %v48, %v271
  %v339 = vadd.f32 %v49, %v274
  %v340 = vadd.f32 %v50, %v279
  %v341 = vadd.f32 %v51, %v282
  %v342 = vadd.f32 %v52, %v287
  %v343 = vadd.f32 %v53, %v290
  %v344 = vadd.f32 %v54, %v295
  %v345 = vadd.f32 %v55, %v298
  %v346 = vadd.f32 %v56, %v303
  %v347 = vadd.f32 %v57, %v306
  %v348 = vadd.f32 %v58, %v311
  %v349 = vadd.f32 %v59, %v314
  %v350 = vadd.f32 %v60, %v319
  %v351 = vadd.f32 %v61, %v322
  %v352 = vadd.f32 %v62, %v327
  %vm353 = vcmask 162816
  %354 = vst.msk [vmem:[#allocation2] sm:$0xff] %vm353, %v332
  %355 = vst.msk [vmem:[#allocation2 + $0x8] sm:$0xff] %vm353, %v333
  %356 = vst.msk [vmem:[#allocation2 + $0x10] sm:$0xff] %vm353, %v334
  %357 = vst.msk [vmem:[#allocation2 + $0x18] sm:$0xff] %vm353, %v335
  %358 = vst.msk [vmem:[#allocation2 + $0x20] sm:$0xff] %vm353, %v336
  %359 = vst.msk [vmem:[#allocation2 + $0x28] sm:$0xff] %vm353, %v337
  %360 = vst.msk [vmem:[#allocation2 + $0x30] sm:$0xff] %vm353, %v338
  %361 = vst.msk [vmem:[#allocation2 + $0x38] sm:$0xff] %vm353, %v339
  %362 = vst.msk [vmem:[#allocation2 + $0x40] sm:$0xff] %vm353, %v340
  %363 = vst.msk [vmem:[#allocation2 + $0x48] sm:$0xff] %vm353, %v341
  %364 = vst.msk [vmem:[#allocation2 + $0x50] sm:$0xff] %vm353, %v342
  %365 = vst.msk [vmem:[#allocation2 + $0x58] sm:$0xff] %vm353, %v343
  %366 = vst.msk [vmem:[#allocation2 + $0x60] sm:$0xff] %vm353, %v344
  %367 = vst.msk [vmem:[#allocation2 + $0x68] sm:$0xff] %vm353, %v345
  %368 = vst.msk [vmem:[#allocation2 + $0x70] sm:$0xff] %vm353, %v346
  %369 = vst.msk [vmem:[#allocation2 + $0x78] sm:$0xff] %vm353, %v347
  %370 = vst.msk [vmem:[#allocation2 + $0x80] sm:$0xff] %vm353, %v348
  %371 = vst.msk [vmem:[#allocation2 + $0x88] sm:$0xff] %vm353, %v349
  %372 = vst.msk [vmem:[#allocation2 + $0x90] sm:$0xff] %vm353, %v350
  %373 = vst.msk [vmem:[#allocation2 + $0x98] sm:$0xff] %vm353, %v351
  %vm374 = vcmask 156672
  %375 = vst.msk [vmem:[#allocation2 + $0xa0] sm:$0x3] %vm374, %v352
  // Predicated region
  $region18: #{vae_forward.11} parent=0 // pred_check
    %p376 = pneg %p15
  $region19: #{vae_forward.11} parent=0 // pred_check_branch
    %378 = sbr.rel (%p376) target = $region21
  $region20: #{vae_forward.11} parent=0 // pred_region
    %v379 = vld [vmem:[#allocation2] sm:$0xff]
    %v380 = vld [vmem:[#allocation2 + $0x8] sm:$0xff]
    %v381 = vld [vmem:[#allocation2 + $0x10] sm:$0xff]
    %v382 = vld [vmem:[#allocation2 + $0x18] sm:$0xff]
    %v383 = vld [vmem:[#allocation2 + $0x20] sm:$0xff]
    %v384 = vld [vmem:[#allocation2 + $0x28] sm:$0xff]
    %v385 = vld [vmem:[#allocation2 + $0x30] sm:$0xff]
    %v386 = vld [vmem:[#allocation2 + $0x38] sm:$0xff]
    %v387 = vld [vmem:[#allocation2 + $0x40] sm:$0xff]
    %v388 = vld [vmem:[#allocation2 + $0x48] sm:$0xff]
    %v389 = vld [vmem:[#allocation2 + $0x50] sm:$0xff]
    %v390 = vld [vmem:[#allocation2 + $0x58] sm:$0xff]
    %v391 = vld [vmem:[#allocation2 + $0x60] sm:$0xff]
    %v392 = vld [vmem:[#allocation2 + $0x68] sm:$0xff]
    %v393 = vld [vmem:[#allocation2 + $0x70] sm:$0xff]
    %v394 = vld [vmem:[#allocation2 + $0x78] sm:$0xff]
    %v395 = vld [vmem:[#allocation2 + $0x80] sm:$0xff]
    %v396 = vld [vmem:[#allocation2 + $0x88] sm:$0xff]
    %v397 = vld [vmem:[#allocation2 + $0x90] sm:$0xff]
    %v398 = vld [vmem:[#allocation2 + $0x98] sm:$0xff]
    %v399 = vld [vmem:[#allocation2 + $0xa0] sm:$0x3]
    %v400 = vld [vmem:[%s2] sm:$0x1]
    %v402 = vlaneseq
    %v403 = vshrl.u32 %v402, 7
    %v404 = vsub.s32 0, %v403
    %v405 = vrot.slane %v400, %v404
    %v407 = vadd.f32 %v379, %v405
    %v408 = vadd.f32 %v380, %v405
    %v409 = vadd.f32 %v381, %v405
    %v410 = vadd.f32 %v382, %v405
    %v411 = vadd.f32 %v383, %v405
    %v412 = vadd.f32 %v384, %v405
    %v413 = vadd.f32 %v385, %v405
    %v414 = vadd.f32 %v386, %v405
    %v415 = vadd.f32 %v387, %v405
    %v416 = vadd.f32 %v388, %v405
    %v417 = vadd.f32 %v389, %v405
    %v418 = vadd.f32 %v390, %v405
    %v419 = vadd.f32 %v391, %v405
    %v420 = vadd.f32 %v392, %v405
    %v421 = vadd.f32 %v393, %v405
    %v422 = vadd.f32 %v394, %v405
    %v423 = vadd.f32 %v395, %v405
    %v424 = vadd.f32 %v396, %v405
    %v425 = vadd.f32 %v397, %v405
    %v426 = vadd.f32 %v398, %v405
    %v427 = vadd.f32 %v399, %v405
    %v428 = vsub.f32 0.0, %v407
    %v429 = vsub.f32 0.0, %v408
    %v430 = vsub.f32 0.0, %v409
    %v431 = vsub.f32 0.0, %v410
    %v432 = vsub.f32 0.0, %v411
    %v433 = vsub.f32 0.0, %v412
    %v434 = vsub.f32 0.0, %v413
    %v435 = vsub.f32 0.0, %v414
    %v436 = vsub.f32 0.0, %v415
    %v437 = vsub.f32 0.0, %v416
    %v438 = vsub.f32 0.0, %v417
    %v439 = vsub.f32 0.0, %v418
    %v440 = vsub.f32 0.0, %v419
    %v441 = vsub.f32 0.0, %v420
    %v442 = vsub.f32 0.0, %v421
    %v443 = vsub.f32 0.0, %v422
    %v444 = vsub.f32 0.0, %v423
    %v445 = vsub.f32 0.0, %v424
    %v446 = vsub.f32 0.0, %v425
    %v447 = vsub.f32 0.0, %v426
    %v448 = vsub.f32 0.0, %v427
    %v449 = vmul.f32 %v428, 1.442695
    %v450 = vpow.pop %v449
    %v451 = vmul.f32 %v429, 1.442695
    %v452 = vpow.pop %v451
    %v453 = vmul.f32 %v430, 1.442695
    %v454 = vpow.pop %v453
    %v455 = vmul.f32 %v431, 1.442695
    %v456 = vpow.pop %v455
    %v457 = vmul.f32 %v432, 1.442695
    %v458 = vpow.pop %v457
    %v459 = vmul.f32 %v433, 1.442695
    %v460 = vpow.pop %v459
    %v461 = vmul.f32 %v434, 1.442695
    %v462 = vpow.pop %v461
    %v463 = vmul.f32 %v435, 1.442695
    %v464 = vpow.pop %v463
    %v465 = vmul.f32 %v436, 1.442695
    %v466 = vpow.pop %v465
    %v467 = vmul.f32 %v437, 1.442695
    %v468 = vpow.pop %v467
    %v469 = vmul.f32 %v438, 1.442695
    %v470 = vpow.pop %v469
    %v471 = vmul.f32 %v439, 1.442695
    %v472 = vpow.pop %v471
    %v473 = vmul.f32 %v440, 1.442695
    %v474 = vpow.pop %v473
    %v475 = vmul.f32 %v441, 1.442695
    %v476 = vpow.pop %v475
    %v477 = vmul.f32 %v442, 1.442695
    %v478 = vpow.pop %v477
    %v479 = vmul.f32 %v443, 1.442695
    %v480 = vpow.pop %v479
    %v481 = vmul.f32 %v444, 1.442695
    %v482 = vpow.pop %v481
    %v483 = vmul.f32 %v445, 1.442695
    %v484 = vpow.pop %v483
    %v485 = vmul.f32 %v446, 1.442695
    %v486 = vpow.pop %v485
    %v487 = vmul.f32 %v447, 1.442695
    %v488 = vpow.pop %v487
    %v489 = vmul.f32 %v448, 1.442695
    %v490 = vpow.pop %v489
    %v491 = vadd.f32 %v450, 1.0
    %v492 = vadd.f32 %v452, 1.0
    %v493 = vadd.f32 %v454, 1.0
    %v494 = vadd.f32 %v456, 1.0
    %v495 = vadd.f32 %v458, 1.0
    %v496 = vadd.f32 %v460, 1.0
    %v497 = vadd.f32 %v462, 1.0
    %v498 = vadd.f32 %v464, 1.0
    %v499 = vadd.f32 %v466, 1.0
    %v500 = vadd.f32 %v468, 1.0
    %v501 = vadd.f32 %v470, 1.0
    %v502 = vadd.f32 %v472, 1.0
    %v503 = vadd.f32 %v474, 1.0
    %v504 = vadd.f32 %v476, 1.0
    %v505 = vadd.f32 %v478, 1.0
    %v506 = vadd.f32 %v480, 1.0
    %v507 = vadd.f32 %v482, 1.0
    %v508 = vadd.f32 %v484, 1.0
    %v509 = vadd.f32 %v486, 1.0
    %v510 = vadd.f32 %v488, 1.0
    %v511 = vadd.f32 %v490, 1.0
    %v512 = vrcp.pop %v491
    %v513 = vrcp.pop %v492
    %v514 = vrcp.pop %v493
    %v515 = vrcp.pop %v494
    %v516 = vrcp.pop %v495
    %v517 = vrcp.pop %v496
    %v518 = vrcp.pop %v497
    %v519 = vrcp.pop %v498
    %v520 = vrcp.pop %v499
    %v521 = vrcp.pop %v500
    %v522 = vrcp.pop %v501
    %v523 = vrcp.pop %v502
    %v524 = vrcp.pop %v503
    %v525 = vrcp.pop %v504
    %v526 = vrcp.pop %v505
    %v527 = vrcp.pop %v506
    %v528 = vrcp.pop %v507
    %v529 = vrcp.pop %v508
    %v530 = vrcp.pop %v509
    %v531 = vrcp.pop %v510
    %v532 = vrcp.pop %v511
    %v533 = vpack.c.bf16 %v513, %v512
    %v534 = vpack.c.bf16 %v515, %v514
    %v535 = vpack.c.bf16 %v517, %v516
    %v536 = vpack.c.bf16 %v519, %v518
    %v537 = vpack.c.bf16 %v521, %v520
    %v538 = vpack.c.bf16 %v523, %v522
    %v539 = vpack.c.bf16 %v525, %v524
    %v540 = vpack.c.bf16 %v527, %v526
    %v541 = vpack.c.bf16 %v529, %v528
    %v542 = vpack.c.bf16 %v531, %v530
    %v543 = vpack.c.bf16 %v532, %v532
    %v555 = vunpack.c.l.b16 %v533
    %v556 = vunpack.c.h.b16 %v533
    %v557 = vunpack.c.l.b16 %v534
    %v558 = vunpack.c.h.b16 %v534
    %v559 = vunpack.c.l.b16 %v535
    %v560 = vunpack.c.h.b16 %v535
    %v561 = vunpack.c.l.b16 %v536
    %v562 = vunpack.c.h.b16 %v536
    %v563 = vunpack.c.l.b16 %v537
    %v564 = vunpack.c.h.b16 %v537
    %v565 = vunpack.c.l.b16 %v538
    %v566 = vunpack.c.h.b16 %v538
    %v567 = vunpack.c.l.b16 %v539
    %v568 = vunpack.c.h.b16 %v539
    %v569 = vunpack.c.l.b16 %v540
    %v570 = vunpack.c.h.b16 %v540
    %v571 = vunpack.c.l.b16 %v541
    %v572 = vunpack.c.h.b16 %v541
    %v573 = vunpack.c.l.b16 %v542
    %v574 = vunpack.c.h.b16 %v542
    %v575 = vunpack.c.l.b16 %v543
    %v576 = vpack.c.b16 %v555, %v555
    %v577 = vpack.c.b16 %v556, %v556
    %v578 = vpack.c.b16 %v557, %v557
    %v579 = vpack.c.b16 %v558, %v558
    %v580 = vpack.c.b16 %v559, %v559
    %v581 = vpack.c.b16 %v560, %v560
    %v582 = vpack.c.b16 %v561, %v561
    %v583 = vpack.c.b16 %v562, %v562
    %v584 = vpack.c.b16 %v563, %v563
    %v585 = vpack.c.b16 %v564, %v564
    %v586 = vpack.c.b16 %v565, %v565
    %v587 = vpack.c.b16 %v566, %v566
    %v588 = vpack.c.b16 %v567, %v567
    %v589 = vpack.c.b16 %v568, %v568
    %v590 = vpack.c.b16 %v569, %v569
    %v591 = vpack.c.b16 %v570, %v570
    %v592 = vpack.c.b16 %v571, %v571
    %v593 = vpack.c.b16 %v572, %v572
    %v594 = vpack.c.b16 %v573, %v573
    %v595 = vpack.c.b16 %v574, %v574
    %v596 = vpack.c.b16 %v575, %v575
    %vm618 = vcmask 158720
    %619 = vst.msk [vmem:[%s3] sm:$0xf] %vm618, %v576
    %620 = vst.msk [vmem:[%s3 + $0x4] sm:$0xf] %vm618, %v577
    %621 = vst.msk [vmem:[%s3 + $0x8] sm:$0xf] %vm618, %v578
    %622 = vst.msk [vmem:[%s3 + $0xc] sm:$0xf] %vm618, %v579
    %623 = vst.msk [vmem:[%s3 + $0x10] sm:$0xf] %vm618, %v580
    %624 = vst.msk [vmem:[%s3 + $0x14] sm:$0xf] %vm618, %v581
    %625 = vst.msk [vmem:[%s3 + $0x18] sm:$0xf] %vm618, %v582
    %626 = vst.msk [vmem:[%s3 + $0x1c] sm:$0xf] %vm618, %v583
    %627 = vst.msk [vmem:[%s3 + $0x20] sm:$0xf] %vm618, %v584
    %628 = vst.msk [vmem:[%s3 + $0x24] sm:$0xf] %vm618, %v585
    %629 = vst.msk [vmem:[%s3 + $0x28] sm:$0xf] %vm618, %v586
    %630 = vst.msk [vmem:[%s3 + $0x2c] sm:$0xf] %vm618, %v587
    %631 = vst.msk [vmem:[%s3 + $0x30] sm:$0xf] %vm618, %v588
    %632 = vst.msk [vmem:[%s3 + $0x34] sm:$0xf] %vm618, %v589
    %633 = vst.msk [vmem:[%s3 + $0x38] sm:$0xf] %vm618, %v590
    %634 = vst.msk [vmem:[%s3 + $0x3c] sm:$0xf] %vm618, %v591
    %635 = vst.msk [vmem:[%s3 + $0x40] sm:$0xf] %vm618, %v592
    %636 = vst.msk [vmem:[%s3 + $0x44] sm:$0xf] %vm618, %v593
    %637 = vst.msk [vmem:[%s3 + $0x48] sm:$0xf] %vm618, %v594
    %638 = vst.msk [vmem:[%s3 + $0x4c] sm:$0xf] %vm618, %v595
    %vm639 = vcmask 155648
    %640 = vst.msk [vmem:[%s3 + $0x50] sm:$0x1] %vm639, %v596
  $region21: #{vae_forward.11} parent=0 // pred_fallthru
    _
  // Predicated region
  $region22: #{vae_forward.11} parent=0 // pred_check
    _
  $region23: #{vae_forward.11} parent=0 // pred_check_branch
    %642 = sbr.rel (0) target = $region25
  $region24: #{vae_forward.11} parent=0 // pred_region
    _
  $region25: #{vae_forward.11} parent=0 // pred_fallthru
    _
  // Predicated region
  $region26: #{vae_forward.11} parent=0 // pred_check
    _
  $region27: #{vae_forward.11} parent=0 // pred_check_branch
    %644 = sbr.rel (0) target = $region29
  $region28: #{vae_forward.11} parent=0 // pred_region
    _
  $region29: #{vae_forward.11} parent=0 // pred_fallthru
    _

</llo_original>
